<compile_context>
chip_gen: v5e
topology: v5e:2x2
jax: 0.10.0
libtpu: 0.0.40
codegen_flags: <defaults>
</compile_context>

<pallas_src>
import jax
import jax.numpy as jnp
from jax.experimental import pallas as pl
from jax.experimental.pallas import tpu as pltpu

# ---- static model config (small, consistent with the module) ----
B = 2          # batch
T = 8          # max sequence length
VOCAB = 16     # input_size
E = 32         # encoding_size
H = 32         # hidden_size
O = 8          # output_size
L = 2          # gru layers
PAD_IDX = 0

BP = 8         # batch padded to one sublane group
HP = 128       # per-gate lane block (lane-aligned)
G3P = 3 * HP   # [r | z | n] lane-padded gate width

# ---- constant-slab row offsets (shared by host packer and kernel) ----
def R_WHH(l):            # recurrent weights, layer l: rows [R, R+H)
    return l * H
def R_WIH(l):            # input-side weights, layer l >= 1
    return (L + l - 1) * H
R_HEADW = (2 * L - 1) * H           # folded dense1*dense2*out, (H, O) in cols [0, O)
_BASE = 2 * L * H
def R_GIB(l):            # folded input-side gate bias, layer l >= 1 (1 row)
    return _BASE + 8 * (l - 1)
def R_BHN(l):            # b_hh[n] for layer l (1 row, lanes [0, H))
    return _BASE + 8 * (L - 1) + 8 * l
R_HEADB = _BASE + 8 * (L - 1) + 8 * L
ROWS = R_HEADB + 8       # 160 rows for L=2 (multiple of 8)


def encoder_kernel(gi0m_ref, const_ref, o_ref):
    f32 = jnp.float32
    # hoisted constant loads / bias broadcasts (off the recurrent chain)
    whh = [const_ref[R_WHH(l):R_WHH(l) + H, :] for l in range(L)]          # (H, 384)
    wih = [const_ref[R_WIH(l):R_WIH(l) + H, :] for l in range(1, L)]       # (H, 384)
    gib = [jnp.broadcast_to(const_ref[R_GIB(l):R_GIB(l) + 1, :], (BP, G3P))
           for l in range(1, L)]
    bhn = [jnp.broadcast_to(const_ref[R_BHN(l):R_BHN(l) + 1, 0:HP], (BP, HP))
           for l in range(L)]

    # TODO(synk): a length of 0 silently keeps last_h at zeros (PyTorch
    # pack_padded_sequence would raise); lengths are assumed in [1, T].
    h = [jnp.zeros((BP, HP), f32) for _ in range(L)]
    last_h = jnp.zeros((BP, HP), f32)

    # fully unrolled wavefront over (t, layer): h[l]_t depends only on
    # h[l-1]_t and h[l]_{t-1}, so the dependent chain is T + L - 1 GRU steps.
    for t in range(T):
        git = gi0m_ref[t * BP:(t + 1) * BP, :]          # (8, 512) tile-aligned
        xg = git[:, 0:G3P]                              # layer-0 input gates (+bias)
        m_t = git[:, G3P:G3P + HP]                      # last-valid-step select mask
        for l in range(L):
            if l > 0:
                xg = jnp.dot(h[l - 1][:, 0:H], wih[l - 1],
                             preferred_element_type=f32) + gib[l - 1]
            gh = jnp.dot(h[l][:, 0:H], whh[l], preferred_element_type=f32)
            # PyTorch GRU equations, gate order [r, z, n]; r/z share one sigmoid.
            rz = jax.nn.sigmoid(xg[:, 0:2 * HP] + gh[:, 0:2 * HP])
            r = rz[:, 0:HP]
            z = rz[:, HP:2 * HP]
            n = jnp.tanh(xg[:, 2 * HP:G3P] + r * (gh[:, 2 * HP:G3P] + bhn[l]))
            h[l] = (1.0 - z) * n + z * h[l]
        last_h = last_h + m_t * h[L - 1]                # vectorized capture

    # dense1 -> dense2 -> out (no activations in between) folded into one linear
    headw = const_ref[R_HEADW:R_HEADW + H, :]
    headb = const_ref[R_HEADB:R_HEADB + 1, :]
    y = jnp.dot(last_h[:, 0:H], headw, preferred_element_type=f32)
    y = y[:, 0:O] + jnp.broadcast_to(headb[:, 0:O], (BP, O))
    o_ref[...] = jax.nn.sigmoid(y)


def _place_gates(blocks, rows):
    """Place small (rows, H)-ish blocks at lane offsets 0/128/256 of a (rows, 384) tile."""
    m = jnp.zeros((rows, G3P), jnp.float32)
    for g, blk in enumerate(blocks):
        m = m.at[:blk.shape[0], g * HP:g * HP + blk.shape[1]].set(blk)
    return m


@jax.jit
def encoder_forward(X, X_lengths, params):
    hp = jax.lax.Precision.HIGHEST
    w_ih, w_hh = params["w_ih"], params["w_hh"]         # (L, 3, H, H), gates [r,z,n]
    b_ih, b_hh = params["b_ih"], params["b_hh"]         # (L, 3, 1, H)

    # ---- exact host-side weight folds (lane-padded gate layout) ----
    # embedding -> e2i -> layer-0 W_ih folded into one (VOCAB, 384) lookup table;
    # b_ih0 + b_hh0[r,z] folded into its bias row (b_hh0[n] stays in-kernel).
    base = jnp.dot(params["emb"], params["e2i_w"], precision=hp)            # (VOCAB, H)
    gi_table = _place_gates([jnp.dot(base, w_ih[0, g], precision=hp) for g in range(3)],
                            VOCAB)                                          # (VOCAB, 384)
    gi0_bias = _place_gates(
        [jnp.dot(params["e2i_b"], w_ih[0, 0], precision=hp) + b_ih[0, 0] + b_hh[0, 0],
         jnp.dot(params["e2i_b"], w_ih[0, 1], precision=hp) + b_ih[0, 1] + b_hh[0, 1],
         jnp.dot(params["e2i_b"], w_ih[0, 2], precision=hp) + b_ih[0, 2]], 1)

    # activation-free head: dense1 -> dense2 -> out folded into one (H, O) linear
    head_w = jnp.dot(jnp.dot(params["d1_w"], params["d2_w"], precision=hp),
                     params["out_w"], precision=hp)                         # (H, O)
    head_b = jnp.dot(jnp.dot(params["d1_b"], params["d2_w"], precision=hp)
                     + params["d2_b"], params["out_w"], precision=hp) + params["out_b"]

    # single constant slab (2 input DMAs total for the kernel)
    slab = jnp.zeros((ROWS, G3P), jnp.float32)
    for l in range(L):
        slab = slab.at[R_WHH(l):R_WHH(l) + H, :].set(
            _place_gates([w_hh[l, 0], w_hh[l, 1], w_hh[l, 2]], H))
        slab = slab.at[R_BHN(l):R_BHN(l) + 1, :].set(_place_gates([b_hh[l, 2]], 1))
    for l in range(1, L):
        slab = slab.at[R_WIH(l):R_WIH(l) + H, :].set(
            _place_gates([w_ih[l, 0], w_ih[l, 1], w_ih[l, 2]], H))
        slab = slab.at[R_GIB(l):R_GIB(l) + 1, :].set(
            _place_gates([b_ih[l, 0] + b_hh[l, 0], b_ih[l, 1] + b_hh[l, 1], b_ih[l, 2]], 1))
    slab = slab.at[R_HEADW:R_HEADW + H, 0:O].set(head_w)
    slab = slab.at[R_HEADB:R_HEADB + 1, 0:O].set(head_b)

    # ---- per-call layer-0 gates + last-step select mask (host gather; ~130 KB) ----
    ids = X.astype(jnp.int32)                                               # (B, T)
    gi0 = jnp.take(gi_table, ids, axis=0) + gi0_bias                        # (B, T, 384)
    gi0 = jnp.transpose(gi0, (1, 0, 2))                                     # time-major
    gi0 = jnp.pad(gi0, ((0, 0), (0, BP - B), (0, 0)))                       # (T, 8, 384)

    lens = X_lengths.astype(jnp.int32)
    sel = (jnp.arange(1, T + 1, dtype=jnp.int32)[:, None] == lens[None, :])
    sel = jnp.pad(sel.astype(jnp.float32), ((0, 0), (0, BP - B)))           # (T, 8)
    selmask = jnp.broadcast_to(sel[:, :, None], (T, BP, HP))                # (T, 8, 128)

    gi0m = jnp.concatenate([gi0, selmask], axis=-1).reshape(T * BP, G3P + HP)

    vmem = pl.BlockSpec(memory_space=pltpu.MemorySpace.VMEM)
    out = pl.pallas_call(
        encoder_kernel,
        out_shape=jax.ShapeDtypeStruct((BP, O), jnp.float32),
        in_specs=[vmem, vmem],
        out_specs=vmem,
    )(gi0m, slab)
    return out[:B]


def make_params(key):
    ks = jax.random.split(key, 16)
    s = 0.1
    emb = s * jax.random.normal(ks[0], (VOCAB, E), jnp.float32)
    emb = emb.at[PAD_IDX].set(0.0)                     # padding_idx row zeroed
    params = {
        "emb": emb,
        "e2i_w": s * jax.random.normal(ks[1], (E, H), jnp.float32),
        "e2i_b": s * jax.random.normal(ks[2], (1, H), jnp.float32),
        # GRU weights, pre-transposed: (layers, 3 gates [r,z,n], in, out)
        "w_ih": s * jax.random.normal(ks[3], (L, 3, H, H), jnp.float32),
        "w_hh": s * jax.random.normal(ks[4], (L, 3, H, H), jnp.float32),
        "b_ih": s * jax.random.normal(ks[5], (L, 3, 1, H), jnp.float32),
        "b_hh": s * jax.random.normal(ks[6], (L, 3, 1, H), jnp.float32),
        "d1_w": s * jax.random.normal(ks[7], (H, H), jnp.float32),
        "d1_b": s * jax.random.normal(ks[8], (1, H), jnp.float32),
        "d2_w": s * jax.random.normal(ks[9], (H, H), jnp.float32),
        "d2_b": s * jax.random.normal(ks[10], (1, H), jnp.float32),
        "out_w": s * jax.random.normal(ks[11], (H, O), jnp.float32),
        "out_b": s * jax.random.normal(ks[12], (1, O), jnp.float32),
    }
    return params


def reference_forward(X, X_lengths, p):
    """Pure-JAX mirror of the PyTorch forward (un-fused), pinned to highest precision."""
    with jax.default_matmul_precision("highest"):
        x = jnp.take(p["emb"], X, axis=0)
        seq = x @ p["e2i_w"] + p["e2i_b"][0]
        for l in range(L):
            h = jnp.zeros((B, H), jnp.float32)
            outs = []
            for t in range(T):
                x_t = seq[:, t, :]
                r = jax.nn.sigmoid(x_t @ p["w_ih"][l, 0] + p["b_ih"][l, 0, 0]
                                   + h @ p["w_hh"][l, 0] + p["b_hh"][l, 0, 0])
                z = jax.nn.sigmoid(x_t @ p["w_ih"][l, 1] + p["b_ih"][l, 1, 0]
                                   + h @ p["w_hh"][l, 1] + p["b_hh"][l, 1, 0])
                n = jnp.tanh(x_t @ p["w_ih"][l, 2] + p["b_ih"][l, 2, 0]
                             + r * (h @ p["w_hh"][l, 2] + p["b_hh"][l, 2, 0]))
                h = (1.0 - z) * n + z * h
                outs.append(h)
            seq = jnp.stack(outs, axis=1)
        last = seq[jnp.arange(B), X_lengths - 1]
        y = last @ p["d1_w"] + p["d1_b"][0]
        y = y @ p["d2_w"] + p["d2_b"][0]
        y = y @ p["out_w"] + p["out_b"][0]
        return jax.nn.sigmoid(y)


if __name__ == "__main__":
    key = jax.random.PRNGKey(0)
    pkey, xkey = jax.random.split(key)
    params = make_params(pkey)

    # lengths sorted descending (pack_padded_sequence convention), padded with PAD_IDX
    X_lengths = jnp.array([8, 5], dtype=jnp.int32)
    X = jax.random.randint(xkey, (B, T), 1, VOCAB, dtype=jnp.int32)
    t_idx = jnp.arange(T)[None, :]
    X = jnp.where(t_idx < X_lengths[:, None], X, PAD_IDX)

    # pack_padded_sequence requires valid lengths; check host-side
    assert int(jnp.min(X_lengths)) >= 1 and int(jnp.max(X_lengths)) <= T

    out = jax.block_until_ready(encoder_forward(X, X_lengths, params))
    ref = reference_forward(X, X_lengths, params)
    assert out.shape == (B, O)
    assert jnp.allclose(out, ref, atol=2e-4, rtol=2e-4), (out, ref)

    print("KERNEL_OK")
</pallas_src>

<mosaic_0001>
module attributes {stable_mosaic.version = 11 : i64} {
  func.func @encoder_kernel(%arg0: memref<64x512xf32, #tpu.memory_space<vmem>>, %arg1: memref<160x384xf32, #tpu.memory_space<vmem>>, %arg2: memref<8x8xf32, #tpu.memory_space<vmem>>) attributes {dimension_semantics = [], scalar_prefetch = 0 : i64, scratch_operands = 0 : i64, tpu.core_type = #tpu.core_type<tc>} {
    %c0 = arith.constant 0 : index
    %c0_0 = arith.constant 0 : index
    %0 = vector.load %arg1[%c0, %c0_0] : memref<160x384xf32, #tpu.memory_space<vmem>>, vector<32x384xf32>
    %c32 = arith.constant 32 : index
    %c0_1 = arith.constant 0 : index
    %1 = vector.load %arg1[%c32, %c0_1] : memref<160x384xf32, #tpu.memory_space<vmem>>, vector<32x384xf32>
    %c64 = arith.constant 64 : index
    %c0_2 = arith.constant 0 : index
    %2 = vector.load %arg1[%c64, %c0_2] : memref<160x384xf32, #tpu.memory_space<vmem>>, vector<32x384xf32>
    %c128 = arith.constant 128 : index
    %c0_3 = arith.constant 0 : index
    %3 = vector.load %arg1[%c128, %c0_3] : memref<160x384xf32, #tpu.memory_space<vmem>>, vector<1x384xf32>
    %4 = vector.shape_cast %3 : vector<1x384xf32> to vector<1x384xf32>
    %5 = vector.broadcast %4 : vector<1x384xf32> to vector<8x384xf32>
    %c136 = arith.constant 136 : index
    %c0_4 = arith.constant 0 : index
    %6 = vector.load %arg1[%c136, %c0_4] : memref<160x384xf32, #tpu.memory_space<vmem>>, vector<1x128xf32>
    %7 = vector.shape_cast %6 : vector<1x128xf32> to vector<1x128xf32>
    %8 = vector.broadcast %7 : vector<1x128xf32> to vector<8x128xf32>
    %c144 = arith.constant 144 : index
    %c0_5 = arith.constant 0 : index
    %9 = vector.load %arg1[%c144, %c0_5] : memref<160x384xf32, #tpu.memory_space<vmem>>, vector<1x128xf32>
    %10 = vector.shape_cast %9 : vector<1x128xf32> to vector<1x128xf32>
    %11 = vector.broadcast %10 : vector<1x128xf32> to vector<8x128xf32>
    %cst = arith.constant 0.000000e+00 : f32
    %12 = vector.broadcast %cst : f32 to vector<8x128xf32>
    %cst_6 = arith.constant 0.000000e+00 : f32
    %13 = vector.broadcast %cst_6 : f32 to vector<8x128xf32>
    %cst_7 = arith.constant 0.000000e+00 : f32
    %14 = vector.broadcast %cst_7 : f32 to vector<8x128xf32>
    %c0_8 = arith.constant 0 : index
    %c0_9 = arith.constant 0 : index
    %15 = vector.load %arg0[%c0_8, %c0_9] : memref<64x512xf32, #tpu.memory_space<vmem>>, vector<8x512xf32>
    %16 = vector.extract_strided_slice %15 {offsets = [0, 0], sizes = [8, 384], strides = [1, 1]} : vector<8x512xf32> to vector<8x384xf32>
    %17 = vector.extract_strided_slice %15 {offsets = [0, 384], sizes = [8, 128], strides = [1, 1]} : vector<8x512xf32> to vector<8x128xf32>
    %18 = vector.extract_strided_slice %12 {offsets = [0, 0], sizes = [8, 32], strides = [1, 1]} : vector<8x128xf32> to vector<8x32xf32>
    %cst_10 = arith.constant dense<0.000000e+00> : vector<8x384xf32>
    %19 = tpu.matmul %18, %0, %cst_10 {dimension_numbers = #tpu.dot_dimension_numbers<[1], [0], [0], [1], [0, 0, 1, 1], [], []>} : vector<8x32xf32>, vector<32x384xf32>, vector<8x384xf32> -> vector<8x384xf32>
    %20 = vector.extract_strided_slice %16 {offsets = [0, 0], sizes = [8, 256], strides = [1, 1]} : vector<8x384xf32> to vector<8x256xf32>
    %21 = vector.extract_strided_slice %19 {offsets = [0, 0], sizes = [8, 256], strides = [1, 1]} : vector<8x384xf32> to vector<8x256xf32>
    %22 = arith.addf %20, %21 : vector<8x256xf32>
    %23 = arith.negf %22 : vector<8x256xf32>
    %24 = math.exp %23 : vector<8x256xf32>
    %cst_11 = arith.constant 1.000000e+00 : f32
    %25 = vector.broadcast %cst_11 : f32 to vector<8x256xf32>
    %26 = arith.addf %25, %24 : vector<8x256xf32>
    %27 = arith.divf %25, %26 : vector<8x256xf32>
    %28 = vector.extract_strided_slice %27 {offsets = [0, 0], sizes = [8, 128], strides = [1, 1]} : vector<8x256xf32> to vector<8x128xf32>
    %29 = vector.extract_strided_slice %27 {offsets = [0, 128], sizes = [8, 128], strides = [1, 1]} : vector<8x256xf32> to vector<8x128xf32>
    %30 = vector.extract_strided_slice %16 {offsets = [0, 256], sizes = [8, 128], strides = [1, 1]} : vector<8x384xf32> to vector<8x128xf32>
    %31 = vector.extract_strided_slice %19 {offsets = [0, 256], sizes = [8, 128], strides = [1, 1]} : vector<8x384xf32> to vector<8x128xf32>
    %32 = arith.addf %31, %8 : vector<8x128xf32>
    %33 = arith.mulf %28, %32 : vector<8x128xf32>
    %34 = arith.addf %30, %33 : vector<8x128xf32>
    %35 = math.tanh %34 : vector<8x128xf32>
    %cst_12 = arith.constant 1.000000e+00 : f32
    %36 = vector.broadcast %cst_12 : f32 to vector<8x128xf32>
    %37 = arith.subf %36, %29 : vector<8x128xf32>
    %38 = arith.mulf %37, %35 : vector<8x128xf32>
    %39 = arith.mulf %29, %12 : vector<8x128xf32>
    %40 = arith.addf %38, %39 : vector<8x128xf32>
    %41 = vector.extract_strided_slice %40 {offsets = [0, 0], sizes = [8, 32], strides = [1, 1]} : vector<8x128xf32> to vector<8x32xf32>
    %cst_13 = arith.constant dense<0.000000e+00> : vector<8x384xf32>
    %42 = tpu.matmul %41, %2, %cst_13 {dimension_numbers = #tpu.dot_dimension_numbers<[1], [0], [0], [1], [0, 0, 1, 1], [], []>} : vector<8x32xf32>, vector<32x384xf32>, vector<8x384xf32> -> vector<8x384xf32>
    %43 = arith.addf %42, %5 : vector<8x384xf32>
    %44 = vector.extract_strided_slice %13 {offsets = [0, 0], sizes = [8, 32], strides = [1, 1]} : vector<8x128xf32> to vector<8x32xf32>
    %cst_14 = arith.constant dense<0.000000e+00> : vector<8x384xf32>
    %45 = tpu.matmul %44, %1, %cst_14 {dimension_numbers = #tpu.dot_dimension_numbers<[1], [0], [0], [1], [0, 0, 1, 1], [], []>} : vector<8x32xf32>, vector<32x384xf32>, vector<8x384xf32> -> vector<8x384xf32>
    %46 = vector.extract_strided_slice %43 {offsets = [0, 0], sizes = [8, 256], strides = [1, 1]} : vector<8x384xf32> to vector<8x256xf32>
    %47 = vector.extract_strided_slice %45 {offsets = [0, 0], sizes = [8, 256], strides = [1, 1]} : vector<8x384xf32> to vector<8x256xf32>
    %48 = arith.addf %46, %47 : vector<8x256xf32>
    %49 = arith.negf %48 : vector<8x256xf32>
    %50 = math.exp %49 : vector<8x256xf32>
    %cst_15 = arith.constant 1.000000e+00 : f32
    %51 = vector.broadcast %cst_15 : f32 to vector<8x256xf32>
    %52 = arith.addf %51, %50 : vector<8x256xf32>
    %53 = arith.divf %51, %52 : vector<8x256xf32>
    %54 = vector.extract_strided_slice %53 {offsets = [0, 0], sizes = [8, 128], strides = [1, 1]} : vector<8x256xf32> to vector<8x128xf32>
    %55 = vector.extract_strided_slice %53 {offsets = [0, 128], sizes = [8, 128], strides = [1, 1]} : vector<8x256xf32> to vector<8x128xf32>
    %56 = vector.extract_strided_slice %43 {offsets = [0, 256], sizes = [8, 128], strides = [1, 1]} : vector<8x384xf32> to vector<8x128xf32>
    %57 = vector.extract_strided_slice %45 {offsets = [0, 256], sizes = [8, 128], strides = [1, 1]} : vector<8x384xf32> to vector<8x128xf32>
    %58 = arith.addf %57, %11 : vector<8x128xf32>
    %59 = arith.mulf %54, %58 : vector<8x128xf32>
    %60 = arith.addf %56, %59 : vector<8x128xf32>
    %61 = math.tanh %60 : vector<8x128xf32>
    %cst_16 = arith.constant 1.000000e+00 : f32
    %62 = vector.broadcast %cst_16 : f32 to vector<8x128xf32>
    %63 = arith.subf %62, %55 : vector<8x128xf32>
    %64 = arith.mulf %63, %61 : vector<8x128xf32>
    %65 = arith.mulf %55, %13 : vector<8x128xf32>
    %66 = arith.addf %64, %65 : vector<8x128xf32>
    %67 = arith.mulf %17, %66 : vector<8x128xf32>
    %68 = arith.addf %14, %67 : vector<8x128xf32>
    %c8 = arith.constant 8 : index
    %c0_17 = arith.constant 0 : index
    %69 = vector.load %arg0[%c8, %c0_17] : memref<64x512xf32, #tpu.memory_space<vmem>>, vector<8x512xf32>
    %70 = vector.extract_strided_slice %69 {offsets = [0, 0], sizes = [8, 384], strides = [1, 1]} : vector<8x512xf32> to vector<8x384xf32>
    %71 = vector.extract_strided_slice %69 {offsets = [0, 384], sizes = [8, 128], strides = [1, 1]} : vector<8x512xf32> to vector<8x128xf32>
    %72 = vector.extract_strided_slice %40 {offsets = [0, 0], sizes = [8, 32], strides = [1, 1]} : vector<8x128xf32> to vector<8x32xf32>
    %cst_18 = arith.constant dense<0.000000e+00> : vector<8x384xf32>
    %73 = tpu.matmul %72, %0, %cst_18 {dimension_numbers = #tpu.dot_dimension_numbers<[1], [0], [0], [1], [0, 0, 1, 1], [], []>} : vector<8x32xf32>, vector<32x384xf32>, vector<8x384xf32> -> vector<8x384xf32>
    %74 = vector.extract_strided_slice %70 {offsets = [0, 0], sizes = [8, 256], strides = [1, 1]} : vector<8x384xf32> to vector<8x256xf32>
    %75 = vector.extract_strided_slice %73 {offsets = [0, 0], sizes = [8, 256], strides = [1, 1]} : vector<8x384xf32> to vector<8x256xf32>
    %76 = arith.addf %74, %75 : vector<8x256xf32>
    %77 = arith.negf %76 : vector<8x256xf32>
    %78 = math.exp %77 : vector<8x256xf32>
    %cst_19 = arith.constant 1.000000e+00 : f32
    %79 = vector.broadcast %cst_19 : f32 to vector<8x256xf32>
    %80 = arith.addf %79, %78 : vector<8x256xf32>
    %81 = arith.divf %79, %80 : vector<8x256xf32>
    %82 = vector.extract_strided_slice %81 {offsets = [0, 0], sizes = [8, 128], strides = [1, 1]} : vector<8x256xf32> to vector<8x128xf32>
    %83 = vector.extract_strided_slice %81 {offsets = [0, 128], sizes = [8, 128], strides = [1, 1]} : vector<8x256xf32> to vector<8x128xf32>
    %84 = vector.extract_strided_slice %70 {offsets = [0, 256], sizes = [8, 128], strides = [1, 1]} : vector<8x384xf32> to vector<8x128xf32>
    %85 = vector.extract_strided_slice %73 {offsets = [0, 256], sizes = [8, 128], strides = [1, 1]} : vector<8x384xf32> to vector<8x128xf32>
    %86 = arith.addf %85, %8 : vector<8x128xf32>
    %87 = arith.mulf %82, %86 : vector<8x128xf32>
    %88 = arith.addf %84, %87 : vector<8x128xf32>
    %89 = math.tanh %88 : vector<8x128xf32>
    %cst_20 = arith.constant 1.000000e+00 : f32
    %90 = vector.broadcast %cst_20 : f32 to vector<8x128xf32>
    %91 = arith.subf %90, %83 : vector<8x128xf32>
    %92 = arith.mulf %91, %89 : vector<8x128xf32>
    %93 = arith.mulf %83, %40 : vector<8x128xf32>
    %94 = arith.addf %92, %93 : vector<8x128xf32>
    %95 = vector.extract_strided_slice %94 {offsets = [0, 0], sizes = [8, 32], strides = [1, 1]} : vector<8x128xf32> to vector<8x32xf32>
    %cst_21 = arith.constant dense<0.000000e+00> : vector<8x384xf32>
    %96 = tpu.matmul %95, %2, %cst_21 {dimension_numbers = #tpu.dot_dimension_numbers<[1], [0], [0], [1], [0, 0, 1, 1], [], []>} : vector<8x32xf32>, vector<32x384xf32>, vector<8x384xf32> -> vector<8x384xf32>
    %97 = arith.addf %96, %5 : vector<8x384xf32>
    %98 = vector.extract_strided_slice %66 {offsets = [0, 0], sizes = [8, 32], strides = [1, 1]} : vector<8x128xf32> to vector<8x32xf32>
    %cst_22 = arith.constant dense<0.000000e+00> : vector<8x384xf32>
    %99 = tpu.matmul %98, %1, %cst_22 {dimension_numbers = #tpu.dot_dimension_numbers<[1], [0], [0], [1], [0, 0, 1, 1], [], []>} : vector<8x32xf32>, vector<32x384xf32>, vector<8x384xf32> -> vector<8x384xf32>
    %100 = vector.extract_strided_slice %97 {offsets = [0, 0], sizes = [8, 256], strides = [1, 1]} : vector<8x384xf32> to vector<8x256xf32>
    %101 = vector.extract_strided_slice %99 {offsets = [0, 0], sizes = [8, 256], strides = [1, 1]} : vector<8x384xf32> to vector<8x256xf32>
    %102 = arith.addf %100, %101 : vector<8x256xf32>
    %103 = arith.negf %102 : vector<8x256xf32>
    %104 = math.exp %103 : vector<8x256xf32>
    %cst_23 = arith.constant 1.000000e+00 : f32
    %105 = vector.broadcast %cst_23 : f32 to vector<8x256xf32>
    %106 = arith.addf %105, %104 : vector<8x256xf32>
    %107 = arith.divf %105, %106 : vector<8x256xf32>
    %108 = vector.extract_strided_slice %107 {offsets = [0, 0], sizes = [8, 128], strides = [1, 1]} : vector<8x256xf32> to vector<8x128xf32>
    %109 = vector.extract_strided_slice %107 {offsets = [0, 128], sizes = [8, 128], strides = [1, 1]} : vector<8x256xf32> to vector<8x128xf32>
    %110 = vector.extract_strided_slice %97 {offsets = [0, 256], sizes = [8, 128], strides = [1, 1]} : vector<8x384xf32> to vector<8x128xf32>
    %111 = vector.extract_strided_slice %99 {offsets = [0, 256], sizes = [8, 128], strides = [1, 1]} : vector<8x384xf32> to vector<8x128xf32>
    %112 = arith.addf %111, %11 : vector<8x128xf32>
    %113 = arith.mulf %108, %112 : vector<8x128xf32>
    %114 = arith.addf %110, %113 : vector<8x128xf32>
    %115 = math.tanh %114 : vector<8x128xf32>
    %cst_24 = arith.constant 1.000000e+00 : f32
    %116 = vector.broadcast %cst_24 : f32 to vector<8x128xf32>
    %117 = arith.subf %116, %109 : vector<8x128xf32>
    %118 = arith.mulf %117, %115 : vector<8x128xf32>
    %119 = arith.mulf %109, %66 : vector<8x128xf32>
    %120 = arith.addf %118, %119 : vector<8x128xf32>
    %121 = arith.mulf %71, %120 : vector<8x128xf32>
    %122 = arith.addf %68, %121 : vector<8x128xf32>
    %c16 = arith.constant 16 : index
    %c0_25 = arith.constant 0 : index
    %123 = vector.load %arg0[%c16, %c0_25] : memref<64x512xf32, #tpu.memory_space<vmem>>, vector<8x512xf32>
    %124 = vector.extract_strided_slice %123 {offsets = [0, 0], sizes = [8, 384], strides = [1, 1]} : vector<8x512xf32> to vector<8x384xf32>
    %125 = vector.extract_strided_slice %123 {offsets = [0, 384], sizes = [8, 128], strides = [1, 1]} : vector<8x512xf32> to vector<8x128xf32>
    %126 = vector.extract_strided_slice %94 {offsets = [0, 0], sizes = [8, 32], strides = [1, 1]} : vector<8x128xf32> to vector<8x32xf32>
    %cst_26 = arith.constant dense<0.000000e+00> : vector<8x384xf32>
    %127 = tpu.matmul %126, %0, %cst_26 {dimension_numbers = #tpu.dot_dimension_numbers<[1], [0], [0], [1], [0, 0, 1, 1], [], []>} : vector<8x32xf32>, vector<32x384xf32>, vector<8x384xf32> -> vector<8x384xf32>
    %128 = vector.extract_strided_slice %124 {offsets = [0, 0], sizes = [8, 256], strides = [1, 1]} : vector<8x384xf32> to vector<8x256xf32>
    %129 = vector.extract_strided_slice %127 {offsets = [0, 0], sizes = [8, 256], strides = [1, 1]} : vector<8x384xf32> to vector<8x256xf32>
    %130 = arith.addf %128, %129 : vector<8x256xf32>
    %131 = arith.negf %130 : vector<8x256xf32>
    %132 = math.exp %131 : vector<8x256xf32>
    %cst_27 = arith.constant 1.000000e+00 : f32
    %133 = vector.broadcast %cst_27 : f32 to vector<8x256xf32>
    %134 = arith.addf %133, %132 : vector<8x256xf32>
    %135 = arith.divf %133, %134 : vector<8x256xf32>
    %136 = vector.extract_strided_slice %135 {offsets = [0, 0], sizes = [8, 128], strides = [1, 1]} : vector<8x256xf32> to vector<8x128xf32>
    %137 = vector.extract_strided_slice %135 {offsets = [0, 128], sizes = [8, 128], strides = [1, 1]} : vector<8x256xf32> to vector<8x128xf32>
    %138 = vector.extract_strided_slice %124 {offsets = [0, 256], sizes = [8, 128], strides = [1, 1]} : vector<8x384xf32> to vector<8x128xf32>
    %139 = vector.extract_strided_slice %127 {offsets = [0, 256], sizes = [8, 128], strides = [1, 1]} : vector<8x384xf32> to vector<8x128xf32>
    %140 = arith.addf %139, %8 : vector<8x128xf32>
    %141 = arith.mulf %136, %140 : vector<8x128xf32>
    %142 = arith.addf %138, %141 : vector<8x128xf32>
    %143 = math.tanh %142 : vector<8x128xf32>
    %cst_28 = arith.constant 1.000000e+00 : f32
    %144 = vector.broadcast %cst_28 : f32 to vector<8x128xf32>
    %145 = arith.subf %144, %137 : vector<8x128xf32>
    %146 = arith.mulf %145, %143 : vector<8x128xf32>
    %147 = arith.mulf %137, %94 : vector<8x128xf32>
    %148 = arith.addf %146, %147 : vector<8x128xf32>
    %149 = vector.extract_strided_slice %148 {offsets = [0, 0], sizes = [8, 32], strides = [1, 1]} : vector<8x128xf32> to vector<8x32xf32>
    %cst_29 = arith.constant dense<0.000000e+00> : vector<8x384xf32>
    %150 = tpu.matmul %149, %2, %cst_29 {dimension_numbers = #tpu.dot_dimension_numbers<[1], [0], [0], [1], [0, 0, 1, 1], [], []>} : vector<8x32xf32>, vector<32x384xf32>, vector<8x384xf32> -> vector<8x384xf32>
    %151 = arith.addf %150, %5 : vector<8x384xf32>
    %152 = vector.extract_strided_slice %120 {offsets = [0, 0], sizes = [8, 32], strides = [1, 1]} : vector<8x128xf32> to vector<8x32xf32>
    %cst_30 = arith.constant dense<0.000000e+00> : vector<8x384xf32>
    %153 = tpu.matmul %152, %1, %cst_30 {dimension_numbers = #tpu.dot_dimension_numbers<[1], [0], [0], [1], [0, 0, 1, 1], [], []>} : vector<8x32xf32>, vector<32x384xf32>, vector<8x384xf32> -> vector<8x384xf32>
    %154 = vector.extract_strided_slice %151 {offsets = [0, 0], sizes = [8, 256], strides = [1, 1]} : vector<8x384xf32> to vector<8x256xf32>
    %155 = vector.extract_strided_slice %153 {offsets = [0, 0], sizes = [8, 256], strides = [1, 1]} : vector<8x384xf32> to vector<8x256xf32>
    %156 = arith.addf %154, %155 : vector<8x256xf32>
    %157 = arith.negf %156 : vector<8x256xf32>
    %158 = math.exp %157 : vector<8x256xf32>
    %cst_31 = arith.constant 1.000000e+00 : f32
    %159 = vector.broadcast %cst_31 : f32 to vector<8x256xf32>
    %160 = arith.addf %159, %158 : vector<8x256xf32>
    %161 = arith.divf %159, %160 : vector<8x256xf32>
    %162 = vector.extract_strided_slice %161 {offsets = [0, 0], sizes = [8, 128], strides = [1, 1]} : vector<8x256xf32> to vector<8x128xf32>
    %163 = vector.extract_strided_slice %161 {offsets = [0, 128], sizes = [8, 128], strides = [1, 1]} : vector<8x256xf32> to vector<8x128xf32>
    %164 = vector.extract_strided_slice %151 {offsets = [0, 256], sizes = [8, 128], strides = [1, 1]} : vector<8x384xf32> to vector<8x128xf32>
    %165 = vector.extract_strided_slice %153 {offsets = [0, 256], sizes = [8, 128], strides = [1, 1]} : vector<8x384xf32> to vector<8x128xf32>
    %166 = arith.addf %165, %11 : vector<8x128xf32>
    %167 = arith.mulf %162, %166 : vector<8x128xf32>
    %168 = arith.addf %164, %167 : vector<8x128xf32>
    %169 = math.tanh %168 : vector<8x128xf32>
    %cst_32 = arith.constant 1.000000e+00 : f32
    %170 = vector.broadcast %cst_32 : f32 to vector<8x128xf32>
    %171 = arith.subf %170, %163 : vector<8x128xf32>
    %172 = arith.mulf %171, %169 : vector<8x128xf32>
    %173 = arith.mulf %163, %120 : vector<8x128xf32>
    %174 = arith.addf %172, %173 : vector<8x128xf32>
    %175 = arith.mulf %125, %174 : vector<8x128xf32>
    %176 = arith.addf %122, %175 : vector<8x128xf32>
    %c24 = arith.constant 24 : index
    %c0_33 = arith.constant 0 : index
    %177 = vector.load %arg0[%c24, %c0_33] : memref<64x512xf32, #tpu.memory_space<vmem>>, vector<8x512xf32>
    %178 = vector.extract_strided_slice %177 {offsets = [0, 0], sizes = [8, 384], strides = [1, 1]} : vector<8x512xf32> to vector<8x384xf32>
    %179 = vector.extract_strided_slice %177 {offsets = [0, 384], sizes = [8, 128], strides = [1, 1]} : vector<8x512xf32> to vector<8x128xf32>
    %180 = vector.extract_strided_slice %148 {offsets = [0, 0], sizes = [8, 32], strides = [1, 1]} : vector<8x128xf32> to vector<8x32xf32>
    %cst_34 = arith.constant dense<0.000000e+00> : vector<8x384xf32>
    %181 = tpu.matmul %180, %0, %cst_34 {dimension_numbers = #tpu.dot_dimension_numbers<[1], [0], [0], [1], [0, 0, 1, 1], [], []>} : vector<8x32xf32>, vector<32x384xf32>, vector<8x384xf32> -> vector<8x384xf32>
    %182 = vector.extract_strided_slice %178 {offsets = [0, 0], sizes = [8, 256], strides = [1, 1]} : vector<8x384xf32> to vector<8x256xf32>
    %183 = vector.extract_strided_slice %181 {offsets = [0, 0], sizes = [8, 256], strides = [1, 1]} : vector<8x384xf32> to vector<8x256xf32>
    %184 = arith.addf %182, %183 : vector<8x256xf32>
    %185 = arith.negf %184 : vector<8x256xf32>
    %186 = math.exp %185 : vector<8x256xf32>
    %cst_35 = arith.constant 1.000000e+00 : f32
    %187 = vector.broadcast %cst_35 : f32 to vector<8x256xf32>
    %188 = arith.addf %187, %186 : vector<8x256xf32>
    %189 = arith.divf %187, %188 : vector<8x256xf32>
    %190 = vector.extract_strided_slice %189 {offsets = [0, 0], sizes = [8, 128], strides = [1, 1]} : vector<8x256xf32> to vector<8x128xf32>
    %191 = vector.extract_strided_slice %189 {offsets = [0, 128], sizes = [8, 128], strides = [1, 1]} : vector<8x256xf32> to vector<8x128xf32>
    %192 = vector.extract_strided_slice %178 {offsets = [0, 256], sizes = [8, 128], strides = [1, 1]} : vector<8x384xf32> to vector<8x128xf32>
    %193 = vector.extract_strided_slice %181 {offsets = [0, 256], sizes = [8, 128], strides = [1, 1]} : vector<8x384xf32> to vector<8x128xf32>
    %194 = arith.addf %193, %8 : vector<8x128xf32>
    %195 = arith.mulf %190, %194 : vector<8x128xf32>
    %196 = arith.addf %192, %195 : vector<8x128xf32>
    %197 = math.tanh %196 : vector<8x128xf32>
    %cst_36 = arith.constant 1.000000e+00 : f32
    %198 = vector.broadcast %cst_36 : f32 to vector<8x128xf32>
    %199 = arith.subf %198, %191 : vector<8x128xf32>
    %200 = arith.mulf %199, %197 : vector<8x128xf32>
    %201 = arith.mulf %191, %148 : vector<8x128xf32>
    %202 = arith.addf %200, %201 : vector<8x128xf32>
    %203 = vector.extract_strided_slice %202 {offsets = [0, 0], sizes = [8, 32], strides = [1, 1]} : vector<8x128xf32> to vector<8x32xf32>
    %cst_37 = arith.constant dense<0.000000e+00> : vector<8x384xf32>
    %204 = tpu.matmul %203, %2, %cst_37 {dimension_numbers = #tpu.dot_dimension_numbers<[1], [0], [0], [1], [0, 0, 1, 1], [], []>} : vector<8x32xf32>, vector<32x384xf32>, vector<8x384xf32> -> vector<8x384xf32>
    %205 = arith.addf %204, %5 : vector<8x384xf32>
    %206 = vector.extract_strided_slice %174 {offsets = [0, 0], sizes = [8, 32], strides = [1, 1]} : vector<8x128xf32> to vector<8x32xf32>
    %cst_38 = arith.constant dense<0.000000e+00> : vector<8x384xf32>
    %207 = tpu.matmul %206, %1, %cst_38 {dimension_numbers = #tpu.dot_dimension_numbers<[1], [0], [0], [1], [0, 0, 1, 1], [], []>} : vector<8x32xf32>, vector<32x384xf32>, vector<8x384xf32> -> vector<8x384xf32>
    %208 = vector.extract_strided_slice %205 {offsets = [0, 0], sizes = [8, 256], strides = [1, 1]} : vector<8x384xf32> to vector<8x256xf32>
    %209 = vector.extract_strided_slice %207 {offsets = [0, 0], sizes = [8, 256], strides = [1, 1]} : vector<8x384xf32> to vector<8x256xf32>
    %210 = arith.addf %208, %209 : vector<8x256xf32>
    %211 = arith.negf %210 : vector<8x256xf32>
    %212 = math.exp %211 : vector<8x256xf32>
    %cst_39 = arith.constant 1.000000e+00 : f32
    %213 = vector.broadcast %cst_39 : f32 to vector<8x256xf32>
    %214 = arith.addf %213, %212 : vector<8x256xf32>
    %215 = arith.divf %213, %214 : vector<8x256xf32>
    %216 = vector.extract_strided_slice %215 {offsets = [0, 0], sizes = [8, 128], strides = [1, 1]} : vector<8x256xf32> to vector<8x128xf32>
    %217 = vector.extract_strided_slice %215 {offsets = [0, 128], sizes = [8, 128], strides = [1, 1]} : vector<8x256xf32> to vector<8x128xf32>
    %218 = vector.extract_strided_slice %205 {offsets = [0, 256], sizes = [8, 128], strides = [1, 1]} : vector<8x384xf32> to vector<8x128xf32>
    %219 = vector.extract_strided_slice %207 {offsets = [0, 256], sizes = [8, 128], strides = [1, 1]} : vector<8x384xf32> to vector<8x128xf32>
    %220 = arith.addf %219, %11 : vector<8x128xf32>
    %221 = arith.mulf %216, %220 : vector<8x128xf32>
    %222 = arith.addf %218, %221 : vector<8x128xf32>
    %223 = math.tanh %222 : vector<8x128xf32>
    %cst_40 = arith.constant 1.000000e+00 : f32
    %224 = vector.broadcast %cst_40 : f32 to vector<8x128xf32>
    %225 = arith.subf %224, %217 : vector<8x128xf32>
    %226 = arith.mulf %225, %223 : vector<8x128xf32>
    %227 = arith.mulf %217, %174 : vector<8x128xf32>
    %228 = arith.addf %226, %227 : vector<8x128xf32>
    %229 = arith.mulf %179, %228 : vector<8x128xf32>
    %230 = arith.addf %176, %229 : vector<8x128xf32>
    %c32_41 = arith.constant 32 : index
    %c0_42 = arith.constant 0 : index
    %231 = vector.load %arg0[%c32_41, %c0_42] : memref<64x512xf32, #tpu.memory_space<vmem>>, vector<8x512xf32>
    %232 = vector.extract_strided_slice %231 {offsets = [0, 0], sizes = [8, 384], strides = [1, 1]} : vector<8x512xf32> to vector<8x384xf32>
    %233 = vector.extract_strided_slice %231 {offsets = [0, 384], sizes = [8, 128], strides = [1, 1]} : vector<8x512xf32> to vector<8x128xf32>
    %234 = vector.extract_strided_slice %202 {offsets = [0, 0], sizes = [8, 32], strides = [1, 1]} : vector<8x128xf32> to vector<8x32xf32>
    %cst_43 = arith.constant dense<0.000000e+00> : vector<8x384xf32>
    %235 = tpu.matmul %234, %0, %cst_43 {dimension_numbers = #tpu.dot_dimension_numbers<[1], [0], [0], [1], [0, 0, 1, 1], [], []>} : vector<8x32xf32>, vector<32x384xf32>, vector<8x384xf32> -> vector<8x384xf32>
    %236 = vector.extract_strided_slice %232 {offsets = [0, 0], sizes = [8, 256], strides = [1, 1]} : vector<8x384xf32> to vector<8x256xf32>
    %237 = vector.extract_strided_slice %235 {offsets = [0, 0], sizes = [8, 256], strides = [1, 1]} : vector<8x384xf32> to vector<8x256xf32>
    %238 = arith.addf %236, %237 : vector<8x256xf32>
    %239 = arith.negf %238 : vector<8x256xf32>
    %240 = math.exp %239 : vector<8x256xf32>
    %cst_44 = arith.constant 1.000000e+00 : f32
    %241 = vector.broadcast %cst_44 : f32 to vector<8x256xf32>
    %242 = arith.addf %241, %240 : vector<8x256xf32>
    %243 = arith.divf %241, %242 : vector<8x256xf32>
    %244 = vector.extract_strided_slice %243 {offsets = [0, 0], sizes = [8, 128], strides = [1, 1]} : vector<8x256xf32> to vector<8x128xf32>
    %245 = vector.extract_strided_slice %243 {offsets = [0, 128], sizes = [8, 128], strides = [1, 1]} : vector<8x256xf32> to vector<8x128xf32>
    %246 = vector.extract_strided_slice %232 {offsets = [0, 256], sizes = [8, 128], strides = [1, 1]} : vector<8x384xf32> to vector<8x128xf32>
    %247 = vector.extract_strided_slice %235 {offsets = [0, 256], sizes = [8, 128], strides = [1, 1]} : vector<8x384xf32> to vector<8x128xf32>
    %248 = arith.addf %247, %8 : vector<8x128xf32>
    %249 = arith.mulf %244, %248 : vector<8x128xf32>
    %250 = arith.addf %246, %249 : vector<8x128xf32>
    %251 = math.tanh %250 : vector<8x128xf32>
    %cst_45 = arith.constant 1.000000e+00 : f32
    %252 = vector.broadcast %cst_45 : f32 to vector<8x128xf32>
    %253 = arith.subf %252, %245 : vector<8x128xf32>
    %254 = arith.mulf %253, %251 : vector<8x128xf32>
    %255 = arith.mulf %245, %202 : vector<8x128xf32>
    %256 = arith.addf %254, %255 : vector<8x128xf32>
    %257 = vector.extract_strided_slice %256 {offsets = [0, 0], sizes = [8, 32], strides = [1, 1]} : vector<8x128xf32> to vector<8x32xf32>
    %cst_46 = arith.constant dense<0.000000e+00> : vector<8x384xf32>
    %258 = tpu.matmul %257, %2, %cst_46 {dimension_numbers = #tpu.dot_dimension_numbers<[1], [0], [0], [1], [0, 0, 1, 1], [], []>} : vector<8x32xf32>, vector<32x384xf32>, vector<8x384xf32> -> vector<8x384xf32>
    %259 = arith.addf %258, %5 : vector<8x384xf32>
    %260 = vector.extract_strided_slice %228 {offsets = [0, 0], sizes = [8, 32], strides = [1, 1]} : vector<8x128xf32> to vector<8x32xf32>
    %cst_47 = arith.constant dense<0.000000e+00> : vector<8x384xf32>
    %261 = tpu.matmul %260, %1, %cst_47 {dimension_numbers = #tpu.dot_dimension_numbers<[1], [0], [0], [1], [0, 0, 1, 1], [], []>} : vector<8x32xf32>, vector<32x384xf32>, vector<8x384xf32> -> vector<8x384xf32>
    %262 = vector.extract_strided_slice %259 {offsets = [0, 0], sizes = [8, 256], strides = [1, 1]} : vector<8x384xf32> to vector<8x256xf32>
    %263 = vector.extract_strided_slice %261 {offsets = [0, 0], sizes = [8, 256], strides = [1, 1]} : vector<8x384xf32> to vector<8x256xf32>
    %264 = arith.addf %262, %263 : vector<8x256xf32>
    %265 = arith.negf %264 : vector<8x256xf32>
    %266 = math.exp %265 : vector<8x256xf32>
    %cst_48 = arith.constant 1.000000e+00 : f32
    %267 = vector.broadcast %cst_48 : f32 to vector<8x256xf32>
    %268 = arith.addf %267, %266 : vector<8x256xf32>
    %269 = arith.divf %267, %268 : vector<8x256xf32>
    %270 = vector.extract_strided_slice %269 {offsets = [0, 0], sizes = [8, 128], strides = [1, 1]} : vector<8x256xf32> to vector<8x128xf32>
    %271 = vector.extract_strided_slice %269 {offsets = [0, 128], sizes = [8, 128], strides = [1, 1]} : vector<8x256xf32> to vector<8x128xf32>
    %272 = vector.extract_strided_slice %259 {offsets = [0, 256], sizes = [8, 128], strides = [1, 1]} : vector<8x384xf32> to vector<8x128xf32>
    %273 = vector.extract_strided_slice %261 {offsets = [0, 256], sizes = [8, 128], strides = [1, 1]} : vector<8x384xf32> to vector<8x128xf32>
    %274 = arith.addf %273, %11 : vector<8x128xf32>
    %275 = arith.mulf %270, %274 : vector<8x128xf32>
    %276 = arith.addf %272, %275 : vector<8x128xf32>
    %277 = math.tanh %276 : vector<8x128xf32>
    %cst_49 = arith.constant 1.000000e+00 : f32
    %278 = vector.broadcast %cst_49 : f32 to vector<8x128xf32>
    %279 = arith.subf %278, %271 : vector<8x128xf32>
    %280 = arith.mulf %279, %277 : vector<8x128xf32>
    %281 = arith.mulf %271, %228 : vector<8x128xf32>
    %282 = arith.addf %280, %281 : vector<8x128xf32>
    %283 = arith.mulf %233, %282 : vector<8x128xf32>
    %284 = arith.addf %230, %283 : vector<8x128xf32>
    %c40 = arith.constant 40 : index
    %c0_50 = arith.constant 0 : index
    %285 = vector.load %arg0[%c40, %c0_50] : memref<64x512xf32, #tpu.memory_space<vmem>>, vector<8x512xf32>
    %286 = vector.extract_strided_slice %285 {offsets = [0, 0], sizes = [8, 384], strides = [1, 1]} : vector<8x512xf32> to vector<8x384xf32>
    %287 = vector.extract_strided_slice %285 {offsets = [0, 384], sizes = [8, 128], strides = [1, 1]} : vector<8x512xf32> to vector<8x128xf32>
    %288 = vector.extract_strided_slice %256 {offsets = [0, 0], sizes = [8, 32], strides = [1, 1]} : vector<8x128xf32> to vector<8x32xf32>
    %cst_51 = arith.constant dense<0.000000e+00> : vector<8x384xf32>
    %289 = tpu.matmul %288, %0, %cst_51 {dimension_numbers = #tpu.dot_dimension_numbers<[1], [0], [0], [1], [0, 0, 1, 1], [], []>} : vector<8x32xf32>, vector<32x384xf32>, vector<8x384xf32> -> vector<8x384xf32>
    %290 = vector.extract_strided_slice %286 {offsets = [0, 0], sizes = [8, 256], strides = [1, 1]} : vector<8x384xf32> to vector<8x256xf32>
    %291 = vector.extract_strided_slice %289 {offsets = [0, 0], sizes = [8, 256], strides = [1, 1]} : vector<8x384xf32> to vector<8x256xf32>
    %292 = arith.addf %290, %291 : vector<8x256xf32>
    %293 = arith.negf %292 : vector<8x256xf32>
    %294 = math.exp %293 : vector<8x256xf32>
    %cst_52 = arith.constant 1.000000e+00 : f32
    %295 = vector.broadcast %cst_52 : f32 to vector<8x256xf32>
    %296 = arith.addf %295, %294 : vector<8x256xf32>
    %297 = arith.divf %295, %296 : vector<8x256xf32>
    %298 = vector.extract_strided_slice %297 {offsets = [0, 0], sizes = [8, 128], strides = [1, 1]} : vector<8x256xf32> to vector<8x128xf32>
    %299 = vector.extract_strided_slice %297 {offsets = [0, 128], sizes = [8, 128], strides = [1, 1]} : vector<8x256xf32> to vector<8x128xf32>
    %300 = vector.extract_strided_slice %286 {offsets = [0, 256], sizes = [8, 128], strides = [1, 1]} : vector<8x384xf32> to vector<8x128xf32>
    %301 = vector.extract_strided_slice %289 {offsets = [0, 256], sizes = [8, 128], strides = [1, 1]} : vector<8x384xf32> to vector<8x128xf32>
    %302 = arith.addf %301, %8 : vector<8x128xf32>
    %303 = arith.mulf %298, %302 : vector<8x128xf32>
    %304 = arith.addf %300, %303 : vector<8x128xf32>
    %305 = math.tanh %304 : vector<8x128xf32>
    %cst_53 = arith.constant 1.000000e+00 : f32
    %306 = vector.broadcast %cst_53 : f32 to vector<8x128xf32>
    %307 = arith.subf %306, %299 : vector<8x128xf32>
    %308 = arith.mulf %307, %305 : vector<8x128xf32>
    %309 = arith.mulf %299, %256 : vector<8x128xf32>
    %310 = arith.addf %308, %309 : vector<8x128xf32>
    %311 = vector.extract_strided_slice %310 {offsets = [0, 0], sizes = [8, 32], strides = [1, 1]} : vector<8x128xf32> to vector<8x32xf32>
    %cst_54 = arith.constant dense<0.000000e+00> : vector<8x384xf32>
    %312 = tpu.matmul %311, %2, %cst_54 {dimension_numbers = #tpu.dot_dimension_numbers<[1], [0], [0], [1], [0, 0, 1, 1], [], []>} : vector<8x32xf32>, vector<32x384xf32>, vector<8x384xf32> -> vector<8x384xf32>
    %313 = arith.addf %312, %5 : vector<8x384xf32>
    %314 = vector.extract_strided_slice %282 {offsets = [0, 0], sizes = [8, 32], strides = [1, 1]} : vector<8x128xf32> to vector<8x32xf32>
    %cst_55 = arith.constant dense<0.000000e+00> : vector<8x384xf32>
    %315 = tpu.matmul %314, %1, %cst_55 {dimension_numbers = #tpu.dot_dimension_numbers<[1], [0], [0], [1], [0, 0, 1, 1], [], []>} : vector<8x32xf32>, vector<32x384xf32>, vector<8x384xf32> -> vector<8x384xf32>
    %316 = vector.extract_strided_slice %313 {offsets = [0, 0], sizes = [8, 256], strides = [1, 1]} : vector<8x384xf32> to vector<8x256xf32>
    %317 = vector.extract_strided_slice %315 {offsets = [0, 0], sizes = [8, 256], strides = [1, 1]} : vector<8x384xf32> to vector<8x256xf32>
    %318 = arith.addf %316, %317 : vector<8x256xf32>
    %319 = arith.negf %318 : vector<8x256xf32>
    %320 = math.exp %319 : vector<8x256xf32>
    %cst_56 = arith.constant 1.000000e+00 : f32
    %321 = vector.broadcast %cst_56 : f32 to vector<8x256xf32>
    %322 = arith.addf %321, %320 : vector<8x256xf32>
    %323 = arith.divf %321, %322 : vector<8x256xf32>
    %324 = vector.extract_strided_slice %323 {offsets = [0, 0], sizes = [8, 128], strides = [1, 1]} : vector<8x256xf32> to vector<8x128xf32>
    %325 = vector.extract_strided_slice %323 {offsets = [0, 128], sizes = [8, 128], strides = [1, 1]} : vector<8x256xf32> to vector<8x128xf32>
    %326 = vector.extract_strided_slice %313 {offsets = [0, 256], sizes = [8, 128], strides = [1, 1]} : vector<8x384xf32> to vector<8x128xf32>
    %327 = vector.extract_strided_slice %315 {offsets = [0, 256], sizes = [8, 128], strides = [1, 1]} : vector<8x384xf32> to vector<8x128xf32>
    %328 = arith.addf %327, %11 : vector<8x128xf32>
    %329 = arith.mulf %324, %328 : vector<8x128xf32>
    %330 = arith.addf %326, %329 : vector<8x128xf32>
    %331 = math.tanh %330 : vector<8x128xf32>
    %cst_57 = arith.constant 1.000000e+00 : f32
    %332 = vector.broadcast %cst_57 : f32 to vector<8x128xf32>
    %333 = arith.subf %332, %325 : vector<8x128xf32>
    %334 = arith.mulf %333, %331 : vector<8x128xf32>
    %335 = arith.mulf %325, %282 : vector<8x128xf32>
    %336 = arith.addf %334, %335 : vector<8x128xf32>
    %337 = arith.mulf %287, %336 : vector<8x128xf32>
    %338 = arith.addf %284, %337 : vector<8x128xf32>
    %c48 = arith.constant 48 : index
    %c0_58 = arith.constant 0 : index
    %339 = vector.load %arg0[%c48, %c0_58] : memref<64x512xf32, #tpu.memory_space<vmem>>, vector<8x512xf32>
    %340 = vector.extract_strided_slice %339 {offsets = [0, 0], sizes = [8, 384], strides = [1, 1]} : vector<8x512xf32> to vector<8x384xf32>
    %341 = vector.extract_strided_slice %339 {offsets = [0, 384], sizes = [8, 128], strides = [1, 1]} : vector<8x512xf32> to vector<8x128xf32>
    %342 = vector.extract_strided_slice %310 {offsets = [0, 0], sizes = [8, 32], strides = [1, 1]} : vector<8x128xf32> to vector<8x32xf32>
    %cst_59 = arith.constant dense<0.000000e+00> : vector<8x384xf32>
    %343 = tpu.matmul %342, %0, %cst_59 {dimension_numbers = #tpu.dot_dimension_numbers<[1], [0], [0], [1], [0, 0, 1, 1], [], []>} : vector<8x32xf32>, vector<32x384xf32>, vector<8x384xf32> -> vector<8x384xf32>
    %344 = vector.extract_strided_slice %340 {offsets = [0, 0], sizes = [8, 256], strides = [1, 1]} : vector<8x384xf32> to vector<8x256xf32>
    %345 = vector.extract_strided_slice %343 {offsets = [0, 0], sizes = [8, 256], strides = [1, 1]} : vector<8x384xf32> to vector<8x256xf32>
    %346 = arith.addf %344, %345 : vector<8x256xf32>
    %347 = arith.negf %346 : vector<8x256xf32>
    %348 = math.exp %347 : vector<8x256xf32>
    %cst_60 = arith.constant 1.000000e+00 : f32
    %349 = vector.broadcast %cst_60 : f32 to vector<8x256xf32>
    %350 = arith.addf %349, %348 : vector<8x256xf32>
    %351 = arith.divf %349, %350 : vector<8x256xf32>
    %352 = vector.extract_strided_slice %351 {offsets = [0, 0], sizes = [8, 128], strides = [1, 1]} : vector<8x256xf32> to vector<8x128xf32>
    %353 = vector.extract_strided_slice %351 {offsets = [0, 128], sizes = [8, 128], strides = [1, 1]} : vector<8x256xf32> to vector<8x128xf32>
    %354 = vector.extract_strided_slice %340 {offsets = [0, 256], sizes = [8, 128], strides = [1, 1]} : vector<8x384xf32> to vector<8x128xf32>
    %355 = vector.extract_strided_slice %343 {offsets = [0, 256], sizes = [8, 128], strides = [1, 1]} : vector<8x384xf32> to vector<8x128xf32>
    %356 = arith.addf %355, %8 : vector<8x128xf32>
    %357 = arith.mulf %352, %356 : vector<8x128xf32>
    %358 = arith.addf %354, %357 : vector<8x128xf32>
    %359 = math.tanh %358 : vector<8x128xf32>
    %cst_61 = arith.constant 1.000000e+00 : f32
    %360 = vector.broadcast %cst_61 : f32 to vector<8x128xf32>
    %361 = arith.subf %360, %353 : vector<8x128xf32>
    %362 = arith.mulf %361, %359 : vector<8x128xf32>
    %363 = arith.mulf %353, %310 : vector<8x128xf32>
    %364 = arith.addf %362, %363 : vector<8x128xf32>
    %365 = vector.extract_strided_slice %364 {offsets = [0, 0], sizes = [8, 32], strides = [1, 1]} : vector<8x128xf32> to vector<8x32xf32>
    %cst_62 = arith.constant dense<0.000000e+00> : vector<8x384xf32>
    %366 = tpu.matmul %365, %2, %cst_62 {dimension_numbers = #tpu.dot_dimension_numbers<[1], [0], [0], [1], [0, 0, 1, 1], [], []>} : vector<8x32xf32>, vector<32x384xf32>, vector<8x384xf32> -> vector<8x384xf32>
    %367 = arith.addf %366, %5 : vector<8x384xf32>
    %368 = vector.extract_strided_slice %336 {offsets = [0, 0], sizes = [8, 32], strides = [1, 1]} : vector<8x128xf32> to vector<8x32xf32>
    %cst_63 = arith.constant dense<0.000000e+00> : vector<8x384xf32>
    %369 = tpu.matmul %368, %1, %cst_63 {dimension_numbers = #tpu.dot_dimension_numbers<[1], [0], [0], [1], [0, 0, 1, 1], [], []>} : vector<8x32xf32>, vector<32x384xf32>, vector<8x384xf32> -> vector<8x384xf32>
    %370 = vector.extract_strided_slice %367 {offsets = [0, 0], sizes = [8, 256], strides = [1, 1]} : vector<8x384xf32> to vector<8x256xf32>
    %371 = vector.extract_strided_slice %369 {offsets = [0, 0], sizes = [8, 256], strides = [1, 1]} : vector<8x384xf32> to vector<8x256xf32>
    %372 = arith.addf %370, %371 : vector<8x256xf32>
    %373 = arith.negf %372 : vector<8x256xf32>
    %374 = math.exp %373 : vector<8x256xf32>
    %cst_64 = arith.constant 1.000000e+00 : f32
    %375 = vector.broadcast %cst_64 : f32 to vector<8x256xf32>
    %376 = arith.addf %375, %374 : vector<8x256xf32>
    %377 = arith.divf %375, %376 : vector<8x256xf32>
    %378 = vector.extract_strided_slice %377 {offsets = [0, 0], sizes = [8, 128], strides = [1, 1]} : vector<8x256xf32> to vector<8x128xf32>
    %379 = vector.extract_strided_slice %377 {offsets = [0, 128], sizes = [8, 128], strides = [1, 1]} : vector<8x256xf32> to vector<8x128xf32>
    %380 = vector.extract_strided_slice %367 {offsets = [0, 256], sizes = [8, 128], strides = [1, 1]} : vector<8x384xf32> to vector<8x128xf32>
    %381 = vector.extract_strided_slice %369 {offsets = [0, 256], sizes = [8, 128], strides = [1, 1]} : vector<8x384xf32> to vector<8x128xf32>
    %382 = arith.addf %381, %11 : vector<8x128xf32>
    %383 = arith.mulf %378, %382 : vector<8x128xf32>
    %384 = arith.addf %380, %383 : vector<8x128xf32>
    %385 = math.tanh %384 : vector<8x128xf32>
    %cst_65 = arith.constant 1.000000e+00 : f32
    %386 = vector.broadcast %cst_65 : f32 to vector<8x128xf32>
    %387 = arith.subf %386, %379 : vector<8x128xf32>
    %388 = arith.mulf %387, %385 : vector<8x128xf32>
    %389 = arith.mulf %379, %336 : vector<8x128xf32>
    %390 = arith.addf %388, %389 : vector<8x128xf32>
    %391 = arith.mulf %341, %390 : vector<8x128xf32>
    %392 = arith.addf %338, %391 : vector<8x128xf32>
    %c56 = arith.constant 56 : index
    %c0_66 = arith.constant 0 : index
    %393 = vector.load %arg0[%c56, %c0_66] : memref<64x512xf32, #tpu.memory_space<vmem>>, vector<8x512xf32>
    %394 = vector.extract_strided_slice %393 {offsets = [0, 0], sizes = [8, 384], strides = [1, 1]} : vector<8x512xf32> to vector<8x384xf32>
    %395 = vector.extract_strided_slice %393 {offsets = [0, 384], sizes = [8, 128], strides = [1, 1]} : vector<8x512xf32> to vector<8x128xf32>
    %396 = vector.extract_strided_slice %364 {offsets = [0, 0], sizes = [8, 32], strides = [1, 1]} : vector<8x128xf32> to vector<8x32xf32>
    %cst_67 = arith.constant dense<0.000000e+00> : vector<8x384xf32>
    %397 = tpu.matmul %396, %0, %cst_67 {dimension_numbers = #tpu.dot_dimension_numbers<[1], [0], [0], [1], [0, 0, 1, 1], [], []>} : vector<8x32xf32>, vector<32x384xf32>, vector<8x384xf32> -> vector<8x384xf32>
    %398 = vector.extract_strided_slice %394 {offsets = [0, 0], sizes = [8, 256], strides = [1, 1]} : vector<8x384xf32> to vector<8x256xf32>
    %399 = vector.extract_strided_slice %397 {offsets = [0, 0], sizes = [8, 256], strides = [1, 1]} : vector<8x384xf32> to vector<8x256xf32>
    %400 = arith.addf %398, %399 : vector<8x256xf32>
    %401 = arith.negf %400 : vector<8x256xf32>
    %402 = math.exp %401 : vector<8x256xf32>
    %cst_68 = arith.constant 1.000000e+00 : f32
    %403 = vector.broadcast %cst_68 : f32 to vector<8x256xf32>
    %404 = arith.addf %403, %402 : vector<8x256xf32>
    %405 = arith.divf %403, %404 : vector<8x256xf32>
    %406 = vector.extract_strided_slice %405 {offsets = [0, 0], sizes = [8, 128], strides = [1, 1]} : vector<8x256xf32> to vector<8x128xf32>
    %407 = vector.extract_strided_slice %405 {offsets = [0, 128], sizes = [8, 128], strides = [1, 1]} : vector<8x256xf32> to vector<8x128xf32>
    %408 = vector.extract_strided_slice %394 {offsets = [0, 256], sizes = [8, 128], strides = [1, 1]} : vector<8x384xf32> to vector<8x128xf32>
    %409 = vector.extract_strided_slice %397 {offsets = [0, 256], sizes = [8, 128], strides = [1, 1]} : vector<8x384xf32> to vector<8x128xf32>
    %410 = arith.addf %409, %8 : vector<8x128xf32>
    %411 = arith.mulf %406, %410 : vector<8x128xf32>
    %412 = arith.addf %408, %411 : vector<8x128xf32>
    %413 = math.tanh %412 : vector<8x128xf32>
    %cst_69 = arith.constant 1.000000e+00 : f32
    %414 = vector.broadcast %cst_69 : f32 to vector<8x128xf32>
    %415 = arith.subf %414, %407 : vector<8x128xf32>
    %416 = arith.mulf %415, %413 : vector<8x128xf32>
    %417 = arith.mulf %407, %364 : vector<8x128xf32>
    %418 = arith.addf %416, %417 : vector<8x128xf32>
    %419 = vector.extract_strided_slice %418 {offsets = [0, 0], sizes = [8, 32], strides = [1, 1]} : vector<8x128xf32> to vector<8x32xf32>
    %cst_70 = arith.constant dense<0.000000e+00> : vector<8x384xf32>
    %420 = tpu.matmul %419, %2, %cst_70 {dimension_numbers = #tpu.dot_dimension_numbers<[1], [0], [0], [1], [0, 0, 1, 1], [], []>} : vector<8x32xf32>, vector<32x384xf32>, vector<8x384xf32> -> vector<8x384xf32>
    %421 = arith.addf %420, %5 : vector<8x384xf32>
    %422 = vector.extract_strided_slice %390 {offsets = [0, 0], sizes = [8, 32], strides = [1, 1]} : vector<8x128xf32> to vector<8x32xf32>
    %cst_71 = arith.constant dense<0.000000e+00> : vector<8x384xf32>
    %423 = tpu.matmul %422, %1, %cst_71 {dimension_numbers = #tpu.dot_dimension_numbers<[1], [0], [0], [1], [0, 0, 1, 1], [], []>} : vector<8x32xf32>, vector<32x384xf32>, vector<8x384xf32> -> vector<8x384xf32>
    %424 = vector.extract_strided_slice %421 {offsets = [0, 0], sizes = [8, 256], strides = [1, 1]} : vector<8x384xf32> to vector<8x256xf32>
    %425 = vector.extract_strided_slice %423 {offsets = [0, 0], sizes = [8, 256], strides = [1, 1]} : vector<8x384xf32> to vector<8x256xf32>
    %426 = arith.addf %424, %425 : vector<8x256xf32>
    %427 = arith.negf %426 : vector<8x256xf32>
    %428 = math.exp %427 : vector<8x256xf32>
    %cst_72 = arith.constant 1.000000e+00 : f32
    %429 = vector.broadcast %cst_72 : f32 to vector<8x256xf32>
    %430 = arith.addf %429, %428 : vector<8x256xf32>
    %431 = arith.divf %429, %430 : vector<8x256xf32>
    %432 = vector.extract_strided_slice %431 {offsets = [0, 0], sizes = [8, 128], strides = [1, 1]} : vector<8x256xf32> to vector<8x128xf32>
    %433 = vector.extract_strided_slice %431 {offsets = [0, 128], sizes = [8, 128], strides = [1, 1]} : vector<8x256xf32> to vector<8x128xf32>
    %434 = vector.extract_strided_slice %421 {offsets = [0, 256], sizes = [8, 128], strides = [1, 1]} : vector<8x384xf32> to vector<8x128xf32>
    %435 = vector.extract_strided_slice %423 {offsets = [0, 256], sizes = [8, 128], strides = [1, 1]} : vector<8x384xf32> to vector<8x128xf32>
    %436 = arith.addf %435, %11 : vector<8x128xf32>
    %437 = arith.mulf %432, %436 : vector<8x128xf32>
    %438 = arith.addf %434, %437 : vector<8x128xf32>
    %439 = math.tanh %438 : vector<8x128xf32>
    %cst_73 = arith.constant 1.000000e+00 : f32
    %440 = vector.broadcast %cst_73 : f32 to vector<8x128xf32>
    %441 = arith.subf %440, %433 : vector<8x128xf32>
    %442 = arith.mulf %441, %439 : vector<8x128xf32>
    %443 = arith.mulf %433, %390 : vector<8x128xf32>
    %444 = arith.addf %442, %443 : vector<8x128xf32>
    %445 = arith.mulf %395, %444 : vector<8x128xf32>
    %446 = arith.addf %392, %445 : vector<8x128xf32>
    %c96 = arith.constant 96 : index
    %c0_74 = arith.constant 0 : index
    %447 = vector.load %arg1[%c96, %c0_74] : memref<160x384xf32, #tpu.memory_space<vmem>>, vector<32x384xf32>
    %c152 = arith.constant 152 : index
    %c0_75 = arith.constant 0 : index
    %448 = vector.load %arg1[%c152, %c0_75] : memref<160x384xf32, #tpu.memory_space<vmem>>, vector<1x384xf32>
    %449 = vector.extract_strided_slice %446 {offsets = [0, 0], sizes = [8, 32], strides = [1, 1]} : vector<8x128xf32> to vector<8x32xf32>
    %cst_76 = arith.constant dense<0.000000e+00> : vector<8x384xf32>
    %450 = tpu.matmul %449, %447, %cst_76 {dimension_numbers = #tpu.dot_dimension_numbers<[1], [0], [0], [1], [0, 0, 1, 1], [], []>} : vector<8x32xf32>, vector<32x384xf32>, vector<8x384xf32> -> vector<8x384xf32>
    %451 = vector.extract_strided_slice %450 {offsets = [0, 0], sizes = [8, 8], strides = [1, 1]} : vector<8x384xf32> to vector<8x8xf32>
    %452 = vector.extract_strided_slice %448 {offsets = [0, 0], sizes = [1, 8], strides = [1, 1]} : vector<1x384xf32> to vector<1x8xf32>
    %453 = vector.shape_cast %452 : vector<1x8xf32> to vector<1x8xf32>
    %454 = vector.broadcast %453 : vector<1x8xf32> to vector<8x8xf32>
    %455 = arith.addf %451, %454 : vector<8x8xf32>
    %456 = arith.negf %455 : vector<8x8xf32>
    %457 = math.exp %456 : vector<8x8xf32>
    %cst_77 = arith.constant 1.000000e+00 : f32
    %458 = vector.broadcast %cst_77 : f32 to vector<8x8xf32>
    %459 = arith.addf %458, %457 : vector<8x8xf32>
    %460 = arith.divf %458, %459 : vector<8x8xf32>
    %c0_78 = arith.constant 0 : index
    %c0_79 = arith.constant 0 : index
    %461 = vector.load %arg2[%c0_78, %c0_79] : memref<8x8xf32, #tpu.memory_space<vmem>>, vector<8x8xf32>
    tpu.vector_store %arg2[%c0_78, %c0_79], %460 {strides = array<i32>} : memref<8x8xf32, #tpu.memory_space<vmem>>, vector<8x8xf32>,
    return
  }
}

</mosaic_0001>

<llo_original>
// kernel: encoder_forward.1
$region0: #{encoder_forward.1}
  #allocation0 [shape = 'u32[]', space=smem, size = 0x4, offset = 0x4, fixed_abs, tag = 'smem constant byte address 0x4 - core index']
  #allocation1 [shape = 'u32[72,128]{1,0:T(1,128)}', space=vmem, size = 0x9000, scoped, tag = 'internal scratch']
  %s0 = inlined_call_operand.vmem [shape: f32[64,512], index: 0, kind: input, shape index: {}]
  %s1 = inlined_call_operand.vmem [shape: f32[160,384], index: 1, kind: input, shape index: {}]
  %s2 = inlined_call_operand.vmem [shape: f32[8,8], index: 2, kind: output, shape index: {}]
  %s3 = sld [smem:[#allocation0]]
  $region18: #{encoder_forward.1} parent=0
    _
  %s5 = ssub.s32 1, %s3
  %s6 = scalar_select 0, %s5, %s3
  // Predicated region
  $region2: #{encoder_forward.1} parent=0 // pred_check
    _
  $region3: #{encoder_forward.1} parent=0 // pred_check_branch
    %8 = sbr.rel (0) target = $region5
  $region4: #{encoder_forward.1} parent=0 // pred_region
    _
  $region5: #{encoder_forward.1} parent=0 // pred_fallthru
    _
  // Predicated region
  $region6: #{encoder_forward.1} parent=0 // pred_check
    _
  $region7: #{encoder_forward.1} parent=0 // pred_check_branch
    %10 = sbr.rel (0) target = $region9
  $region8: #{encoder_forward.1} parent=0 // pred_region
    _
  $region9: #{encoder_forward.1} parent=0 // pred_fallthru
    _
  %v11 = vld [vmem:[%s1] sm:$0xff]
  %v12 = vld [vmem:[%s1 + $0x8] sm:$0xff]
  %v13 = vld [vmem:[%s1 + $0x10] sm:$0xff]
  %v14 = vld [vmem:[%s1 + $0x18] sm:$0xff]
  %v15 = vld [vmem:[%s1 + $0x20] sm:$0xff]
  %v16 = vld [vmem:[%s1 + $0x28] sm:$0xff]
  %v17 = vld [vmem:[%s1 + $0x30] sm:$0xff]
  %v18 = vld [vmem:[%s1 + $0x38] sm:$0xff]
  %v19 = vld [vmem:[%s1 + $0x40] sm:$0xff]
  %v20 = vld [vmem:[%s1 + $0x48] sm:$0xff]
  %v21 = vld [vmem:[%s1 + $0x50] sm:$0xff]
  %v22 = vld [vmem:[%s1 + $0x58] sm:$0xff]
  %v23 = vld [vmem:[%s1 + $0x60] sm:$0xff]
  %v24 = vld [vmem:[%s1 + $0x68] sm:$0xff]
  %v25 = vld [vmem:[%s1 + $0x70] sm:$0xff]
  %v26 = vld [vmem:[%s1 + $0x78] sm:$0xff]
  %v27 = vld [vmem:[%s1 + $0x80] sm:$0xff]
  %v28 = vld [vmem:[%s1 + $0x88] sm:$0xff]
  %v29 = vld [vmem:[%s1 + $0x90] sm:$0xff]
  %v30 = vld [vmem:[%s1 + $0x98] sm:$0xff]
  %v31 = vld [vmem:[%s1 + $0xa0] sm:$0xff]
  %v32 = vld [vmem:[%s1 + $0xa8] sm:$0xff]
  %v33 = vld [vmem:[%s1 + $0xb0] sm:$0xff]
  %v34 = vld [vmem:[%s1 + $0xb8] sm:$0xff]
  %v35 = vld [vmem:[%s1 + $0xc0] sm:$0xff]
  %v36 = vld [vmem:[%s1 + $0xc8] sm:$0xff]
  %v37 = vld [vmem:[%s1 + $0xd0] sm:$0xff]
  %v38 = vld [vmem:[%s1 + $0xd8] sm:$0xff]
  %v39 = vld [vmem:[%s1 + $0xe0] sm:$0xff]
  %v40 = vld [vmem:[%s1 + $0xe8] sm:$0xff]
  %v41 = vld [vmem:[%s1 + $0xf0] sm:$0xff]
  %v42 = vld [vmem:[%s1 + $0xf8] sm:$0xff]
  %v43 = vld [vmem:[%s1 + $0x100] sm:$0xff]
  %v44 = vld [vmem:[%s1 + $0x108] sm:$0xff]
  %v45 = vld [vmem:[%s1 + $0x110] sm:$0xff]
  %v46 = vld [vmem:[%s1 + $0x118] sm:$0xff]
  %s47 = scalar_lea.vmem %s1, 384
  %v48 = vld [vmem:[%s47] ss:$8 sm:$0x7]
  %v50 = vperm.slane %v48, 0
  %v51 = vperm.slane %v48, 1
  %v52 = vperm.slane %v48, 2
  %v56 = vld [vmem:[%s1 + $0x198] ss:$0 sm:$0xff]
  %v57 = vld [vmem:[%s1 + $0x1b0] ss:$0 sm:$0xff]
  %v58 = vld [vmem:[%s0] sm:$0xff]
  %v59 = vld [vmem:[%s0 + $0x8] sm:$0xff]
  %v60 = vld [vmem:[%s0 + $0x10] sm:$0xff]
  %v61 = vld [vmem:[%s0 + $0x18] sm:$0xff]
  %vm62 = vcmask 261120
  %v64 = vsel %vm62, 0.0, 0
  %66 = vmatpush.msra.mxu0 0.0
  %67 = vmatpush.msra.mxu0 0.0
  %68 = vmatpush.msra.mxu0 0.0
  %69 = vmatpush.msra.mxu0 0.0
  %70 = vmatpush.msra.mxu0 0.0
  %71 = vmatpush.msra.mxu0 0.0
  %72 = vmatpush.msra.mxu0 0.0
  %73 = vmatpush.msra.mxu0 0.0
  %74 = vmatpush.msra.mxu0 0.0
  %75 = vmatpush.msra.mxu0 0.0
  %76 = vmatpush.msra.mxu0 0.0
  %77 = vmatpush.msra.mxu0 0.0
  %78 = vmatpush.msra.mxu0 %v20
  %79 = vmatpush.msra.mxu0 %v17
  %80 = vmatpush.msra.mxu0 %v14
  %81 = vmatpush.msra.mxu0 %v11
  %82 = vmatmul.f32.gmra.mxu0 %v64
  %v83 = vpop.f32.mrf.mxu0
  %v84 = vadd.f32 0.0, %v83
  %85 = vdwg.mxu0
  %86 = vmatpush.msra.mxu0 0.0
  %87 = vmatpush.msra.mxu0 0.0
  %88 = vmatpush.msra.mxu0 0.0
  %89 = vmatpush.msra.mxu0 0.0
  %90 = vmatpush.msra.mxu0 0.0
  %91 = vmatpush.msra.mxu0 0.0
  %92 = vmatpush.msra.mxu0 0.0
  %93 = vmatpush.msra.mxu0 0.0
  %94 = vmatpush.msra.mxu0 0.0
  %95 = vmatpush.msra.mxu0 0.0
  %96 = vmatpush.msra.mxu0 0.0
  %97 = vmatpush.msra.mxu0 0.0
  %98 = vmatpush.msra.mxu0 %v21
  %99 = vmatpush.msra.mxu0 %v18
  %100 = vmatpush.msra.mxu0 %v15
  %101 = vmatpush.msra.mxu0 %v12
  %102 = vmatmul.f32.gmra.mxu0 %v64
  %v103 = vpop.f32.mrf.mxu0
  %v104 = vadd.f32 0.0, %v103
  %105 = vdwg.mxu0
  %106 = vmatpush.msra.mxu0 0.0
  %107 = vmatpush.msra.mxu0 0.0
  %108 = vmatpush.msra.mxu0 0.0
  %109 = vmatpush.msra.mxu0 0.0
  %110 = vmatpush.msra.mxu0 0.0
  %111 = vmatpush.msra.mxu0 0.0
  %112 = vmatpush.msra.mxu0 0.0
  %113 = vmatpush.msra.mxu0 0.0
  %114 = vmatpush.msra.mxu0 0.0
  %115 = vmatpush.msra.mxu0 0.0
  %116 = vmatpush.msra.mxu0 0.0
  %117 = vmatpush.msra.mxu0 0.0
  %118 = vmatpush.msra.mxu0 %v22
  %119 = vmatpush.msra.mxu0 %v19
  %120 = vmatpush.msra.mxu0 %v16
  %121 = vmatpush.msra.mxu0 %v13
  %122 = vmatmul.f32.gmra.mxu0 %v64
  %v123 = vpop.f32.mrf.mxu0
  %v124 = vadd.f32 0.0, %v123
  %125 = vdwg.mxu0
  %v126 = vadd.f32 %v58, %v84
  %v127 = vadd.f32 %v59, %v104
  %v128 = vxor.u32 %v126, 2147483648
  %v129 = vxor.u32 %v127, 2147483648
  %v130 = vmul.f32 %v128, 1.442695
  %v131 = vpow.pop %v130
  %v132 = vmul.f32 %v129, 1.442695
  %v133 = vpow.pop %v132
  %v134 = vadd.f32 %v131, 1.0
  %v135 = vadd.f32 %v133, 1.0
  %v136 = vrcp.pop %v134
  %v137 = vmul.f32 %v134, %v136
  %v138 = vsub.f32 1.0, %v137
  %v139 = vmul.f32 %v136, %v138
  %v140 = vadd.f32 %v136, %v139
  %vm141 = vweird.f32 %v134
  %vm142 = vweird.f32 %v136
  %vm143 = vmor %vm141, %vm142
  %v144 = vsel %vm143, %v136, %v140
  %v145 = vand.u32 2147483647, %v134
  %vm146 = vcmp.eq.f32.partialorder %v145, 8.507059e+37
  %v147 = vand.u32 %v134, 2147483648
  %v148 = vor.u32 1.1754944e-38, %v147
  %v149 = vsel %vm146, %v148, %v144
  %v150 = vmul.f32 1.0, %v149
  %v151 = vrcp.pop %v135
  %v152 = vmul.f32 %v135, %v151
  %v153 = vsub.f32 1.0, %v152
  %v154 = vmul.f32 %v151, %v153
  %v155 = vadd.f32 %v151, %v154
  %vm156 = vweird.f32 %v135
  %vm157 = vweird.f32 %v151
  %vm158 = vmor %vm156, %vm157
  %v159 = vsel %vm158, %v151, %v155
  %v160 = vand.u32 2147483647, %v135
  %vm161 = vcmp.eq.f32.partialorder %v160, 8.507059e+37
  %v162 = vand.u32 %v135, 2147483648
  %v163 = vor.u32 1.1754944e-38, %v162
  %v164 = vsel %vm161, %v163, %v159
  %v165 = vmul.f32 1.0, %v164
  %v166 = vadd.f32 %v124, %v56
  %v167 = vmul.f32 %v150, %v166
  %v168 = vadd.f32 %v60, %v167
  %v169 = vtanh.pop %v168
  %v170 = vsub.f32 1.0, %v165
  %v171 = vmul.f32 %v170, %v169
  %v172 = vmul.f32 %v165, 0.0
  %v173 = vadd.f32 %v171, %v172
  %v175 = vsel %vm62, %v173, 0
  %177 = vmatpush.msra.mxu0 0.0
  %178 = vmatpush.msra.mxu0 0.0
  %179 = vmatpush.msra.mxu0 0.0
  %180 = vmatpush.msra.mxu0 0.0
  %181 = vmatpush.msra.mxu0 0.0
  %182 = vmatpush.msra.mxu0 0.0
  %183 = vmatpush.msra.mxu0 0.0
  %184 = vmatpush.msra.mxu0 0.0
  %185 = vmatpush.msra.mxu0 0.0
  %186 = vmatpush.msra.mxu0 0.0
  %187 = vmatpush.msra.mxu0 0.0
  %188 = vmatpush.msra.mxu0 0.0
  %189 = vmatpush.msra.mxu0 %v44
  %190 = vmatpush.msra.mxu0 %v41
  %191 = vmatpush.msra.mxu0 %v38
  %192 = vmatpush.msra.mxu0 %v35
  %193 = vmatmul.f32.gmra.mxu0 %v175
  %v194 = vpop.f32.mrf.mxu0
  %v195 = vadd.f32 %v50, %v194
  %196 = vdwg.mxu0
  %197 = vmatpush.msra.mxu0 0.0
  %198 = vmatpush.msra.mxu0 0.0
  %199 = vmatpush.msra.mxu0 0.0
  %200 = vmatpush.msra.mxu0 0.0
  %201 = vmatpush.msra.mxu0 0.0
  %202 = vmatpush.msra.mxu0 0.0
  %203 = vmatpush.msra.mxu0 0.0
  %204 = vmatpush.msra.mxu0 0.0
  %205 = vmatpush.msra.mxu0 0.0
  %206 = vmatpush.msra.mxu0 0.0
  %207 = vmatpush.msra.mxu0 0.0
  %208 = vmatpush.msra.mxu0 0.0
  %209 = vmatpush.msra.mxu0 %v45
  %210 = vmatpush.msra.mxu0 %v42
  %211 = vmatpush.msra.mxu0 %v39
  %212 = vmatpush.msra.mxu0 %v36
  %213 = vmatmul.f32.gmra.mxu0 %v175
  %v214 = vpop.f32.mrf.mxu0
  %v215 = vadd.f32 %v51, %v214
  %216 = vdwg.mxu0
  %217 = vmatpush.msra.mxu0 0.0
  %218 = vmatpush.msra.mxu0 0.0
  %219 = vmatpush.msra.mxu0 0.0
  %220 = vmatpush.msra.mxu0 0.0
  %221 = vmatpush.msra.mxu0 0.0
  %222 = vmatpush.msra.mxu0 0.0
  %223 = vmatpush.msra.mxu0 0.0
  %224 = vmatpush.msra.mxu0 0.0
  %225 = vmatpush.msra.mxu0 0.0
  %226 = vmatpush.msra.mxu0 0.0
  %227 = vmatpush.msra.mxu0 0.0
  %228 = vmatpush.msra.mxu0 0.0
  %229 = vmatpush.msra.mxu0 %v46
  %230 = vmatpush.msra.mxu0 %v43
  %231 = vmatpush.msra.mxu0 %v40
  %232 = vmatpush.msra.mxu0 %v37
  %233 = vmatmul.f32.gmra.mxu0 %v175
  %v234 = vpop.f32.mrf.mxu0
  %v235 = vadd.f32 %v52, %v234
  %236 = vdwg.mxu0
  %237 = vmatpush.msra.mxu0 0.0
  %238 = vmatpush.msra.mxu0 0.0
  %239 = vmatpush.msra.mxu0 0.0
  %240 = vmatpush.msra.mxu0 0.0
  %241 = vmatpush.msra.mxu0 0.0
  %242 = vmatpush.msra.mxu0 0.0
  %243 = vmatpush.msra.mxu0 0.0
  %244 = vmatpush.msra.mxu0 0.0
  %245 = vmatpush.msra.mxu0 0.0
  %246 = vmatpush.msra.mxu0 0.0
  %247 = vmatpush.msra.mxu0 0.0
  %248 = vmatpush.msra.mxu0 0.0
  %249 = vmatpush.msra.mxu0 %v32
  %250 = vmatpush.msra.mxu0 %v29
  %251 = vmatpush.msra.mxu0 %v26
  %252 = vmatpush.msra.mxu0 %v23
  %253 = vmatmul.f32.gmra.mxu0 %v64
  %v254 = vpop.f32.mrf.mxu0
  %v255 = vadd.f32 0.0, %v254
  %256 = vdwg.mxu0
  %257 = vmatpush.msra.mxu0 0.0
  %258 = vmatpush.msra.mxu0 0.0
  %259 = vmatpush.msra.mxu0 0.0
  %260 = vmatpush.msra.mxu0 0.0
  %261 = vmatpush.msra.mxu0 0.0
  %262 = vmatpush.msra.mxu0 0.0
  %263 = vmatpush.msra.mxu0 0.0
  %264 = vmatpush.msra.mxu0 0.0
  %265 = vmatpush.msra.mxu0 0.0
  %266 = vmatpush.msra.mxu0 0.0
  %267 = vmatpush.msra.mxu0 0.0
  %268 = vmatpush.msra.mxu0 0.0
  %269 = vmatpush.msra.mxu0 %v33
  %270 = vmatpush.msra.mxu0 %v30
  %271 = vmatpush.msra.mxu0 %v27
  %272 = vmatpush.msra.mxu0 %v24
  %273 = vmatmul.f32.gmra.mxu0 %v64
  %v274 = vpop.f32.mrf.mxu0
  %v275 = vadd.f32 0.0, %v274
  %276 = vdwg.mxu0
  %277 = vmatpush.msra.mxu0 0.0
  %278 = vmatpush.msra.mxu0 0.0
  %279 = vmatpush.msra.mxu0 0.0
  %280 = vmatpush.msra.mxu0 0.0
  %281 = vmatpush.msra.mxu0 0.0
  %282 = vmatpush.msra.mxu0 0.0
  %283 = vmatpush.msra.mxu0 0.0
  %284 = vmatpush.msra.mxu0 0.0
  %285 = vmatpush.msra.mxu0 0.0
  %286 = vmatpush.msra.mxu0 0.0
  %287 = vmatpush.msra.mxu0 0.0
  %288 = vmatpush.msra.mxu0 0.0
  %289 = vmatpush.msra.mxu0 %v34
  %290 = vmatpush.msra.mxu0 %v31
  %291 = vmatpush.msra.mxu0 %v28
  %292 = vmatpush.msra.mxu0 %v25
  %293 = vmatmul.f32.gmra.mxu0 %v64
  %v294 = vpop.f32.mrf.mxu0
  %v295 = vadd.f32 0.0, %v294
  %296 = vdwg.mxu0
  %v297 = vadd.f32 %v195, %v255
  %v298 = vadd.f32 %v215, %v275
  %v299 = vxor.u32 %v297, 2147483648
  %v300 = vxor.u32 %v298, 2147483648
  %v301 = vmul.f32 %v299, 1.442695
  %v302 = vpow.pop %v301
  %v303 = vmul.f32 %v300, 1.442695
  %v304 = vpow.pop %v303
  %v305 = vadd.f32 %v302, 1.0
  %v306 = vadd.f32 %v304, 1.0
  %v307 = vrcp.pop %v305
  %v308 = vmul.f32 %v305, %v307
  %v309 = vsub.f32 1.0, %v308
  %v310 = vmul.f32 %v307, %v309
  %v311 = vadd.f32 %v307, %v310
  %vm312 = vweird.f32 %v305
  %vm313 = vweird.f32 %v307
  %vm314 = vmor %vm312, %vm313
  %v315 = vsel %vm314, %v307, %v311
  %v316 = vand.u32 2147483647, %v305
  %vm317 = vcmp.eq.f32.partialorder %v316, 8.507059e+37
  %v318 = vand.u32 %v305, 2147483648
  %v319 = vor.u32 1.1754944e-38, %v318
  %v320 = vsel %vm317, %v319, %v315
  %v321 = vmul.f32 1.0, %v320
  %v322 = vrcp.pop %v306
  %v323 = vmul.f32 %v306, %v322
  %v324 = vsub.f32 1.0, %v323
  %v325 = vmul.f32 %v322, %v324
  %v326 = vadd.f32 %v322, %v325
  %vm327 = vweird.f32 %v306
  %vm328 = vweird.f32 %v322
  %vm329 = vmor %vm327, %vm328
  %v330 = vsel %vm329, %v322, %v326
  %v331 = vand.u32 2147483647, %v306
  %vm332 = vcmp.eq.f32.partialorder %v331, 8.507059e+37
  %v333 = vand.u32 %v306, 2147483648
  %v334 = vor.u32 1.1754944e-38, %v333
  %v335 = vsel %vm332, %v334, %v330
  %v336 = vmul.f32 1.0, %v335
  %v337 = vadd.f32 %v295, %v57
  %v338 = vmul.f32 %v321, %v337
  %v339 = vadd.f32 %v235, %v338
  %v340 = vtanh.pop %v339
  %v341 = vsub.f32 1.0, %v336
  %v342 = vmul.f32 %v341, %v340
  %v343 = vmul.f32 %v336, 0.0
  %v344 = vadd.f32 %v342, %v343
  %v345 = vmul.f32 %v61, %v344
  %v346 = vadd.f32 %v345, 0.0
  %v347 = vld [vmem:[%s0 + $0x20] sm:$0xff]
  %v348 = vld [vmem:[%s0 + $0x28] sm:$0xff]
  %v349 = vld [vmem:[%s0 + $0x30] sm:$0xff]
  %v350 = vld [vmem:[%s0 + $0x38] sm:$0xff]
  %351 = vmatpush.msra.mxu0 0.0
  %352 = vmatpush.msra.mxu0 0.0
  %353 = vmatpush.msra.mxu0 0.0
  %354 = vmatpush.msra.mxu0 0.0
  %355 = vmatpush.msra.mxu0 0.0
  %356 = vmatpush.msra.mxu0 0.0
  %357 = vmatpush.msra.mxu0 0.0
  %358 = vmatpush.msra.mxu0 0.0
  %359 = vmatpush.msra.mxu0 0.0
  %360 = vmatpush.msra.mxu0 0.0
  %361 = vmatpush.msra.mxu0 0.0
  %362 = vmatpush.msra.mxu0 0.0
  %363 = vmatpush.msra.mxu0 %v20
  %364 = vmatpush.msra.mxu0 %v17
  %365 = vmatpush.msra.mxu0 %v14
  %366 = vmatpush.msra.mxu0 %v11
  %367 = vmatmul.f32.gmra.mxu0 %v175
  %v368 = vpop.f32.mrf.mxu0
  %v369 = vadd.f32 0.0, %v368
  %370 = vdwg.mxu0
  %371 = vmatpush.msra.mxu0 0.0
  %372 = vmatpush.msra.mxu0 0.0
  %373 = vmatpush.msra.mxu0 0.0
  %374 = vmatpush.msra.mxu0 0.0
  %375 = vmatpush.msra.mxu0 0.0
  %376 = vmatpush.msra.mxu0 0.0
  %377 = vmatpush.msra.mxu0 0.0
  %378 = vmatpush.msra.mxu0 0.0
  %379 = vmatpush.msra.mxu0 0.0
  %380 = vmatpush.msra.mxu0 0.0
  %381 = vmatpush.msra.mxu0 0.0
  %382 = vmatpush.msra.mxu0 0.0
  %383 = vmatpush.msra.mxu0 %v21
  %384 = vmatpush.msra.mxu0 %v18
  %385 = vmatpush.msra.mxu0 %v15
  %386 = vmatpush.msra.mxu0 %v12
  %387 = vmatmul.f32.gmra.mxu0 %v175
  %v388 = vpop.f32.mrf.mxu0
  %v389 = vadd.f32 0.0, %v388
  %390 = vdwg.mxu0
  %391 = vmatpush.msra.mxu0 0.0
  %392 = vmatpush.msra.mxu0 0.0
  %393 = vmatpush.msra.mxu0 0.0
  %394 = vmatpush.msra.mxu0 0.0
  %395 = vmatpush.msra.mxu0 0.0
  %396 = vmatpush.msra.mxu0 0.0
  %397 = vmatpush.msra.mxu0 0.0
  %398 = vmatpush.msra.mxu0 0.0
  %399 = vmatpush.msra.mxu0 0.0
  %400 = vmatpush.msra.mxu0 0.0
  %401 = vmatpush.msra.mxu0 0.0
  %402 = vmatpush.msra.mxu0 0.0
  %403 = vmatpush.msra.mxu0 %v22
  %404 = vmatpush.msra.mxu0 %v19
  %405 = vmatpush.msra.mxu0 %v16
  %406 = vmatpush.msra.mxu0 %v13
  %407 = vmatmul.f32.gmra.mxu0 %v175
  %v408 = vpop.f32.mrf.mxu0
  %v409 = vadd.f32 0.0, %v408
  %410 = vdwg.mxu0
  %v411 = vadd.f32 %v347, %v369
  %v412 = vadd.f32 %v348, %v389
  %v413 = vxor.u32 %v411, 2147483648
  %v414 = vxor.u32 %v412, 2147483648
  %v415 = vmul.f32 %v413, 1.442695
  %v416 = vpow.pop %v415
  %v417 = vmul.f32 %v414, 1.442695
  %v418 = vpow.pop %v417
  %v419 = vadd.f32 %v416, 1.0
  %v420 = vadd.f32 %v418, 1.0
  %v421 = vrcp.pop %v419
  %v422 = vmul.f32 %v419, %v421
  %v423 = vsub.f32 1.0, %v422
  %v424 = vmul.f32 %v421, %v423
  %v425 = vadd.f32 %v421, %v424
  %vm426 = vweird.f32 %v419
  %vm427 = vweird.f32 %v421
  %vm428 = vmor %vm426, %vm427
  %v429 = vsel %vm428, %v421, %v425
  %v430 = vand.u32 2147483647, %v419
  %vm431 = vcmp.eq.f32.partialorder %v430, 8.507059e+37
  %v432 = vand.u32 %v419, 2147483648
  %v433 = vor.u32 1.1754944e-38, %v432
  %v434 = vsel %vm431, %v433, %v429
  %v435 = vmul.f32 1.0, %v434
  %v436 = vrcp.pop %v420
  %v437 = vmul.f32 %v420, %v436
  %v438 = vsub.f32 1.0, %v437
  %v439 = vmul.f32 %v436, %v438
  %v440 = vadd.f32 %v436, %v439
  %vm441 = vweird.f32 %v420
  %vm442 = vweird.f32 %v436
  %vm443 = vmor %vm441, %vm442
  %v444 = vsel %vm443, %v436, %v440
  %v445 = vand.u32 2147483647, %v420
  %vm446 = vcmp.eq.f32.partialorder %v445, 8.507059e+37
  %v447 = vand.u32 %v420, 2147483648
  %v448 = vor.u32 1.1754944e-38, %v447
  %v449 = vsel %vm446, %v448, %v444
  %v450 = vmul.f32 1.0, %v449
  %v451 = vadd.f32 %v409, %v56
  %v452 = vmul.f32 %v435, %v451
  %v453 = vadd.f32 %v349, %v452
  %v454 = vtanh.pop %v453
  %v455 = vsub.f32 1.0, %v450
  %v456 = vmul.f32 %v455, %v454
  %v457 = vmul.f32 %v450, %v173
  %v458 = vadd.f32 %v456, %v457
  %v460 = vsel %vm62, %v458, 0
  %462 = vmatpush.msra.mxu0 0.0
  %463 = vmatpush.msra.mxu0 0.0
  %464 = vmatpush.msra.mxu0 0.0
  %465 = vmatpush.msra.mxu0 0.0
  %466 = vmatpush.msra.mxu0 0.0
  %467 = vmatpush.msra.mxu0 0.0
  %468 = vmatpush.msra.mxu0 0.0
  %469 = vmatpush.msra.mxu0 0.0
  %470 = vmatpush.msra.mxu0 0.0
  %471 = vmatpush.msra.mxu0 0.0
  %472 = vmatpush.msra.mxu0 0.0
  %473 = vmatpush.msra.mxu0 0.0
  %474 = vmatpush.msra.mxu0 %v44
  %475 = vmatpush.msra.mxu0 %v41
  %476 = vmatpush.msra.mxu0 %v38
  %477 = vmatpush.msra.mxu0 %v35
  %478 = vmatmul.f32.gmra.mxu0 %v460
  %v479 = vpop.f32.mrf.mxu0
  %v480 = vadd.f32 %v50, %v479
  %481 = vdwg.mxu0
  %482 = vmatpush.msra.mxu0 0.0
  %483 = vmatpush.msra.mxu0 0.0
  %484 = vmatpush.msra.mxu0 0.0
  %485 = vmatpush.msra.mxu0 0.0
  %486 = vmatpush.msra.mxu0 0.0
  %487 = vmatpush.msra.mxu0 0.0
  %488 = vmatpush.msra.mxu0 0.0
  %489 = vmatpush.msra.mxu0 0.0
  %490 = vmatpush.msra.mxu0 0.0
  %491 = vmatpush.msra.mxu0 0.0
  %492 = vmatpush.msra.mxu0 0.0
  %493 = vmatpush.msra.mxu0 0.0
  %494 = vmatpush.msra.mxu0 %v45
  %495 = vmatpush.msra.mxu0 %v42
  %496 = vmatpush.msra.mxu0 %v39
  %497 = vmatpush.msra.mxu0 %v36
  %498 = vmatmul.f32.gmra.mxu0 %v460
  %v499 = vpop.f32.mrf.mxu0
  %v500 = vadd.f32 %v51, %v499
  %501 = vdwg.mxu0
  %502 = vmatpush.msra.mxu0 0.0
  %503 = vmatpush.msra.mxu0 0.0
  %504 = vmatpush.msra.mxu0 0.0
  %505 = vmatpush.msra.mxu0 0.0
  %506 = vmatpush.msra.mxu0 0.0
  %507 = vmatpush.msra.mxu0 0.0
  %508 = vmatpush.msra.mxu0 0.0
  %509 = vmatpush.msra.mxu0 0.0
  %510 = vmatpush.msra.mxu0 0.0
  %511 = vmatpush.msra.mxu0 0.0
  %512 = vmatpush.msra.mxu0 0.0
  %513 = vmatpush.msra.mxu0 0.0
  %514 = vmatpush.msra.mxu0 %v46
  %515 = vmatpush.msra.mxu0 %v43
  %516 = vmatpush.msra.mxu0 %v40
  %517 = vmatpush.msra.mxu0 %v37
  %518 = vmatmul.f32.gmra.mxu0 %v460
  %v519 = vpop.f32.mrf.mxu0
  %v520 = vadd.f32 %v52, %v519
  %521 = vdwg.mxu0
  %v523 = vsel %vm62, %v344, 0
  %525 = vmatpush.msra.mxu0 0.0
  %526 = vmatpush.msra.mxu0 0.0
  %527 = vmatpush.msra.mxu0 0.0
  %528 = vmatpush.msra.mxu0 0.0
  %529 = vmatpush.msra.mxu0 0.0
  %530 = vmatpush.msra.mxu0 0.0
  %531 = vmatpush.msra.mxu0 0.0
  %532 = vmatpush.msra.mxu0 0.0
  %533 = vmatpush.msra.mxu0 0.0
  %534 = vmatpush.msra.mxu0 0.0
  %535 = vmatpush.msra.mxu0 0.0
  %536 = vmatpush.msra.mxu0 0.0
  %537 = vmatpush.msra.mxu0 %v32
  %538 = vmatpush.msra.mxu0 %v29
  %539 = vmatpush.msra.mxu0 %v26
  %540 = vmatpush.msra.mxu0 %v23
  %541 = vmatmul.f32.gmra.mxu0 %v523
  %v542 = vpop.f32.mrf.mxu0
  %v543 = vadd.f32 0.0, %v542
  %544 = vdwg.mxu0
  %545 = vmatpush.msra.mxu0 0.0
  %546 = vmatpush.msra.mxu0 0.0
  %547 = vmatpush.msra.mxu0 0.0
  %548 = vmatpush.msra.mxu0 0.0
  %549 = vmatpush.msra.mxu0 0.0
  %550 = vmatpush.msra.mxu0 0.0
  %551 = vmatpush.msra.mxu0 0.0
  %552 = vmatpush.msra.mxu0 0.0
  %553 = vmatpush.msra.mxu0 0.0
  %554 = vmatpush.msra.mxu0 0.0
  %555 = vmatpush.msra.mxu0 0.0
  %556 = vmatpush.msra.mxu0 0.0
  %557 = vmatpush.msra.mxu0 %v33
  %558 = vmatpush.msra.mxu0 %v30
  %559 = vmatpush.msra.mxu0 %v27
  %560 = vmatpush.msra.mxu0 %v24
  %561 = vmatmul.f32.gmra.mxu0 %v523
  %v562 = vpop.f32.mrf.mxu0
  %v563 = vadd.f32 0.0, %v562
  %564 = vdwg.mxu0
  %565 = vmatpush.msra.mxu0 0.0
  %566 = vmatpush.msra.mxu0 0.0
  %567 = vmatpush.msra.mxu0 0.0
  %568 = vmatpush.msra.mxu0 0.0
  %569 = vmatpush.msra.mxu0 0.0
  %570 = vmatpush.msra.mxu0 0.0
  %571 = vmatpush.msra.mxu0 0.0
  %572 = vmatpush.msra.mxu0 0.0
  %573 = vmatpush.msra.mxu0 0.0
  %574 = vmatpush.msra.mxu0 0.0
  %575 = vmatpush.msra.mxu0 0.0
  %576 = vmatpush.msra.mxu0 0.0
  %577 = vmatpush.msra.mxu0 %v34
  %578 = vmatpush.msra.mxu0 %v31
  %579 = vmatpush.msra.mxu0 %v28
  %580 = vmatpush.msra.mxu0 %v25
  %581 = vmatmul.f32.gmra.mxu0 %v523
  %v582 = vpop.f32.mrf.mxu0
  %v583 = vadd.f32 0.0, %v582
  %584 = vdwg.mxu0
  %v585 = vadd.f32 %v480, %v543
  %v586 = vadd.f32 %v500, %v563
  %v587 = vxor.u32 %v585, 2147483648
  %v588 = vxor.u32 %v586, 2147483648
  %v589 = vmul.f32 %v587, 1.442695
  %v590 = vpow.pop %v589
  %v591 = vmul.f32 %v588, 1.442695
  %v592 = vpow.pop %v591
  %v593 = vadd.f32 %v590, 1.0
  %v594 = vadd.f32 %v592, 1.0
  %v595 = vrcp.pop %v593
  %v596 = vmul.f32 %v593, %v595
  %v597 = vsub.f32 1.0, %v596
  %v598 = vmul.f32 %v595, %v597
  %v599 = vadd.f32 %v595, %v598
  %vm600 = vweird.f32 %v593
  %vm601 = vweird.f32 %v595
  %vm602 = vmor %vm600, %vm601
  %v603 = vsel %vm602, %v595, %v599
  %v604 = vand.u32 2147483647, %v593
  %vm605 = vcmp.eq.f32.partialorder %v604, 8.507059e+37
  %v606 = vand.u32 %v593, 2147483648
  %v607 = vor.u32 1.1754944e-38, %v606
  %v608 = vsel %vm605, %v607, %v603
  %v609 = vmul.f32 1.0, %v608
  %v610 = vrcp.pop %v594
  %v611 = vmul.f32 %v594, %v610
  %v612 = vsub.f32 1.0, %v611
  %v613 = vmul.f32 %v610, %v612
  %v614 = vadd.f32 %v610, %v613
  %vm615 = vweird.f32 %v594
  %vm616 = vweird.f32 %v610
  %vm617 = vmor %vm615, %vm616
  %v618 = vsel %vm617, %v610, %v614
  %v619 = vand.u32 2147483647, %v594
  %vm620 = vcmp.eq.f32.partialorder %v619, 8.507059e+37
  %v621 = vand.u32 %v594, 2147483648
  %v622 = vor.u32 1.1754944e-38, %v621
  %v623 = vsel %vm620, %v622, %v618
  %v624 = vmul.f32 1.0, %v623
  %v625 = vadd.f32 %v583, %v57
  %v626 = vmul.f32 %v609, %v625
  %v627 = vadd.f32 %v520, %v626
  %v628 = vtanh.pop %v627
  %v629 = vsub.f32 1.0, %v624
  %v630 = vmul.f32 %v629, %v628
  %v631 = vmul.f32 %v624, %v344
  %v632 = vadd.f32 %v630, %v631
  %v633 = vmul.f32 %v350, %v632
  %v634 = vadd.f32 %v346, %v633
  %v635 = vld [vmem:[%s0 + $0x40] sm:$0xff]
  %v636 = vld [vmem:[%s0 + $0x48] sm:$0xff]
  %v637 = vld [vmem:[%s0 + $0x50] sm:$0xff]
  %v638 = vld [vmem:[%s0 + $0x58] sm:$0xff]
  %639 = vmatpush.msra.mxu0 0.0
  %640 = vmatpush.msra.mxu0 0.0
  %641 = vmatpush.msra.mxu0 0.0
  %642 = vmatpush.msra.mxu0 0.0
  %643 = vmatpush.msra.mxu0 0.0
  %644 = vmatpush.msra.mxu0 0.0
  %645 = vmatpush.msra.mxu0 0.0
  %646 = vmatpush.msra.mxu0 0.0
  %647 = vmatpush.msra.mxu0 0.0
  %648 = vmatpush.msra.mxu0 0.0
  %649 = vmatpush.msra.mxu0 0.0
  %650 = vmatpush.msra.mxu0 0.0
  %651 = vmatpush.msra.mxu0 %v20
  %652 = vmatpush.msra.mxu0 %v17
  %653 = vmatpush.msra.mxu0 %v14
  %654 = vmatpush.msra.mxu0 %v11
  %655 = vmatmul.f32.gmra.mxu0 %v460
  %v656 = vpop.f32.mrf.mxu0
  %v657 = vadd.f32 0.0, %v656
  %658 = vdwg.mxu0
  %659 = vmatpush.msra.mxu0 0.0
  %660 = vmatpush.msra.mxu0 0.0
  %661 = vmatpush.msra.mxu0 0.0
  %662 = vmatpush.msra.mxu0 0.0
  %663 = vmatpush.msra.mxu0 0.0
  %664 = vmatpush.msra.mxu0 0.0
  %665 = vmatpush.msra.mxu0 0.0
  %666 = vmatpush.msra.mxu0 0.0
  %667 = vmatpush.msra.mxu0 0.0
  %668 = vmatpush.msra.mxu0 0.0
  %669 = vmatpush.msra.mxu0 0.0
  %670 = vmatpush.msra.mxu0 0.0
  %671 = vmatpush.msra.mxu0 %v21
  %672 = vmatpush.msra.mxu0 %v18
  %673 = vmatpush.msra.mxu0 %v15
  %674 = vmatpush.msra.mxu0 %v12
  %675 = vmatmul.f32.gmra.mxu0 %v460
  %v676 = vpop.f32.mrf.mxu0
  %v677 = vadd.f32 0.0, %v676
  %678 = vdwg.mxu0
  %679 = vmatpush.msra.mxu0 0.0
  %680 = vmatpush.msra.mxu0 0.0
  %681 = vmatpush.msra.mxu0 0.0
  %682 = vmatpush.msra.mxu0 0.0
  %683 = vmatpush.msra.mxu0 0.0
  %684 = vmatpush.msra.mxu0 0.0
  %685 = vmatpush.msra.mxu0 0.0
  %686 = vmatpush.msra.mxu0 0.0
  %687 = vmatpush.msra.mxu0 0.0
  %688 = vmatpush.msra.mxu0 0.0
  %689 = vmatpush.msra.mxu0 0.0
  %690 = vmatpush.msra.mxu0 0.0
  %691 = vmatpush.msra.mxu0 %v22
  %692 = vmatpush.msra.mxu0 %v19
  %693 = vmatpush.msra.mxu0 %v16
  %694 = vmatpush.msra.mxu0 %v13
  %695 = vmatmul.f32.gmra.mxu0 %v460
  %v696 = vpop.f32.mrf.mxu0
  %v697 = vadd.f32 0.0, %v696
  %698 = vdwg.mxu0
  %v699 = vadd.f32 %v635, %v657
  %v700 = vadd.f32 %v636, %v677
  %v701 = vxor.u32 %v699, 2147483648
  %v702 = vxor.u32 %v700, 2147483648
  %v703 = vmul.f32 %v701, 1.442695
  %v704 = vpow.pop %v703
  %v705 = vmul.f32 %v702, 1.442695
  %v706 = vpow.pop %v705
  %v707 = vadd.f32 %v704, 1.0
  %v708 = vadd.f32 %v706, 1.0
  %v709 = vrcp.pop %v707
  %v710 = vmul.f32 %v707, %v709
  %v711 = vsub.f32 1.0, %v710
  %v712 = vmul.f32 %v709, %v711
  %v713 = vadd.f32 %v709, %v712
  %vm714 = vweird.f32 %v707
  %vm715 = vweird.f32 %v709
  %vm716 = vmor %vm714, %vm715
  %v717 = vsel %vm716, %v709, %v713
  %v718 = vand.u32 2147483647, %v707
  %vm719 = vcmp.eq.f32.partialorder %v718, 8.507059e+37
  %v720 = vand.u32 %v707, 2147483648
  %v721 = vor.u32 1.1754944e-38, %v720
  %v722 = vsel %vm719, %v721, %v717
  %v723 = vmul.f32 1.0, %v722
  %v724 = vrcp.pop %v708
  %v725 = vmul.f32 %v708, %v724
  %v726 = vsub.f32 1.0, %v725
  %v727 = vmul.f32 %v724, %v726
  %v728 = vadd.f32 %v724, %v727
  %vm729 = vweird.f32 %v708
  %vm730 = vweird.f32 %v724
  %vm731 = vmor %vm729, %vm730
  %v732 = vsel %vm731, %v724, %v728
  %v733 = vand.u32 2147483647, %v708
  %vm734 = vcmp.eq.f32.partialorder %v733, 8.507059e+37
  %v735 = vand.u32 %v708, 2147483648
  %v736 = vor.u32 1.1754944e-38, %v735
  %v737 = vsel %vm734, %v736, %v732
  %v738 = vmul.f32 1.0, %v737
  %v739 = vadd.f32 %v697, %v56
  %v740 = vmul.f32 %v723, %v739
  %v741 = vadd.f32 %v637, %v740
  %v742 = vtanh.pop %v741
  %v743 = vsub.f32 1.0, %v738
  %v744 = vmul.f32 %v743, %v742
  %v745 = vmul.f32 %v738, %v458
  %v746 = vadd.f32 %v744, %v745
  %v748 = vsel %vm62, %v746, 0
  %750 = vmatpush.msra.mxu0 0.0
  %751 = vmatpush.msra.mxu0 0.0
  %752 = vmatpush.msra.mxu0 0.0
  %753 = vmatpush.msra.mxu0 0.0
  %754 = vmatpush.msra.mxu0 0.0
  %755 = vmatpush.msra.mxu0 0.0
  %756 = vmatpush.msra.mxu0 0.0
  %757 = vmatpush.msra.mxu0 0.0
  %758 = vmatpush.msra.mxu0 0.0
  %759 = vmatpush.msra.mxu0 0.0
  %760 = vmatpush.msra.mxu0 0.0
  %761 = vmatpush.msra.mxu0 0.0
  %762 = vmatpush.msra.mxu0 %v44
  %763 = vmatpush.msra.mxu0 %v41
  %764 = vmatpush.msra.mxu0 %v38
  %765 = vmatpush.msra.mxu0 %v35
  %766 = vmatmul.f32.gmra.mxu0 %v748
  %v767 = vpop.f32.mrf.mxu0
  %v768 = vadd.f32 %v50, %v767
  %769 = vdwg.mxu0
  %770 = vmatpush.msra.mxu0 0.0
  %771 = vmatpush.msra.mxu0 0.0
  %772 = vmatpush.msra.mxu0 0.0
  %773 = vmatpush.msra.mxu0 0.0
  %774 = vmatpush.msra.mxu0 0.0
  %775 = vmatpush.msra.mxu0 0.0
  %776 = vmatpush.msra.mxu0 0.0
  %777 = vmatpush.msra.mxu0 0.0
  %778 = vmatpush.msra.mxu0 0.0
  %779 = vmatpush.msra.mxu0 0.0
  %780 = vmatpush.msra.mxu0 0.0
  %781 = vmatpush.msra.mxu0 0.0
  %782 = vmatpush.msra.mxu0 %v45
  %783 = vmatpush.msra.mxu0 %v42
  %784 = vmatpush.msra.mxu0 %v39
  %785 = vmatpush.msra.mxu0 %v36
  %786 = vmatmul.f32.gmra.mxu0 %v748
  %v787 = vpop.f32.mrf.mxu0
  %v788 = vadd.f32 %v51, %v787
  %789 = vdwg.mxu0
  %790 = vmatpush.msra.mxu0 0.0
  %791 = vmatpush.msra.mxu0 0.0
  %792 = vmatpush.msra.mxu0 0.0
  %793 = vmatpush.msra.mxu0 0.0
  %794 = vmatpush.msra.mxu0 0.0
  %795 = vmatpush.msra.mxu0 0.0
  %796 = vmatpush.msra.mxu0 0.0
  %797 = vmatpush.msra.mxu0 0.0
  %798 = vmatpush.msra.mxu0 0.0
  %799 = vmatpush.msra.mxu0 0.0
  %800 = vmatpush.msra.mxu0 0.0
  %801 = vmatpush.msra.mxu0 0.0
  %802 = vmatpush.msra.mxu0 %v46
  %803 = vmatpush.msra.mxu0 %v43
  %804 = vmatpush.msra.mxu0 %v40
  %805 = vmatpush.msra.mxu0 %v37
  %806 = vmatmul.f32.gmra.mxu0 %v748
  %v807 = vpop.f32.mrf.mxu0
  %v808 = vadd.f32 %v52, %v807
  %809 = vdwg.mxu0
  %v811 = vsel %vm62, %v632, 0
  %813 = vmatpush.msra.mxu0 0.0
  %814 = vmatpush.msra.mxu0 0.0
  %815 = vmatpush.msra.mxu0 0.0
  %816 = vmatpush.msra.mxu0 0.0
  %817 = vmatpush.msra.mxu0 0.0
  %818 = vmatpush.msra.mxu0 0.0
  %819 = vmatpush.msra.mxu0 0.0
  %820 = vmatpush.msra.mxu0 0.0
  %821 = vmatpush.msra.mxu0 0.0
  %822 = vmatpush.msra.mxu0 0.0
  %823 = vmatpush.msra.mxu0 0.0
  %824 = vmatpush.msra.mxu0 0.0
  %825 = vmatpush.msra.mxu0 %v32
  %826 = vmatpush.msra.mxu0 %v29
  %827 = vmatpush.msra.mxu0 %v26
  %828 = vmatpush.msra.mxu0 %v23
  %829 = vmatmul.f32.gmra.mxu0 %v811
  %v830 = vpop.f32.mrf.mxu0
  %v831 = vadd.f32 0.0, %v830
  %832 = vdwg.mxu0
  %833 = vmatpush.msra.mxu0 0.0
  %834 = vmatpush.msra.mxu0 0.0
  %835 = vmatpush.msra.mxu0 0.0
  %836 = vmatpush.msra.mxu0 0.0
  %837 = vmatpush.msra.mxu0 0.0
  %838 = vmatpush.msra.mxu0 0.0
  %839 = vmatpush.msra.mxu0 0.0
  %840 = vmatpush.msra.mxu0 0.0
  %841 = vmatpush.msra.mxu0 0.0
  %842 = vmatpush.msra.mxu0 0.0
  %843 = vmatpush.msra.mxu0 0.0
  %844 = vmatpush.msra.mxu0 0.0
  %845 = vmatpush.msra.mxu0 %v33
  %846 = vmatpush.msra.mxu0 %v30
  %847 = vmatpush.msra.mxu0 %v27
  %848 = vmatpush.msra.mxu0 %v24
  %849 = vmatmul.f32.gmra.mxu0 %v811
  %v850 = vpop.f32.mrf.mxu0
  %v851 = vadd.f32 0.0, %v850
  %852 = vdwg.mxu0
  %853 = vmatpush.msra.mxu0 0.0
  %854 = vmatpush.msra.mxu0 0.0
  %855 = vmatpush.msra.mxu0 0.0
  %856 = vmatpush.msra.mxu0 0.0
  %857 = vmatpush.msra.mxu0 0.0
  %858 = vmatpush.msra.mxu0 0.0
  %859 = vmatpush.msra.mxu0 0.0
  %860 = vmatpush.msra.mxu0 0.0
  %861 = vmatpush.msra.mxu0 0.0
  %862 = vmatpush.msra.mxu0 0.0
  %863 = vmatpush.msra.mxu0 0.0
  %864 = vmatpush.msra.mxu0 0.0
  %865 = vmatpush.msra.mxu0 %v34
  %866 = vmatpush.msra.mxu0 %v31
  %867 = vmatpush.msra.mxu0 %v28
  %868 = vmatpush.msra.mxu0 %v25
  %869 = vmatmul.f32.gmra.mxu0 %v811
  %v870 = vpop.f32.mrf.mxu0
  %v871 = vadd.f32 0.0, %v870
  %872 = vdwg.mxu0
  %v873 = vadd.f32 %v768, %v831
  %v874 = vadd.f32 %v788, %v851
  %v875 = vxor.u32 %v873, 2147483648
  %v876 = vxor.u32 %v874, 2147483648
  %v877 = vmul.f32 %v875, 1.442695
  %v878 = vpow.pop %v877
  %v879 = vmul.f32 %v876, 1.442695
  %v880 = vpow.pop %v879
  %v881 = vadd.f32 %v878, 1.0
  %v882 = vadd.f32 %v880, 1.0
  %v883 = vrcp.pop %v881
  %v884 = vmul.f32 %v881, %v883
  %v885 = vsub.f32 1.0, %v884
  %v886 = vmul.f32 %v883, %v885
  %v887 = vadd.f32 %v883, %v886
  %vm888 = vweird.f32 %v881
  %vm889 = vweird.f32 %v883
  %vm890 = vmor %vm888, %vm889
  %v891 = vsel %vm890, %v883, %v887
  %v892 = vand.u32 2147483647, %v881
  %vm893 = vcmp.eq.f32.partialorder %v892, 8.507059e+37
  %v894 = vand.u32 %v881, 2147483648
  %v895 = vor.u32 1.1754944e-38, %v894
  %v896 = vsel %vm893, %v895, %v891
  %v897 = vmul.f32 1.0, %v896
  %v898 = vrcp.pop %v882
  %v899 = vmul.f32 %v882, %v898
  %v900 = vsub.f32 1.0, %v899
  %v901 = vmul.f32 %v898, %v900
  %v902 = vadd.f32 %v898, %v901
  %vm903 = vweird.f32 %v882
  %vm904 = vweird.f32 %v898
  %vm905 = vmor %vm903, %vm904
  %v906 = vsel %vm905, %v898, %v902
  %v907 = vand.u32 2147483647, %v882
  %vm908 = vcmp.eq.f32.partialorder %v907, 8.507059e+37
  %v909 = vand.u32 %v882, 2147483648
  %v910 = vor.u32 1.1754944e-38, %v909
  %v911 = vsel %vm908, %v910, %v906
  %v912 = vmul.f32 1.0, %v911
  %v913 = vadd.f32 %v871, %v57
  %v914 = vmul.f32 %v897, %v913
  %v915 = vadd.f32 %v808, %v914
  %v916 = vtanh.pop %v915
  %v917 = vsub.f32 1.0, %v912
  %v918 = vmul.f32 %v917, %v916
  %v919 = vmul.f32 %v912, %v632
  %v920 = vadd.f32 %v918, %v919
  %v921 = vmul.f32 %v638, %v920
  %v922 = vadd.f32 %v634, %v921
  %v923 = vld [vmem:[%s0 + $0x60] sm:$0xff]
  %v924 = vld [vmem:[%s0 + $0x68] sm:$0xff]
  %v925 = vld [vmem:[%s0 + $0x70] sm:$0xff]
  %v926 = vld [vmem:[%s0 + $0x78] sm:$0xff]
  %927 = vmatpush.msra.mxu0 0.0
  %928 = vmatpush.msra.mxu0 0.0
  %929 = vmatpush.msra.mxu0 0.0
  %930 = vmatpush.msra.mxu0 0.0
  %931 = vmatpush.msra.mxu0 0.0
  %932 = vmatpush.msra.mxu0 0.0
  %933 = vmatpush.msra.mxu0 0.0
  %934 = vmatpush.msra.mxu0 0.0
  %935 = vmatpush.msra.mxu0 0.0
  %936 = vmatpush.msra.mxu0 0.0
  %937 = vmatpush.msra.mxu0 0.0
  %938 = vmatpush.msra.mxu0 0.0
  %939 = vmatpush.msra.mxu0 %v20
  %940 = vmatpush.msra.mxu0 %v17
  %941 = vmatpush.msra.mxu0 %v14
  %942 = vmatpush.msra.mxu0 %v11
  %943 = vmatmul.f32.gmra.mxu0 %v748
  %v944 = vpop.f32.mrf.mxu0
  %v945 = vadd.f32 0.0, %v944
  %946 = vdwg.mxu0
  %947 = vmatpush.msra.mxu0 0.0
  %948 = vmatpush.msra.mxu0 0.0
  %949 = vmatpush.msra.mxu0 0.0
  %950 = vmatpush.msra.mxu0 0.0
  %951 = vmatpush.msra.mxu0 0.0
  %952 = vmatpush.msra.mxu0 0.0
  %953 = vmatpush.msra.mxu0 0.0
  %954 = vmatpush.msra.mxu0 0.0
  %955 = vmatpush.msra.mxu0 0.0
  %956 = vmatpush.msra.mxu0 0.0
  %957 = vmatpush.msra.mxu0 0.0
  %958 = vmatpush.msra.mxu0 0.0
  %959 = vmatpush.msra.mxu0 %v21
  %960 = vmatpush.msra.mxu0 %v18
  %961 = vmatpush.msra.mxu0 %v15
  %962 = vmatpush.msra.mxu0 %v12
  %963 = vmatmul.f32.gmra.mxu0 %v748
  %v964 = vpop.f32.mrf.mxu0
  %v965 = vadd.f32 0.0, %v964
  %966 = vdwg.mxu0
  %967 = vmatpush.msra.mxu0 0.0
  %968 = vmatpush.msra.mxu0 0.0
  %969 = vmatpush.msra.mxu0 0.0
  %970 = vmatpush.msra.mxu0 0.0
  %971 = vmatpush.msra.mxu0 0.0
  %972 = vmatpush.msra.mxu0 0.0
  %973 = vmatpush.msra.mxu0 0.0
  %974 = vmatpush.msra.mxu0 0.0
  %975 = vmatpush.msra.mxu0 0.0
  %976 = vmatpush.msra.mxu0 0.0
  %977 = vmatpush.msra.mxu0 0.0
  %978 = vmatpush.msra.mxu0 0.0
  %979 = vmatpush.msra.mxu0 %v22
  %980 = vmatpush.msra.mxu0 %v19
  %981 = vmatpush.msra.mxu0 %v16
  %982 = vmatpush.msra.mxu0 %v13
  %983 = vmatmul.f32.gmra.mxu0 %v748
  %v984 = vpop.f32.mrf.mxu0
  %v985 = vadd.f32 0.0, %v984
  %986 = vdwg.mxu0
  %v987 = vadd.f32 %v923, %v945
  %v988 = vadd.f32 %v924, %v965
  %v989 = vxor.u32 %v987, 2147483648
  %v990 = vxor.u32 %v988, 2147483648
  %v991 = vmul.f32 %v989, 1.442695
  %v992 = vpow.pop %v991
  %v993 = vmul.f32 %v990, 1.442695
  %v994 = vpow.pop %v993
  %v995 = vadd.f32 %v992, 1.0
  %v996 = vadd.f32 %v994, 1.0
  %v997 = vrcp.pop %v995
  %v998 = vmul.f32 %v995, %v997
  %v999 = vsub.f32 1.0, %v998
  %v1000 = vmul.f32 %v997, %v999
  %v1001 = vadd.f32 %v997, %v1000
  %vm1002 = vweird.f32 %v995
  %vm1003 = vweird.f32 %v997
  %vm1004 = vmor %vm1002, %vm1003
  %v1005 = vsel %vm1004, %v997, %v1001
  %v1006 = vand.u32 2147483647, %v995
  %vm1007 = vcmp.eq.f32.partialorder %v1006, 8.507059e+37
  %v1008 = vand.u32 %v995, 2147483648
  %v1009 = vor.u32 1.1754944e-38, %v1008
  %v1010 = vsel %vm1007, %v1009, %v1005
  %v1011 = vmul.f32 1.0, %v1010
  %v1012 = vrcp.pop %v996
  %v1013 = vmul.f32 %v996, %v1012
  %v1014 = vsub.f32 1.0, %v1013
  %v1015 = vmul.f32 %v1012, %v1014
  %v1016 = vadd.f32 %v1012, %v1015
  %vm1017 = vweird.f32 %v996
  %vm1018 = vweird.f32 %v1012
  %vm1019 = vmor %vm1017, %vm1018
  %v1020 = vsel %vm1019, %v1012, %v1016
  %v1021 = vand.u32 2147483647, %v996
  %vm1022 = vcmp.eq.f32.partialorder %v1021, 8.507059e+37
  %v1023 = vand.u32 %v996, 2147483648
  %v1024 = vor.u32 1.1754944e-38, %v1023
  %v1025 = vsel %vm1022, %v1024, %v1020
  %v1026 = vmul.f32 1.0, %v1025
  %v1027 = vadd.f32 %v985, %v56
  %v1028 = vmul.f32 %v1011, %v1027
  %v1029 = vadd.f32 %v925, %v1028
  %v1030 = vtanh.pop %v1029
  %v1031 = vsub.f32 1.0, %v1026
  %v1032 = vmul.f32 %v1031, %v1030
  %v1033 = vmul.f32 %v1026, %v746
  %v1034 = vadd.f32 %v1032, %v1033
  %v1036 = vsel %vm62, %v1034, 0
  %1038 = vmatpush.msra.mxu0 0.0
  %1039 = vmatpush.msra.mxu0 0.0
  %1040 = vmatpush.msra.mxu0 0.0
  %1041 = vmatpush.msra.mxu0 0.0
  %1042 = vmatpush.msra.mxu0 0.0
  %1043 = vmatpush.msra.mxu0 0.0
  %1044 = vmatpush.msra.mxu0 0.0
  %1045 = vmatpush.msra.mxu0 0.0
  %1046 = vmatpush.msra.mxu0 0.0
  %1047 = vmatpush.msra.mxu0 0.0
  %1048 = vmatpush.msra.mxu0 0.0
  %1049 = vmatpush.msra.mxu0 0.0
  %1050 = vmatpush.msra.mxu0 %v44
  %1051 = vmatpush.msra.mxu0 %v41
  %1052 = vmatpush.msra.mxu0 %v38
  %1053 = vmatpush.msra.mxu0 %v35
  %1054 = vmatmul.f32.gmra.mxu0 %v1036
  %v1055 = vpop.f32.mrf.mxu0
  %v1056 = vadd.f32 %v50, %v1055
  %1057 = vdwg.mxu0
  %1058 = vmatpush.msra.mxu0 0.0
  %1059 = vmatpush.msra.mxu0 0.0
  %1060 = vmatpush.msra.mxu0 0.0
  %1061 = vmatpush.msra.mxu0 0.0
  %1062 = vmatpush.msra.mxu0 0.0
  %1063 = vmatpush.msra.mxu0 0.0
  %1064 = vmatpush.msra.mxu0 0.0
  %1065 = vmatpush.msra.mxu0 0.0
  %1066 = vmatpush.msra.mxu0 0.0
  %1067 = vmatpush.msra.mxu0 0.0
  %1068 = vmatpush.msra.mxu0 0.0
  %1069 = vmatpush.msra.mxu0 0.0
  %1070 = vmatpush.msra.mxu0 %v45
  %1071 = vmatpush.msra.mxu0 %v42
  %1072 = vmatpush.msra.mxu0 %v39
  %1073 = vmatpush.msra.mxu0 %v36
  %1074 = vmatmul.f32.gmra.mxu0 %v1036
  %v1075 = vpop.f32.mrf.mxu0
  %v1076 = vadd.f32 %v51, %v1075
  %1077 = vdwg.mxu0
  %1078 = vmatpush.msra.mxu0 0.0
  %1079 = vmatpush.msra.mxu0 0.0
  %1080 = vmatpush.msra.mxu0 0.0
  %1081 = vmatpush.msra.mxu0 0.0
  %1082 = vmatpush.msra.mxu0 0.0
  %1083 = vmatpush.msra.mxu0 0.0
  %1084 = vmatpush.msra.mxu0 0.0
  %1085 = vmatpush.msra.mxu0 0.0
  %1086 = vmatpush.msra.mxu0 0.0
  %1087 = vmatpush.msra.mxu0 0.0
  %1088 = vmatpush.msra.mxu0 0.0
  %1089 = vmatpush.msra.mxu0 0.0
  %1090 = vmatpush.msra.mxu0 %v46
  %1091 = vmatpush.msra.mxu0 %v43
  %1092 = vmatpush.msra.mxu0 %v40
  %1093 = vmatpush.msra.mxu0 %v37
  %1094 = vmatmul.f32.gmra.mxu0 %v1036
  %v1095 = vpop.f32.mrf.mxu0
  %v1096 = vadd.f32 %v52, %v1095
  %1097 = vdwg.mxu0
  %v1099 = vsel %vm62, %v920, 0
  %1101 = vmatpush.msra.mxu0 0.0
  %1102 = vmatpush.msra.mxu0 0.0
  %1103 = vmatpush.msra.mxu0 0.0
  %1104 = vmatpush.msra.mxu0 0.0
  %1105 = vmatpush.msra.mxu0 0.0
  %1106 = vmatpush.msra.mxu0 0.0
  %1107 = vmatpush.msra.mxu0 0.0
  %1108 = vmatpush.msra.mxu0 0.0
  %1109 = vmatpush.msra.mxu0 0.0
  %1110 = vmatpush.msra.mxu0 0.0
  %1111 = vmatpush.msra.mxu0 0.0
  %1112 = vmatpush.msra.mxu0 0.0
  %1113 = vmatpush.msra.mxu0 %v32
  %1114 = vmatpush.msra.mxu0 %v29
  %1115 = vmatpush.msra.mxu0 %v26
  %1116 = vmatpush.msra.mxu0 %v23
  %1117 = vmatmul.f32.gmra.mxu0 %v1099
  %v1118 = vpop.f32.mrf.mxu0
  %v1119 = vadd.f32 0.0, %v1118
  %1120 = vdwg.mxu0
  %1121 = vmatpush.msra.mxu0 0.0
  %1122 = vmatpush.msra.mxu0 0.0
  %1123 = vmatpush.msra.mxu0 0.0
  %1124 = vmatpush.msra.mxu0 0.0
  %1125 = vmatpush.msra.mxu0 0.0
  %1126 = vmatpush.msra.mxu0 0.0
  %1127 = vmatpush.msra.mxu0 0.0
  %1128 = vmatpush.msra.mxu0 0.0
  %1129 = vmatpush.msra.mxu0 0.0
  %1130 = vmatpush.msra.mxu0 0.0
  %1131 = vmatpush.msra.mxu0 0.0
  %1132 = vmatpush.msra.mxu0 0.0
  %1133 = vmatpush.msra.mxu0 %v33
  %1134 = vmatpush.msra.mxu0 %v30
  %1135 = vmatpush.msra.mxu0 %v27
  %1136 = vmatpush.msra.mxu0 %v24
  %1137 = vmatmul.f32.gmra.mxu0 %v1099
  %v1138 = vpop.f32.mrf.mxu0
  %v1139 = vadd.f32 0.0, %v1138
  %1140 = vdwg.mxu0
  %1141 = vmatpush.msra.mxu0 0.0
  %1142 = vmatpush.msra.mxu0 0.0
  %1143 = vmatpush.msra.mxu0 0.0
  %1144 = vmatpush.msra.mxu0 0.0
  %1145 = vmatpush.msra.mxu0 0.0
  %1146 = vmatpush.msra.mxu0 0.0
  %1147 = vmatpush.msra.mxu0 0.0
  %1148 = vmatpush.msra.mxu0 0.0
  %1149 = vmatpush.msra.mxu0 0.0
  %1150 = vmatpush.msra.mxu0 0.0
  %1151 = vmatpush.msra.mxu0 0.0
  %1152 = vmatpush.msra.mxu0 0.0
  %1153 = vmatpush.msra.mxu0 %v34
  %1154 = vmatpush.msra.mxu0 %v31
  %1155 = vmatpush.msra.mxu0 %v28
  %1156 = vmatpush.msra.mxu0 %v25
  %1157 = vmatmul.f32.gmra.mxu0 %v1099
  %v1158 = vpop.f32.mrf.mxu0
  %v1159 = vadd.f32 0.0, %v1158
  %1160 = vdwg.mxu0
  %v1161 = vadd.f32 %v1056, %v1119
  %v1162 = vadd.f32 %v1076, %v1139
  %v1163 = vxor.u32 %v1161, 2147483648
  %v1164 = vxor.u32 %v1162, 2147483648
  %v1165 = vmul.f32 %v1163, 1.442695
  %v1166 = vpow.pop %v1165
  %v1167 = vmul.f32 %v1164, 1.442695
  %v1168 = vpow.pop %v1167
  %v1169 = vadd.f32 %v1166, 1.0
  %v1170 = vadd.f32 %v1168, 1.0
  %v1171 = vrcp.pop %v1169
  %v1172 = vmul.f32 %v1169, %v1171
  %v1173 = vsub.f32 1.0, %v1172
  %v1174 = vmul.f32 %v1171, %v1173
  %v1175 = vadd.f32 %v1171, %v1174
  %vm1176 = vweird.f32 %v1169
  %vm1177 = vweird.f32 %v1171
  %vm1178 = vmor %vm1176, %vm1177
  %v1179 = vsel %vm1178, %v1171, %v1175
  %v1180 = vand.u32 2147483647, %v1169
  %vm1181 = vcmp.eq.f32.partialorder %v1180, 8.507059e+37
  %v1182 = vand.u32 %v1169, 2147483648
  %v1183 = vor.u32 1.1754944e-38, %v1182
  %v1184 = vsel %vm1181, %v1183, %v1179
  %v1185 = vmul.f32 1.0, %v1184
  %v1186 = vrcp.pop %v1170
  %v1187 = vmul.f32 %v1170, %v1186
  %v1188 = vsub.f32 1.0, %v1187
  %v1189 = vmul.f32 %v1186, %v1188
  %v1190 = vadd.f32 %v1186, %v1189
  %vm1191 = vweird.f32 %v1170
  %vm1192 = vweird.f32 %v1186
  %vm1193 = vmor %vm1191, %vm1192
  %v1194 = vsel %vm1193, %v1186, %v1190
  %v1195 = vand.u32 2147483647, %v1170
  %vm1196 = vcmp.eq.f32.partialorder %v1195, 8.507059e+37
  %v1197 = vand.u32 %v1170, 2147483648
  %v1198 = vor.u32 1.1754944e-38, %v1197
  %v1199 = vsel %vm1196, %v1198, %v1194
  %v1200 = vmul.f32 1.0, %v1199
  %v1201 = vadd.f32 %v1159, %v57
  %v1202 = vmul.f32 %v1185, %v1201
  %v1203 = vadd.f32 %v1096, %v1202
  %v1204 = vtanh.pop %v1203
  %v1205 = vsub.f32 1.0, %v1200
  %v1206 = vmul.f32 %v1205, %v1204
  %v1207 = vmul.f32 %v1200, %v920
  %v1208 = vadd.f32 %v1206, %v1207
  %v1209 = vmul.f32 %v926, %v1208
  %v1210 = vadd.f32 %v922, %v1209
  %v1211 = vld [vmem:[%s0 + $0x80] sm:$0xff]
  %v1212 = vld [vmem:[%s0 + $0x88] sm:$0xff]
  %v1213 = vld [vmem:[%s0 + $0x90] sm:$0xff]
  %v1214 = vld [vmem:[%s0 + $0x98] sm:$0xff]
  %1215 = vmatpush.msra.mxu0 0.0
  %1216 = vmatpush.msra.mxu0 0.0
  %1217 = vmatpush.msra.mxu0 0.0
  %1218 = vmatpush.msra.mxu0 0.0
  %1219 = vmatpush.msra.mxu0 0.0
  %1220 = vmatpush.msra.mxu0 0.0
  %1221 = vmatpush.msra.mxu0 0.0
  %1222 = vmatpush.msra.mxu0 0.0
  %1223 = vmatpush.msra.mxu0 0.0
  %1224 = vmatpush.msra.mxu0 0.0
  %1225 = vmatpush.msra.mxu0 0.0
  %1226 = vmatpush.msra.mxu0 0.0
  %1227 = vmatpush.msra.mxu0 %v20
  %1228 = vmatpush.msra.mxu0 %v17
  %1229 = vmatpush.msra.mxu0 %v14
  %1230 = vmatpush.msra.mxu0 %v11
  %1231 = vmatmul.f32.gmra.mxu0 %v1036
  %v1232 = vpop.f32.mrf.mxu0
  %v1233 = vadd.f32 0.0, %v1232
  %1234 = vdwg.mxu0
  %1235 = vmatpush.msra.mxu0 0.0
  %1236 = vmatpush.msra.mxu0 0.0
  %1237 = vmatpush.msra.mxu0 0.0
  %1238 = vmatpush.msra.mxu0 0.0
  %1239 = vmatpush.msra.mxu0 0.0
  %1240 = vmatpush.msra.mxu0 0.0
  %1241 = vmatpush.msra.mxu0 0.0
  %1242 = vmatpush.msra.mxu0 0.0
  %1243 = vmatpush.msra.mxu0 0.0
  %1244 = vmatpush.msra.mxu0 0.0
  %1245 = vmatpush.msra.mxu0 0.0
  %1246 = vmatpush.msra.mxu0 0.0
  %1247 = vmatpush.msra.mxu0 %v21
  %1248 = vmatpush.msra.mxu0 %v18
  %1249 = vmatpush.msra.mxu0 %v15
  %1250 = vmatpush.msra.mxu0 %v12
  %1251 = vmatmul.f32.gmra.mxu0 %v1036
  %v1252 = vpop.f32.mrf.mxu0
  %v1253 = vadd.f32 0.0, %v1252
  %1254 = vdwg.mxu0
  %1255 = vmatpush.msra.mxu0 0.0
  %1256 = vmatpush.msra.mxu0 0.0
  %1257 = vmatpush.msra.mxu0 0.0
  %1258 = vmatpush.msra.mxu0 0.0
  %1259 = vmatpush.msra.mxu0 0.0
  %1260 = vmatpush.msra.mxu0 0.0
  %1261 = vmatpush.msra.mxu0 0.0
  %1262 = vmatpush.msra.mxu0 0.0
  %1263 = vmatpush.msra.mxu0 0.0
  %1264 = vmatpush.msra.mxu0 0.0
  %1265 = vmatpush.msra.mxu0 0.0
  %1266 = vmatpush.msra.mxu0 0.0
  %1267 = vmatpush.msra.mxu0 %v22
  %1268 = vmatpush.msra.mxu0 %v19
  %1269 = vmatpush.msra.mxu0 %v16
  %1270 = vmatpush.msra.mxu0 %v13
  %1271 = vmatmul.f32.gmra.mxu0 %v1036
  %v1272 = vpop.f32.mrf.mxu0
  %v1273 = vadd.f32 0.0, %v1272
  %1274 = vdwg.mxu0
  %v1275 = vadd.f32 %v1211, %v1233
  %v1276 = vadd.f32 %v1212, %v1253
  %v1277 = vxor.u32 %v1275, 2147483648
  %v1278 = vxor.u32 %v1276, 2147483648
  %v1279 = vmul.f32 %v1277, 1.442695
  %v1280 = vpow.pop %v1279
  %v1281 = vmul.f32 %v1278, 1.442695
  %v1282 = vpow.pop %v1281
  %v1283 = vadd.f32 %v1280, 1.0
  %v1284 = vadd.f32 %v1282, 1.0
  %v1285 = vrcp.pop %v1283
  %v1286 = vmul.f32 %v1283, %v1285
  %v1287 = vsub.f32 1.0, %v1286
  %v1288 = vmul.f32 %v1285, %v1287
  %v1289 = vadd.f32 %v1285, %v1288
  %vm1290 = vweird.f32 %v1283
  %vm1291 = vweird.f32 %v1285
  %vm1292 = vmor %vm1290, %vm1291
  %v1293 = vsel %vm1292, %v1285, %v1289
  %v1294 = vand.u32 2147483647, %v1283
  %vm1295 = vcmp.eq.f32.partialorder %v1294, 8.507059e+37
  %v1296 = vand.u32 %v1283, 2147483648
  %v1297 = vor.u32 1.1754944e-38, %v1296
  %v1298 = vsel %vm1295, %v1297, %v1293
  %v1299 = vmul.f32 1.0, %v1298
  %v1300 = vrcp.pop %v1284
  %v1301 = vmul.f32 %v1284, %v1300
  %v1302 = vsub.f32 1.0, %v1301
  %v1303 = vmul.f32 %v1300, %v1302
  %v1304 = vadd.f32 %v1300, %v1303
  %vm1305 = vweird.f32 %v1284
  %vm1306 = vweird.f32 %v1300
  %vm1307 = vmor %vm1305, %vm1306
  %v1308 = vsel %vm1307, %v1300, %v1304
  %v1309 = vand.u32 2147483647, %v1284
  %vm1310 = vcmp.eq.f32.partialorder %v1309, 8.507059e+37
  %v1311 = vand.u32 %v1284, 2147483648
  %v1312 = vor.u32 1.1754944e-38, %v1311
  %v1313 = vsel %vm1310, %v1312, %v1308
  %v1314 = vmul.f32 1.0, %v1313
  %v1315 = vadd.f32 %v1273, %v56
  %v1316 = vmul.f32 %v1299, %v1315
  %v1317 = vadd.f32 %v1213, %v1316
  %v1318 = vtanh.pop %v1317
  %v1319 = vsub.f32 1.0, %v1314
  %v1320 = vmul.f32 %v1319, %v1318
  %v1321 = vmul.f32 %v1314, %v1034
  %v1322 = vadd.f32 %v1320, %v1321
  %v1324 = vsel %vm62, %v1322, 0
  %1326 = vmatpush.msra.mxu0 0.0
  %1327 = vmatpush.msra.mxu0 0.0
  %1328 = vmatpush.msra.mxu0 0.0
  %1329 = vmatpush.msra.mxu0 0.0
  %1330 = vmatpush.msra.mxu0 0.0
  %1331 = vmatpush.msra.mxu0 0.0
  %1332 = vmatpush.msra.mxu0 0.0
  %1333 = vmatpush.msra.mxu0 0.0
  %1334 = vmatpush.msra.mxu0 0.0
  %1335 = vmatpush.msra.mxu0 0.0
  %1336 = vmatpush.msra.mxu0 0.0
  %1337 = vmatpush.msra.mxu0 0.0
  %1338 = vmatpush.msra.mxu0 %v44
  %1339 = vmatpush.msra.mxu0 %v41
  %1340 = vmatpush.msra.mxu0 %v38
  %1341 = vmatpush.msra.mxu0 %v35
  %1342 = vmatmul.f32.gmra.mxu0 %v1324
  %v1343 = vpop.f32.mrf.mxu0
  %v1344 = vadd.f32 %v50, %v1343
  %1345 = vdwg.mxu0
  %1346 = vmatpush.msra.mxu0 0.0
  %1347 = vmatpush.msra.mxu0 0.0
  %1348 = vmatpush.msra.mxu0 0.0
  %1349 = vmatpush.msra.mxu0 0.0
  %1350 = vmatpush.msra.mxu0 0.0
  %1351 = vmatpush.msra.mxu0 0.0
  %1352 = vmatpush.msra.mxu0 0.0
  %1353 = vmatpush.msra.mxu0 0.0
  %1354 = vmatpush.msra.mxu0 0.0
  %1355 = vmatpush.msra.mxu0 0.0
  %1356 = vmatpush.msra.mxu0 0.0
  %1357 = vmatpush.msra.mxu0 0.0
  %1358 = vmatpush.msra.mxu0 %v45
  %1359 = vmatpush.msra.mxu0 %v42
  %1360 = vmatpush.msra.mxu0 %v39
  %1361 = vmatpush.msra.mxu0 %v36
  %1362 = vmatmul.f32.gmra.mxu0 %v1324
  %v1363 = vpop.f32.mrf.mxu0
  %v1364 = vadd.f32 %v51, %v1363
  %1365 = vdwg.mxu0
  %1366 = vmatpush.msra.mxu0 0.0
  %1367 = vmatpush.msra.mxu0 0.0
  %1368 = vmatpush.msra.mxu0 0.0
  %1369 = vmatpush.msra.mxu0 0.0
  %1370 = vmatpush.msra.mxu0 0.0
  %1371 = vmatpush.msra.mxu0 0.0
  %1372 = vmatpush.msra.mxu0 0.0
  %1373 = vmatpush.msra.mxu0 0.0
  %1374 = vmatpush.msra.mxu0 0.0
  %1375 = vmatpush.msra.mxu0 0.0
  %1376 = vmatpush.msra.mxu0 0.0
  %1377 = vmatpush.msra.mxu0 0.0
  %1378 = vmatpush.msra.mxu0 %v46
  %1379 = vmatpush.msra.mxu0 %v43
  %1380 = vmatpush.msra.mxu0 %v40
  %1381 = vmatpush.msra.mxu0 %v37
  %1382 = vmatmul.f32.gmra.mxu0 %v1324
  %v1383 = vpop.f32.mrf.mxu0
  %v1384 = vadd.f32 %v52, %v1383
  %1385 = vdwg.mxu0
  %v1387 = vsel %vm62, %v1208, 0
  %1389 = vmatpush.msra.mxu0 0.0
  %1390 = vmatpush.msra.mxu0 0.0
  %1391 = vmatpush.msra.mxu0 0.0
  %1392 = vmatpush.msra.mxu0 0.0
  %1393 = vmatpush.msra.mxu0 0.0
  %1394 = vmatpush.msra.mxu0 0.0
  %1395 = vmatpush.msra.mxu0 0.0
  %1396 = vmatpush.msra.mxu0 0.0
  %1397 = vmatpush.msra.mxu0 0.0
  %1398 = vmatpush.msra.mxu0 0.0
  %1399 = vmatpush.msra.mxu0 0.0
  %1400 = vmatpush.msra.mxu0 0.0
  %1401 = vmatpush.msra.mxu0 %v32
  %1402 = vmatpush.msra.mxu0 %v29
  %1403 = vmatpush.msra.mxu0 %v26
  %1404 = vmatpush.msra.mxu0 %v23
  %1405 = vmatmul.f32.gmra.mxu0 %v1387
  %v1406 = vpop.f32.mrf.mxu0
  %v1407 = vadd.f32 0.0, %v1406
  %1408 = vdwg.mxu0
  %1409 = vmatpush.msra.mxu0 0.0
  %1410 = vmatpush.msra.mxu0 0.0
  %1411 = vmatpush.msra.mxu0 0.0
  %1412 = vmatpush.msra.mxu0 0.0
  %1413 = vmatpush.msra.mxu0 0.0
  %1414 = vmatpush.msra.mxu0 0.0
  %1415 = vmatpush.msra.mxu0 0.0
  %1416 = vmatpush.msra.mxu0 0.0
  %1417 = vmatpush.msra.mxu0 0.0
  %1418 = vmatpush.msra.mxu0 0.0
  %1419 = vmatpush.msra.mxu0 0.0
  %1420 = vmatpush.msra.mxu0 0.0
  %1421 = vmatpush.msra.mxu0 %v33
  %1422 = vmatpush.msra.mxu0 %v30
  %1423 = vmatpush.msra.mxu0 %v27
  %1424 = vmatpush.msra.mxu0 %v24
  %1425 = vmatmul.f32.gmra.mxu0 %v1387
  %v1426 = vpop.f32.mrf.mxu0
  %v1427 = vadd.f32 0.0, %v1426
  %1428 = vdwg.mxu0
  %1429 = vmatpush.msra.mxu0 0.0
  %1430 = vmatpush.msra.mxu0 0.0
  %1431 = vmatpush.msra.mxu0 0.0
  %1432 = vmatpush.msra.mxu0 0.0
  %1433 = vmatpush.msra.mxu0 0.0
  %1434 = vmatpush.msra.mxu0 0.0
  %1435 = vmatpush.msra.mxu0 0.0
  %1436 = vmatpush.msra.mxu0 0.0
  %1437 = vmatpush.msra.mxu0 0.0
  %1438 = vmatpush.msra.mxu0 0.0
  %1439 = vmatpush.msra.mxu0 0.0
  %1440 = vmatpush.msra.mxu0 0.0
  %1441 = vmatpush.msra.mxu0 %v34
  %1442 = vmatpush.msra.mxu0 %v31
  %1443 = vmatpush.msra.mxu0 %v28
  %1444 = vmatpush.msra.mxu0 %v25
  %1445 = vmatmul.f32.gmra.mxu0 %v1387
  %v1446 = vpop.f32.mrf.mxu0
  %v1447 = vadd.f32 0.0, %v1446
  %1448 = vdwg.mxu0
  %v1449 = vadd.f32 %v1344, %v1407
  %v1450 = vadd.f32 %v1364, %v1427
  %v1451 = vxor.u32 %v1449, 2147483648
  %v1452 = vxor.u32 %v1450, 2147483648
  %v1453 = vmul.f32 %v1451, 1.442695
  %v1454 = vpow.pop %v1453
  %v1455 = vmul.f32 %v1452, 1.442695
  %v1456 = vpow.pop %v1455
  %v1457 = vadd.f32 %v1454, 1.0
  %v1458 = vadd.f32 %v1456, 1.0
  %v1459 = vrcp.pop %v1457
  %v1460 = vmul.f32 %v1457, %v1459
  %v1461 = vsub.f32 1.0, %v1460
  %v1462 = vmul.f32 %v1459, %v1461
  %v1463 = vadd.f32 %v1459, %v1462
  %vm1464 = vweird.f32 %v1457
  %vm1465 = vweird.f32 %v1459
  %vm1466 = vmor %vm1464, %vm1465
  %v1467 = vsel %vm1466, %v1459, %v1463
  %v1468 = vand.u32 2147483647, %v1457
  %vm1469 = vcmp.eq.f32.partialorder %v1468, 8.507059e+37
  %v1470 = vand.u32 %v1457, 2147483648
  %v1471 = vor.u32 1.1754944e-38, %v1470
  %v1472 = vsel %vm1469, %v1471, %v1467
  %v1473 = vmul.f32 1.0, %v1472
  %v1474 = vrcp.pop %v1458
  %v1475 = vmul.f32 %v1458, %v1474
  %v1476 = vsub.f32 1.0, %v1475
  %v1477 = vmul.f32 %v1474, %v1476
  %v1478 = vadd.f32 %v1474, %v1477
  %vm1479 = vweird.f32 %v1458
  %vm1480 = vweird.f32 %v1474
  %vm1481 = vmor %vm1479, %vm1480
  %v1482 = vsel %vm1481, %v1474, %v1478
  %v1483 = vand.u32 2147483647, %v1458
  %vm1484 = vcmp.eq.f32.partialorder %v1483, 8.507059e+37
  %v1485 = vand.u32 %v1458, 2147483648
  %v1486 = vor.u32 1.1754944e-38, %v1485
  %v1487 = vsel %vm1484, %v1486, %v1482
  %v1488 = vmul.f32 1.0, %v1487
  %v1489 = vadd.f32 %v1447, %v57
  %v1490 = vmul.f32 %v1473, %v1489
  %v1491 = vadd.f32 %v1384, %v1490
  %v1492 = vtanh.pop %v1491
  %v1493 = vsub.f32 1.0, %v1488
  %v1494 = vmul.f32 %v1493, %v1492
  %v1495 = vmul.f32 %v1488, %v1208
  %v1496 = vadd.f32 %v1494, %v1495
  %v1497 = vmul.f32 %v1214, %v1496
  %v1498 = vadd.f32 %v1210, %v1497
  %v1499 = vld [vmem:[%s0 + $0xa0] sm:$0xff]
  %v1500 = vld [vmem:[%s0 + $0xa8] sm:$0xff]
  %v1501 = vld [vmem:[%s0 + $0xb0] sm:$0xff]
  %v1502 = vld [vmem:[%s0 + $0xb8] sm:$0xff]
  %1503 = vmatpush.msra.mxu0 0.0
  %1504 = vmatpush.msra.mxu0 0.0
  %1505 = vmatpush.msra.mxu0 0.0
  %1506 = vmatpush.msra.mxu0 0.0
  %1507 = vmatpush.msra.mxu0 0.0
  %1508 = vmatpush.msra.mxu0 0.0
  %1509 = vmatpush.msra.mxu0 0.0
  %1510 = vmatpush.msra.mxu0 0.0
  %1511 = vmatpush.msra.mxu0 0.0
  %1512 = vmatpush.msra.mxu0 0.0
  %1513 = vmatpush.msra.mxu0 0.0
  %1514 = vmatpush.msra.mxu0 0.0
  %1515 = vmatpush.msra.mxu0 %v20
  %1516 = vmatpush.msra.mxu0 %v17
  %1517 = vmatpush.msra.mxu0 %v14
  %1518 = vmatpush.msra.mxu0 %v11
  %1519 = vmatmul.f32.gmra.mxu0 %v1324
  %v1520 = vpop.f32.mrf.mxu0
  %v1521 = vadd.f32 0.0, %v1520
  %1522 = vdwg.mxu0
  %1523 = vmatpush.msra.mxu0 0.0
  %1524 = vmatpush.msra.mxu0 0.0
  %1525 = vmatpush.msra.mxu0 0.0
  %1526 = vmatpush.msra.mxu0 0.0
  %1527 = vmatpush.msra.mxu0 0.0
  %1528 = vmatpush.msra.mxu0 0.0
  %1529 = vmatpush.msra.mxu0 0.0
  %1530 = vmatpush.msra.mxu0 0.0
  %1531 = vmatpush.msra.mxu0 0.0
  %1532 = vmatpush.msra.mxu0 0.0
  %1533 = vmatpush.msra.mxu0 0.0
  %1534 = vmatpush.msra.mxu0 0.0
  %1535 = vmatpush.msra.mxu0 %v21
  %1536 = vmatpush.msra.mxu0 %v18
  %1537 = vmatpush.msra.mxu0 %v15
  %1538 = vmatpush.msra.mxu0 %v12
  %1539 = vmatmul.f32.gmra.mxu0 %v1324
  %v1540 = vpop.f32.mrf.mxu0
  %v1541 = vadd.f32 0.0, %v1540
  %1542 = vdwg.mxu0
  %1543 = vmatpush.msra.mxu0 0.0
  %1544 = vmatpush.msra.mxu0 0.0
  %1545 = vmatpush.msra.mxu0 0.0
  %1546 = vmatpush.msra.mxu0 0.0
  %1547 = vmatpush.msra.mxu0 0.0
  %1548 = vmatpush.msra.mxu0 0.0
  %1549 = vmatpush.msra.mxu0 0.0
  %1550 = vmatpush.msra.mxu0 0.0
  %1551 = vmatpush.msra.mxu0 0.0
  %1552 = vmatpush.msra.mxu0 0.0
  %1553 = vmatpush.msra.mxu0 0.0
  %1554 = vmatpush.msra.mxu0 0.0
  %1555 = vmatpush.msra.mxu0 %v22
  %1556 = vmatpush.msra.mxu0 %v19
  %1557 = vmatpush.msra.mxu0 %v16
  %1558 = vmatpush.msra.mxu0 %v13
  %1559 = vmatmul.f32.gmra.mxu0 %v1324
  %v1560 = vpop.f32.mrf.mxu0
  %v1561 = vadd.f32 0.0, %v1560
  %1562 = vdwg.mxu0
  %v1563 = vadd.f32 %v1499, %v1521
  %v1564 = vadd.f32 %v1500, %v1541
  %v1565 = vxor.u32 %v1563, 2147483648
  %v1566 = vxor.u32 %v1564, 2147483648
  %v1567 = vmul.f32 %v1565, 1.442695
  %v1568 = vpow.pop %v1567
  %v1569 = vmul.f32 %v1566, 1.442695
  %v1570 = vpow.pop %v1569
  %v1571 = vadd.f32 %v1568, 1.0
  %v1572 = vadd.f32 %v1570, 1.0
  %v1573 = vrcp.pop %v1571
  %v1574 = vmul.f32 %v1571, %v1573
  %v1575 = vsub.f32 1.0, %v1574
  %v1576 = vmul.f32 %v1573, %v1575
  %v1577 = vadd.f32 %v1573, %v1576
  %vm1578 = vweird.f32 %v1571
  %vm1579 = vweird.f32 %v1573
  %vm1580 = vmor %vm1578, %vm1579
  %v1581 = vsel %vm1580, %v1573, %v1577
  %v1582 = vand.u32 2147483647, %v1571
  %vm1583 = vcmp.eq.f32.partialorder %v1582, 8.507059e+37
  %v1584 = vand.u32 %v1571, 2147483648
  %v1585 = vor.u32 1.1754944e-38, %v1584
  %v1586 = vsel %vm1583, %v1585, %v1581
  %v1587 = vmul.f32 1.0, %v1586
  %v1588 = vrcp.pop %v1572
  %v1589 = vmul.f32 %v1572, %v1588
  %v1590 = vsub.f32 1.0, %v1589
  %v1591 = vmul.f32 %v1588, %v1590
  %v1592 = vadd.f32 %v1588, %v1591
  %vm1593 = vweird.f32 %v1572
  %vm1594 = vweird.f32 %v1588
  %vm1595 = vmor %vm1593, %vm1594
  %v1596 = vsel %vm1595, %v1588, %v1592
  %v1597 = vand.u32 2147483647, %v1572
  %vm1598 = vcmp.eq.f32.partialorder %v1597, 8.507059e+37
  %v1599 = vand.u32 %v1572, 2147483648
  %v1600 = vor.u32 1.1754944e-38, %v1599
  %v1601 = vsel %vm1598, %v1600, %v1596
  %v1602 = vmul.f32 1.0, %v1601
  %v1603 = vadd.f32 %v1561, %v56
  %v1604 = vmul.f32 %v1587, %v1603
  %v1605 = vadd.f32 %v1501, %v1604
  %v1606 = vtanh.pop %v1605
  %v1607 = vsub.f32 1.0, %v1602
  %v1608 = vmul.f32 %v1607, %v1606
  %v1609 = vmul.f32 %v1602, %v1322
  %v1610 = vadd.f32 %v1608, %v1609
  %v1612 = vsel %vm62, %v1610, 0
  %1614 = vmatpush.msra.mxu0 0.0
  %1615 = vmatpush.msra.mxu0 0.0
  %1616 = vmatpush.msra.mxu0 0.0
  %1617 = vmatpush.msra.mxu0 0.0
  %1618 = vmatpush.msra.mxu0 0.0
  %1619 = vmatpush.msra.mxu0 0.0
  %1620 = vmatpush.msra.mxu0 0.0
  %1621 = vmatpush.msra.mxu0 0.0
  %1622 = vmatpush.msra.mxu0 0.0
  %1623 = vmatpush.msra.mxu0 0.0
  %1624 = vmatpush.msra.mxu0 0.0
  %1625 = vmatpush.msra.mxu0 0.0
  %1626 = vmatpush.msra.mxu0 %v44
  %1627 = vmatpush.msra.mxu0 %v41
  %1628 = vmatpush.msra.mxu0 %v38
  %1629 = vmatpush.msra.mxu0 %v35
  %1630 = vmatmul.f32.gmra.mxu0 %v1612
  %v1631 = vpop.f32.mrf.mxu0
  %v1632 = vadd.f32 %v50, %v1631
  %1633 = vdwg.mxu0
  %1634 = vmatpush.msra.mxu0 0.0
  %1635 = vmatpush.msra.mxu0 0.0
  %1636 = vmatpush.msra.mxu0 0.0
  %1637 = vmatpush.msra.mxu0 0.0
  %1638 = vmatpush.msra.mxu0 0.0
  %1639 = vmatpush.msra.mxu0 0.0
  %1640 = vmatpush.msra.mxu0 0.0
  %1641 = vmatpush.msra.mxu0 0.0
  %1642 = vmatpush.msra.mxu0 0.0
  %1643 = vmatpush.msra.mxu0 0.0
  %1644 = vmatpush.msra.mxu0 0.0
  %1645 = vmatpush.msra.mxu0 0.0
  %1646 = vmatpush.msra.mxu0 %v45
  %1647 = vmatpush.msra.mxu0 %v42
  %1648 = vmatpush.msra.mxu0 %v39
  %1649 = vmatpush.msra.mxu0 %v36
  %1650 = vmatmul.f32.gmra.mxu0 %v1612
  %v1651 = vpop.f32.mrf.mxu0
  %v1652 = vadd.f32 %v51, %v1651
  %1653 = vdwg.mxu0
  %1654 = vmatpush.msra.mxu0 0.0
  %1655 = vmatpush.msra.mxu0 0.0
  %1656 = vmatpush.msra.mxu0 0.0
  %1657 = vmatpush.msra.mxu0 0.0
  %1658 = vmatpush.msra.mxu0 0.0
  %1659 = vmatpush.msra.mxu0 0.0
  %1660 = vmatpush.msra.mxu0 0.0
  %1661 = vmatpush.msra.mxu0 0.0
  %1662 = vmatpush.msra.mxu0 0.0
  %1663 = vmatpush.msra.mxu0 0.0
  %1664 = vmatpush.msra.mxu0 0.0
  %1665 = vmatpush.msra.mxu0 0.0
  %1666 = vmatpush.msra.mxu0 %v46
  %1667 = vmatpush.msra.mxu0 %v43
  %1668 = vmatpush.msra.mxu0 %v40
  %1669 = vmatpush.msra.mxu0 %v37
  %1670 = vmatmul.f32.gmra.mxu0 %v1612
  %v1671 = vpop.f32.mrf.mxu0
  %v1672 = vadd.f32 %v52, %v1671
  %1673 = vdwg.mxu0
  %v1675 = vsel %vm62, %v1496, 0
  %1677 = vmatpush.msra.mxu0 0.0
  %1678 = vmatpush.msra.mxu0 0.0
  %1679 = vmatpush.msra.mxu0 0.0
  %1680 = vmatpush.msra.mxu0 0.0
  %1681 = vmatpush.msra.mxu0 0.0
  %1682 = vmatpush.msra.mxu0 0.0
  %1683 = vmatpush.msra.mxu0 0.0
  %1684 = vmatpush.msra.mxu0 0.0
  %1685 = vmatpush.msra.mxu0 0.0
  %1686 = vmatpush.msra.mxu0 0.0
  %1687 = vmatpush.msra.mxu0 0.0
  %1688 = vmatpush.msra.mxu0 0.0
  %1689 = vmatpush.msra.mxu0 %v32
  %1690 = vmatpush.msra.mxu0 %v29
  %1691 = vmatpush.msra.mxu0 %v26
  %1692 = vmatpush.msra.mxu0 %v23
  %1693 = vmatmul.f32.gmra.mxu0 %v1675
  %v1694 = vpop.f32.mrf.mxu0
  %v1695 = vadd.f32 0.0, %v1694
  %1696 = vdwg.mxu0
  %1697 = vmatpush.msra.mxu0 0.0
  %1698 = vmatpush.msra.mxu0 0.0
  %1699 = vmatpush.msra.mxu0 0.0
  %1700 = vmatpush.msra.mxu0 0.0
  %1701 = vmatpush.msra.mxu0 0.0
  %1702 = vmatpush.msra.mxu0 0.0
  %1703 = vmatpush.msra.mxu0 0.0
  %1704 = vmatpush.msra.mxu0 0.0
  %1705 = vmatpush.msra.mxu0 0.0
  %1706 = vmatpush.msra.mxu0 0.0
  %1707 = vmatpush.msra.mxu0 0.0
  %1708 = vmatpush.msra.mxu0 0.0
  %1709 = vmatpush.msra.mxu0 %v33
  %1710 = vmatpush.msra.mxu0 %v30
  %1711 = vmatpush.msra.mxu0 %v27
  %1712 = vmatpush.msra.mxu0 %v24
  %1713 = vmatmul.f32.gmra.mxu0 %v1675
  %v1714 = vpop.f32.mrf.mxu0
  %v1715 = vadd.f32 0.0, %v1714
  %1716 = vdwg.mxu0
  %1717 = vmatpush.msra.mxu0 0.0
  %1718 = vmatpush.msra.mxu0 0.0
  %1719 = vmatpush.msra.mxu0 0.0
  %1720 = vmatpush.msra.mxu0 0.0
  %1721 = vmatpush.msra.mxu0 0.0
  %1722 = vmatpush.msra.mxu0 0.0
  %1723 = vmatpush.msra.mxu0 0.0
  %1724 = vmatpush.msra.mxu0 0.0
  %1725 = vmatpush.msra.mxu0 0.0
  %1726 = vmatpush.msra.mxu0 0.0
  %1727 = vmatpush.msra.mxu0 0.0
  %1728 = vmatpush.msra.mxu0 0.0
  %1729 = vmatpush.msra.mxu0 %v34
  %1730 = vmatpush.msra.mxu0 %v31
  %1731 = vmatpush.msra.mxu0 %v28
  %1732 = vmatpush.msra.mxu0 %v25
  %1733 = vmatmul.f32.gmra.mxu0 %v1675
  %v1734 = vpop.f32.mrf.mxu0
  %v1735 = vadd.f32 0.0, %v1734
  %1736 = vdwg.mxu0
  %v1737 = vadd.f32 %v1632, %v1695
  %v1738 = vadd.f32 %v1652, %v1715
  %v1739 = vxor.u32 %v1737, 2147483648
  %v1740 = vxor.u32 %v1738, 2147483648
  %v1741 = vmul.f32 %v1739, 1.442695
  %v1742 = vpow.pop %v1741
  %v1743 = vmul.f32 %v1740, 1.442695
  %v1744 = vpow.pop %v1743
  %v1745 = vadd.f32 %v1742, 1.0
  %v1746 = vadd.f32 %v1744, 1.0
  %v1747 = vrcp.pop %v1745
  %v1748 = vmul.f32 %v1745, %v1747
  %v1749 = vsub.f32 1.0, %v1748
  %v1750 = vmul.f32 %v1747, %v1749
  %v1751 = vadd.f32 %v1747, %v1750
  %vm1752 = vweird.f32 %v1745
  %vm1753 = vweird.f32 %v1747
  %vm1754 = vmor %vm1752, %vm1753
  %v1755 = vsel %vm1754, %v1747, %v1751
  %v1756 = vand.u32 2147483647, %v1745
  %vm1757 = vcmp.eq.f32.partialorder %v1756, 8.507059e+37
  %v1758 = vand.u32 %v1745, 2147483648
  %v1759 = vor.u32 1.1754944e-38, %v1758
  %v1760 = vsel %vm1757, %v1759, %v1755
  %v1761 = vmul.f32 1.0, %v1760
  %v1762 = vrcp.pop %v1746
  %v1763 = vmul.f32 %v1746, %v1762
  %v1764 = vsub.f32 1.0, %v1763
  %v1765 = vmul.f32 %v1762, %v1764
  %v1766 = vadd.f32 %v1762, %v1765
  %vm1767 = vweird.f32 %v1746
  %vm1768 = vweird.f32 %v1762
  %vm1769 = vmor %vm1767, %vm1768
  %v1770 = vsel %vm1769, %v1762, %v1766
  %v1771 = vand.u32 2147483647, %v1746
  %vm1772 = vcmp.eq.f32.partialorder %v1771, 8.507059e+37
  %v1773 = vand.u32 %v1746, 2147483648
  %v1774 = vor.u32 1.1754944e-38, %v1773
  %v1775 = vsel %vm1772, %v1774, %v1770
  %v1776 = vmul.f32 1.0, %v1775
  %v1777 = vadd.f32 %v1735, %v57
  %v1778 = vmul.f32 %v1761, %v1777
  %v1779 = vadd.f32 %v1672, %v1778
  %v1780 = vtanh.pop %v1779
  %v1781 = vsub.f32 1.0, %v1776
  %v1782 = vmul.f32 %v1781, %v1780
  %v1783 = vmul.f32 %v1776, %v1496
  %v1784 = vadd.f32 %v1782, %v1783
  %v1785 = vmul.f32 %v1502, %v1784
  %v1786 = vadd.f32 %v1498, %v1785
  %v1787 = vld [vmem:[%s0 + $0xc0] sm:$0xff]
  %v1788 = vld [vmem:[%s0 + $0xc8] sm:$0xff]
  %v1789 = vld [vmem:[%s0 + $0xd0] sm:$0xff]
  %v1790 = vld [vmem:[%s0 + $0xd8] sm:$0xff]
  %1791 = vmatpush.msra.mxu0 0.0
  %1792 = vmatpush.msra.mxu0 0.0
  %1793 = vmatpush.msra.mxu0 0.0
  %1794 = vmatpush.msra.mxu0 0.0
  %1795 = vmatpush.msra.mxu0 0.0
  %1796 = vmatpush.msra.mxu0 0.0
  %1797 = vmatpush.msra.mxu0 0.0
  %1798 = vmatpush.msra.mxu0 0.0
  %1799 = vmatpush.msra.mxu0 0.0
  %1800 = vmatpush.msra.mxu0 0.0
  %1801 = vmatpush.msra.mxu0 0.0
  %1802 = vmatpush.msra.mxu0 0.0
  %1803 = vmatpush.msra.mxu0 %v20
  %1804 = vmatpush.msra.mxu0 %v17
  %1805 = vmatpush.msra.mxu0 %v14
  %1806 = vmatpush.msra.mxu0 %v11
  %1807 = vmatmul.f32.gmra.mxu0 %v1612
  %v1808 = vpop.f32.mrf.mxu0
  %v1809 = vadd.f32 0.0, %v1808
  %1810 = vdwg.mxu0
  %1811 = vmatpush.msra.mxu0 0.0
  %1812 = vmatpush.msra.mxu0 0.0
  %1813 = vmatpush.msra.mxu0 0.0
  %1814 = vmatpush.msra.mxu0 0.0
  %1815 = vmatpush.msra.mxu0 0.0
  %1816 = vmatpush.msra.mxu0 0.0
  %1817 = vmatpush.msra.mxu0 0.0
  %1818 = vmatpush.msra.mxu0 0.0
  %1819 = vmatpush.msra.mxu0 0.0
  %1820 = vmatpush.msra.mxu0 0.0
  %1821 = vmatpush.msra.mxu0 0.0
  %1822 = vmatpush.msra.mxu0 0.0
  %1823 = vmatpush.msra.mxu0 %v21
  %1824 = vmatpush.msra.mxu0 %v18
  %1825 = vmatpush.msra.mxu0 %v15
  %1826 = vmatpush.msra.mxu0 %v12
  %1827 = vmatmul.f32.gmra.mxu0 %v1612
  %v1828 = vpop.f32.mrf.mxu0
  %v1829 = vadd.f32 0.0, %v1828
  %1830 = vdwg.mxu0
  %1831 = vmatpush.msra.mxu0 0.0
  %1832 = vmatpush.msra.mxu0 0.0
  %1833 = vmatpush.msra.mxu0 0.0
  %1834 = vmatpush.msra.mxu0 0.0
  %1835 = vmatpush.msra.mxu0 0.0
  %1836 = vmatpush.msra.mxu0 0.0
  %1837 = vmatpush.msra.mxu0 0.0
  %1838 = vmatpush.msra.mxu0 0.0
  %1839 = vmatpush.msra.mxu0 0.0
  %1840 = vmatpush.msra.mxu0 0.0
  %1841 = vmatpush.msra.mxu0 0.0
  %1842 = vmatpush.msra.mxu0 0.0
  %1843 = vmatpush.msra.mxu0 %v22
  %1844 = vmatpush.msra.mxu0 %v19
  %1845 = vmatpush.msra.mxu0 %v16
  %1846 = vmatpush.msra.mxu0 %v13
  %1847 = vmatmul.f32.gmra.mxu0 %v1612
  %v1848 = vpop.f32.mrf.mxu0
  %v1849 = vadd.f32 0.0, %v1848
  %1850 = vdwg.mxu0
  %v1851 = vadd.f32 %v1787, %v1809
  %v1852 = vadd.f32 %v1788, %v1829
  %v1853 = vxor.u32 %v1851, 2147483648
  %v1854 = vxor.u32 %v1852, 2147483648
  %v1855 = vmul.f32 %v1853, 1.442695
  %v1856 = vpow.pop %v1855
  %v1857 = vmul.f32 %v1854, 1.442695
  %v1858 = vpow.pop %v1857
  %v1859 = vadd.f32 %v1856, 1.0
  %v1860 = vadd.f32 %v1858, 1.0
  %v1861 = vrcp.pop %v1859
  %v1862 = vmul.f32 %v1859, %v1861
  %v1863 = vsub.f32 1.0, %v1862
  %v1864 = vmul.f32 %v1861, %v1863
  %v1865 = vadd.f32 %v1861, %v1864
  %vm1866 = vweird.f32 %v1859
  %vm1867 = vweird.f32 %v1861
  %vm1868 = vmor %vm1866, %vm1867
  %v1869 = vsel %vm1868, %v1861, %v1865
  %v1870 = vand.u32 2147483647, %v1859
  %vm1871 = vcmp.eq.f32.partialorder %v1870, 8.507059e+37
  %v1872 = vand.u32 %v1859, 2147483648
  %v1873 = vor.u32 1.1754944e-38, %v1872
  %v1874 = vsel %vm1871, %v1873, %v1869
  %v1875 = vmul.f32 1.0, %v1874
  %v1876 = vrcp.pop %v1860
  %v1877 = vmul.f32 %v1860, %v1876
  %v1878 = vsub.f32 1.0, %v1877
  %v1879 = vmul.f32 %v1876, %v1878
  %v1880 = vadd.f32 %v1876, %v1879
  %vm1881 = vweird.f32 %v1860
  %vm1882 = vweird.f32 %v1876
  %vm1883 = vmor %vm1881, %vm1882
  %v1884 = vsel %vm1883, %v1876, %v1880
  %v1885 = vand.u32 2147483647, %v1860
  %vm1886 = vcmp.eq.f32.partialorder %v1885, 8.507059e+37
  %v1887 = vand.u32 %v1860, 2147483648
  %v1888 = vor.u32 1.1754944e-38, %v1887
  %v1889 = vsel %vm1886, %v1888, %v1884
  %v1890 = vmul.f32 1.0, %v1889
  %v1891 = vadd.f32 %v1849, %v56
  %v1892 = vmul.f32 %v1875, %v1891
  %v1893 = vadd.f32 %v1789, %v1892
  %v1894 = vtanh.pop %v1893
  %v1895 = vsub.f32 1.0, %v1890
  %v1896 = vmul.f32 %v1895, %v1894
  %v1897 = vmul.f32 %v1890, %v1610
  %v1898 = vadd.f32 %v1896, %v1897
  %v1900 = vsel %vm62, %v1898, 0
  %1902 = vmatpush.msra.mxu0 0.0
  %1903 = vmatpush.msra.mxu0 0.0
  %1904 = vmatpush.msra.mxu0 0.0
  %1905 = vmatpush.msra.mxu0 0.0
  %1906 = vmatpush.msra.mxu0 0.0
  %1907 = vmatpush.msra.mxu0 0.0
  %1908 = vmatpush.msra.mxu0 0.0
  %1909 = vmatpush.msra.mxu0 0.0
  %1910 = vmatpush.msra.mxu0 0.0
  %1911 = vmatpush.msra.mxu0 0.0
  %1912 = vmatpush.msra.mxu0 0.0
  %1913 = vmatpush.msra.mxu0 0.0
  %1914 = vmatpush.msra.mxu0 %v44
  %1915 = vmatpush.msra.mxu0 %v41
  %1916 = vmatpush.msra.mxu0 %v38
  %1917 = vmatpush.msra.mxu0 %v35
  %1918 = vmatmul.f32.gmra.mxu0 %v1900
  %v1919 = vpop.f32.mrf.mxu0
  %v1920 = vadd.f32 %v50, %v1919
  %1921 = vdwg.mxu0
  %1922 = vmatpush.msra.mxu0 0.0
  %1923 = vmatpush.msra.mxu0 0.0
  %1924 = vmatpush.msra.mxu0 0.0
  %1925 = vmatpush.msra.mxu0 0.0
  %1926 = vmatpush.msra.mxu0 0.0
  %1927 = vmatpush.msra.mxu0 0.0
  %1928 = vmatpush.msra.mxu0 0.0
  %1929 = vmatpush.msra.mxu0 0.0
  %1930 = vmatpush.msra.mxu0 0.0
  %1931 = vmatpush.msra.mxu0 0.0
  %1932 = vmatpush.msra.mxu0 0.0
  %1933 = vmatpush.msra.mxu0 0.0
  %1934 = vmatpush.msra.mxu0 %v45
  %1935 = vmatpush.msra.mxu0 %v42
  %1936 = vmatpush.msra.mxu0 %v39
  %1937 = vmatpush.msra.mxu0 %v36
  %1938 = vmatmul.f32.gmra.mxu0 %v1900
  %v1939 = vpop.f32.mrf.mxu0
  %v1940 = vadd.f32 %v51, %v1939
  %1941 = vdwg.mxu0
  %1942 = vmatpush.msra.mxu0 0.0
  %1943 = vmatpush.msra.mxu0 0.0
  %1944 = vmatpush.msra.mxu0 0.0
  %1945 = vmatpush.msra.mxu0 0.0
  %1946 = vmatpush.msra.mxu0 0.0
  %1947 = vmatpush.msra.mxu0 0.0
  %1948 = vmatpush.msra.mxu0 0.0
  %1949 = vmatpush.msra.mxu0 0.0
  %1950 = vmatpush.msra.mxu0 0.0
  %1951 = vmatpush.msra.mxu0 0.0
  %1952 = vmatpush.msra.mxu0 0.0
  %1953 = vmatpush.msra.mxu0 0.0
  %1954 = vmatpush.msra.mxu0 %v46
  %1955 = vmatpush.msra.mxu0 %v43
  %1956 = vmatpush.msra.mxu0 %v40
  %1957 = vmatpush.msra.mxu0 %v37
  %1958 = vmatmul.f32.gmra.mxu0 %v1900
  %v1959 = vpop.f32.mrf.mxu0
  %v1960 = vadd.f32 %v52, %v1959
  %1961 = vdwg.mxu0
  %v1963 = vsel %vm62, %v1784, 0
  %1965 = vmatpush.msra.mxu0 0.0
  %1966 = vmatpush.msra.mxu0 0.0
  %1967 = vmatpush.msra.mxu0 0.0
  %1968 = vmatpush.msra.mxu0 0.0
  %1969 = vmatpush.msra.mxu0 0.0
  %1970 = vmatpush.msra.mxu0 0.0
  %1971 = vmatpush.msra.mxu0 0.0
  %1972 = vmatpush.msra.mxu0 0.0
  %1973 = vmatpush.msra.mxu0 0.0
  %1974 = vmatpush.msra.mxu0 0.0
  %1975 = vmatpush.msra.mxu0 0.0
  %1976 = vmatpush.msra.mxu0 0.0
  %1977 = vmatpush.msra.mxu0 %v32
  %1978 = vmatpush.msra.mxu0 %v29
  %1979 = vmatpush.msra.mxu0 %v26
  %1980 = vmatpush.msra.mxu0 %v23
  %1981 = vmatmul.f32.gmra.mxu0 %v1963
  %v1982 = vpop.f32.mrf.mxu0
  %v1983 = vadd.f32 0.0, %v1982
  %1984 = vdwg.mxu0
  %1985 = vmatpush.msra.mxu0 0.0
  %1986 = vmatpush.msra.mxu0 0.0
  %1987 = vmatpush.msra.mxu0 0.0
  %1988 = vmatpush.msra.mxu0 0.0
  %1989 = vmatpush.msra.mxu0 0.0
  %1990 = vmatpush.msra.mxu0 0.0
  %1991 = vmatpush.msra.mxu0 0.0
  %1992 = vmatpush.msra.mxu0 0.0
  %1993 = vmatpush.msra.mxu0 0.0
  %1994 = vmatpush.msra.mxu0 0.0
  %1995 = vmatpush.msra.mxu0 0.0
  %1996 = vmatpush.msra.mxu0 0.0
  %1997 = vmatpush.msra.mxu0 %v33
  %1998 = vmatpush.msra.mxu0 %v30
  %1999 = vmatpush.msra.mxu0 %v27
  %2000 = vmatpush.msra.mxu0 %v24
  %2001 = vmatmul.f32.gmra.mxu0 %v1963
  %v2002 = vpop.f32.mrf.mxu0
  %v2003 = vadd.f32 0.0, %v2002
  %2004 = vdwg.mxu0
  %2005 = vmatpush.msra.mxu0 0.0
  %2006 = vmatpush.msra.mxu0 0.0
  %2007 = vmatpush.msra.mxu0 0.0
  %2008 = vmatpush.msra.mxu0 0.0
  %2009 = vmatpush.msra.mxu0 0.0
  %2010 = vmatpush.msra.mxu0 0.0
  %2011 = vmatpush.msra.mxu0 0.0
  %2012 = vmatpush.msra.mxu0 0.0
  %2013 = vmatpush.msra.mxu0 0.0
  %2014 = vmatpush.msra.mxu0 0.0
  %2015 = vmatpush.msra.mxu0 0.0
  %2016 = vmatpush.msra.mxu0 0.0
  %2017 = vmatpush.msra.mxu0 %v34
  %2018 = vmatpush.msra.mxu0 %v31
  %2019 = vmatpush.msra.mxu0 %v28
  %2020 = vmatpush.msra.mxu0 %v25
  %2021 = vmatmul.f32.gmra.mxu0 %v1963
  %v2022 = vpop.f32.mrf.mxu0
  %v2023 = vadd.f32 0.0, %v2022
  %2024 = vdwg.mxu0
  %v2025 = vadd.f32 %v1920, %v1983
  %v2026 = vadd.f32 %v1940, %v2003
  %v2027 = vxor.u32 %v2025, 2147483648
  %v2028 = vxor.u32 %v2026, 2147483648
  %v2029 = vmul.f32 %v2027, 1.442695
  %v2030 = vpow.pop %v2029
  %v2031 = vmul.f32 %v2028, 1.442695
  %v2032 = vpow.pop %v2031
  %v2033 = vadd.f32 %v2030, 1.0
  %v2034 = vadd.f32 %v2032, 1.0
  %v2035 = vrcp.pop %v2033
  %v2036 = vmul.f32 %v2033, %v2035
  %v2037 = vsub.f32 1.0, %v2036
  %v2038 = vmul.f32 %v2035, %v2037
  %v2039 = vadd.f32 %v2035, %v2038
  %vm2040 = vweird.f32 %v2033
  %vm2041 = vweird.f32 %v2035
  %vm2042 = vmor %vm2040, %vm2041
  %v2043 = vsel %vm2042, %v2035, %v2039
  %v2044 = vand.u32 2147483647, %v2033
  %vm2045 = vcmp.eq.f32.partialorder %v2044, 8.507059e+37
  %v2046 = vand.u32 %v2033, 2147483648
  %v2047 = vor.u32 1.1754944e-38, %v2046
  %v2048 = vsel %vm2045, %v2047, %v2043
  %v2049 = vmul.f32 1.0, %v2048
  %v2050 = vrcp.pop %v2034
  %v2051 = vmul.f32 %v2034, %v2050
  %v2052 = vsub.f32 1.0, %v2051
  %v2053 = vmul.f32 %v2050, %v2052
  %v2054 = vadd.f32 %v2050, %v2053
  %vm2055 = vweird.f32 %v2034
  %vm2056 = vweird.f32 %v2050
  %vm2057 = vmor %vm2055, %vm2056
  %v2058 = vsel %vm2057, %v2050, %v2054
  %v2059 = vand.u32 2147483647, %v2034
  %vm2060 = vcmp.eq.f32.partialorder %v2059, 8.507059e+37
  %v2061 = vand.u32 %v2034, 2147483648
  %v2062 = vor.u32 1.1754944e-38, %v2061
  %v2063 = vsel %vm2060, %v2062, %v2058
  %v2064 = vmul.f32 1.0, %v2063
  %v2065 = vadd.f32 %v2023, %v57
  %v2066 = vmul.f32 %v2049, %v2065
  %v2067 = vadd.f32 %v1960, %v2066
  %v2068 = vtanh.pop %v2067
  %v2069 = vsub.f32 1.0, %v2064
  %v2070 = vmul.f32 %v2069, %v2068
  %v2071 = vmul.f32 %v2064, %v1784
  %v2072 = vadd.f32 %v2070, %v2071
  %v2073 = vmul.f32 %v1790, %v2072
  %v2074 = vadd.f32 %v1786, %v2073
  %v2075 = vld [vmem:[%s0 + $0xe0] sm:$0xff]
  %v2076 = vld [vmem:[%s0 + $0xe8] sm:$0xff]
  %v2077 = vld [vmem:[%s0 + $0xf0] sm:$0xff]
  %v2078 = vld [vmem:[%s0 + $0xf8] sm:$0xff]
  %2079 = vmatpush.msra.mxu0 0.0
  %2080 = vmatpush.msra.mxu0 0.0
  %2081 = vmatpush.msra.mxu0 0.0
  %2082 = vmatpush.msra.mxu0 0.0
  %2083 = vmatpush.msra.mxu0 0.0
  %2084 = vmatpush.msra.mxu0 0.0
  %2085 = vmatpush.msra.mxu0 0.0
  %2086 = vmatpush.msra.mxu0 0.0
  %2087 = vmatpush.msra.mxu0 0.0
  %2088 = vmatpush.msra.mxu0 0.0
  %2089 = vmatpush.msra.mxu0 0.0
  %2090 = vmatpush.msra.mxu0 0.0
  %2091 = vmatpush.msra.mxu0 %v20
  %2092 = vmatpush.msra.mxu0 %v17
  %2093 = vmatpush.msra.mxu0 %v14
  %2094 = vmatpush.msra.mxu0 %v11
  %2095 = vmatmul.f32.gmra.mxu0 %v1900
  %v2096 = vpop.f32.mrf.mxu0
  %v2097 = vadd.f32 0.0, %v2096
  %2098 = vdwg.mxu0
  %2099 = vmatpush.msra.mxu0 0.0
  %2100 = vmatpush.msra.mxu0 0.0
  %2101 = vmatpush.msra.mxu0 0.0
  %2102 = vmatpush.msra.mxu0 0.0
  %2103 = vmatpush.msra.mxu0 0.0
  %2104 = vmatpush.msra.mxu0 0.0
  %2105 = vmatpush.msra.mxu0 0.0
  %2106 = vmatpush.msra.mxu0 0.0
  %2107 = vmatpush.msra.mxu0 0.0
  %2108 = vmatpush.msra.mxu0 0.0
  %2109 = vmatpush.msra.mxu0 0.0
  %2110 = vmatpush.msra.mxu0 0.0
  %2111 = vmatpush.msra.mxu0 %v21
  %2112 = vmatpush.msra.mxu0 %v18
  %2113 = vmatpush.msra.mxu0 %v15
  %2114 = vmatpush.msra.mxu0 %v12
  %2115 = vmatmul.f32.gmra.mxu0 %v1900
  %v2116 = vpop.f32.mrf.mxu0
  %v2117 = vadd.f32 0.0, %v2116
  %2118 = vdwg.mxu0
  %2119 = vmatpush.msra.mxu0 0.0
  %2120 = vmatpush.msra.mxu0 0.0
  %2121 = vmatpush.msra.mxu0 0.0
  %2122 = vmatpush.msra.mxu0 0.0
  %2123 = vmatpush.msra.mxu0 0.0
  %2124 = vmatpush.msra.mxu0 0.0
  %2125 = vmatpush.msra.mxu0 0.0
  %2126 = vmatpush.msra.mxu0 0.0
  %2127 = vmatpush.msra.mxu0 0.0
  %2128 = vmatpush.msra.mxu0 0.0
  %2129 = vmatpush.msra.mxu0 0.0
  %2130 = vmatpush.msra.mxu0 0.0
  %2131 = vmatpush.msra.mxu0 %v22
  %2132 = vmatpush.msra.mxu0 %v19
  %2133 = vmatpush.msra.mxu0 %v16
  %2134 = vmatpush.msra.mxu0 %v13
  %2135 = vmatmul.f32.gmra.mxu0 %v1900
  %v2136 = vpop.f32.mrf.mxu0
  %v2137 = vadd.f32 0.0, %v2136
  %2138 = vdwg.mxu0
  %v2139 = vadd.f32 %v2075, %v2097
  %v2140 = vadd.f32 %v2076, %v2117
  %v2141 = vxor.u32 %v2139, 2147483648
  %v2142 = vxor.u32 %v2140, 2147483648
  %v2143 = vmul.f32 %v2141, 1.442695
  %v2144 = vpow.pop %v2143
  %v2145 = vmul.f32 %v2142, 1.442695
  %v2146 = vpow.pop %v2145
  %v2147 = vadd.f32 %v2144, 1.0
  %v2148 = vadd.f32 %v2146, 1.0
  %v2149 = vrcp.pop %v2147
  %v2150 = vmul.f32 %v2147, %v2149
  %v2151 = vsub.f32 1.0, %v2150
  %v2152 = vmul.f32 %v2149, %v2151
  %v2153 = vadd.f32 %v2149, %v2152
  %vm2154 = vweird.f32 %v2147
  %vm2155 = vweird.f32 %v2149
  %vm2156 = vmor %vm2154, %vm2155
  %v2157 = vsel %vm2156, %v2149, %v2153
  %v2158 = vand.u32 2147483647, %v2147
  %vm2159 = vcmp.eq.f32.partialorder %v2158, 8.507059e+37
  %v2160 = vand.u32 %v2147, 2147483648
  %v2161 = vor.u32 1.1754944e-38, %v2160
  %v2162 = vsel %vm2159, %v2161, %v2157
  %v2163 = vmul.f32 1.0, %v2162
  %v2164 = vrcp.pop %v2148
  %v2165 = vmul.f32 %v2148, %v2164
  %v2166 = vsub.f32 1.0, %v2165
  %v2167 = vmul.f32 %v2164, %v2166
  %v2168 = vadd.f32 %v2164, %v2167
  %vm2169 = vweird.f32 %v2148
  %vm2170 = vweird.f32 %v2164
  %vm2171 = vmor %vm2169, %vm2170
  %v2172 = vsel %vm2171, %v2164, %v2168
  %v2173 = vand.u32 2147483647, %v2148
  %vm2174 = vcmp.eq.f32.partialorder %v2173, 8.507059e+37
  %v2175 = vand.u32 %v2148, 2147483648
  %v2176 = vor.u32 1.1754944e-38, %v2175
  %v2177 = vsel %vm2174, %v2176, %v2172
  %v2178 = vmul.f32 1.0, %v2177
  %v2179 = vadd.f32 %v2137, %v56
  %v2180 = vmul.f32 %v2163, %v2179
  %v2181 = vadd.f32 %v2077, %v2180
  %v2182 = vtanh.pop %v2181
  %v2183 = vsub.f32 1.0, %v2178
  %v2184 = vmul.f32 %v2183, %v2182
  %v2185 = vmul.f32 %v2178, %v1898
  %v2186 = vadd.f32 %v2184, %v2185
  %v2188 = vsel %vm62, %v2186, 0
  %2190 = vmatpush.msra.mxu0 0.0
  %2191 = vmatpush.msra.mxu0 0.0
  %2192 = vmatpush.msra.mxu0 0.0
  %2193 = vmatpush.msra.mxu0 0.0
  %2194 = vmatpush.msra.mxu0 0.0
  %2195 = vmatpush.msra.mxu0 0.0
  %2196 = vmatpush.msra.mxu0 0.0
  %2197 = vmatpush.msra.mxu0 0.0
  %2198 = vmatpush.msra.mxu0 0.0
  %2199 = vmatpush.msra.mxu0 0.0
  %2200 = vmatpush.msra.mxu0 0.0
  %2201 = vmatpush.msra.mxu0 0.0
  %2202 = vmatpush.msra.mxu0 %v44
  %2203 = vmatpush.msra.mxu0 %v41
  %2204 = vmatpush.msra.mxu0 %v38
  %2205 = vmatpush.msra.mxu0 %v35
  %2206 = vmatmul.f32.gmra.mxu0 %v2188
  %v2207 = vpop.f32.mrf.mxu0
  %v2208 = vadd.f32 %v50, %v2207
  %2209 = vdwg.mxu0
  %2210 = vmatpush.msra.mxu0 0.0
  %2211 = vmatpush.msra.mxu0 0.0
  %2212 = vmatpush.msra.mxu0 0.0
  %2213 = vmatpush.msra.mxu0 0.0
  %2214 = vmatpush.msra.mxu0 0.0
  %2215 = vmatpush.msra.mxu0 0.0
  %2216 = vmatpush.msra.mxu0 0.0
  %2217 = vmatpush.msra.mxu0 0.0
  %2218 = vmatpush.msra.mxu0 0.0
  %2219 = vmatpush.msra.mxu0 0.0
  %2220 = vmatpush.msra.mxu0 0.0
  %2221 = vmatpush.msra.mxu0 0.0
  %2222 = vmatpush.msra.mxu0 %v45
  %2223 = vmatpush.msra.mxu0 %v42
  %2224 = vmatpush.msra.mxu0 %v39
  %2225 = vmatpush.msra.mxu0 %v36
  %2226 = vmatmul.f32.gmra.mxu0 %v2188
  %v2227 = vpop.f32.mrf.mxu0
  %v2228 = vadd.f32 %v51, %v2227
  %2229 = vdwg.mxu0
  %2230 = vmatpush.msra.mxu0 0.0
  %2231 = vmatpush.msra.mxu0 0.0
  %2232 = vmatpush.msra.mxu0 0.0
  %2233 = vmatpush.msra.mxu0 0.0
  %2234 = vmatpush.msra.mxu0 0.0
  %2235 = vmatpush.msra.mxu0 0.0
  %2236 = vmatpush.msra.mxu0 0.0
  %2237 = vmatpush.msra.mxu0 0.0
  %2238 = vmatpush.msra.mxu0 0.0
  %2239 = vmatpush.msra.mxu0 0.0
  %2240 = vmatpush.msra.mxu0 0.0
  %2241 = vmatpush.msra.mxu0 0.0
  %2242 = vmatpush.msra.mxu0 %v46
  %2243 = vmatpush.msra.mxu0 %v43
  %2244 = vmatpush.msra.mxu0 %v40
  %2245 = vmatpush.msra.mxu0 %v37
  %2246 = vmatmul.f32.gmra.mxu0 %v2188
  %v2247 = vpop.f32.mrf.mxu0
  %v2248 = vadd.f32 %v52, %v2247
  %2249 = vdwg.mxu0
  %v2251 = vsel %vm62, %v2072, 0
  %2253 = vmatpush.msra.mxu0 0.0
  %2254 = vmatpush.msra.mxu0 0.0
  %2255 = vmatpush.msra.mxu0 0.0
  %2256 = vmatpush.msra.mxu0 0.0
  %2257 = vmatpush.msra.mxu0 0.0
  %2258 = vmatpush.msra.mxu0 0.0
  %2259 = vmatpush.msra.mxu0 0.0
  %2260 = vmatpush.msra.mxu0 0.0
  %2261 = vmatpush.msra.mxu0 0.0
  %2262 = vmatpush.msra.mxu0 0.0
  %2263 = vmatpush.msra.mxu0 0.0
  %2264 = vmatpush.msra.mxu0 0.0
  %2265 = vmatpush.msra.mxu0 %v32
  %2266 = vmatpush.msra.mxu0 %v29
  %2267 = vmatpush.msra.mxu0 %v26
  %2268 = vmatpush.msra.mxu0 %v23
  %2269 = vmatmul.f32.gmra.mxu0 %v2251
  %v2270 = vpop.f32.mrf.mxu0
  %v2271 = vadd.f32 0.0, %v2270
  %2272 = vdwg.mxu0
  %2273 = vmatpush.msra.mxu0 0.0
  %2274 = vmatpush.msra.mxu0 0.0
  %2275 = vmatpush.msra.mxu0 0.0
  %2276 = vmatpush.msra.mxu0 0.0
  %2277 = vmatpush.msra.mxu0 0.0
  %2278 = vmatpush.msra.mxu0 0.0
  %2279 = vmatpush.msra.mxu0 0.0
  %2280 = vmatpush.msra.mxu0 0.0
  %2281 = vmatpush.msra.mxu0 0.0
  %2282 = vmatpush.msra.mxu0 0.0
  %2283 = vmatpush.msra.mxu0 0.0
  %2284 = vmatpush.msra.mxu0 0.0
  %2285 = vmatpush.msra.mxu0 %v33
  %2286 = vmatpush.msra.mxu0 %v30
  %2287 = vmatpush.msra.mxu0 %v27
  %2288 = vmatpush.msra.mxu0 %v24
  %2289 = vmatmul.f32.gmra.mxu0 %v2251
  %v2290 = vpop.f32.mrf.mxu0
  %v2291 = vadd.f32 0.0, %v2290
  %2292 = vdwg.mxu0
  %2293 = vmatpush.msra.mxu0 0.0
  %2294 = vmatpush.msra.mxu0 0.0
  %2295 = vmatpush.msra.mxu0 0.0
  %2296 = vmatpush.msra.mxu0 0.0
  %2297 = vmatpush.msra.mxu0 0.0
  %2298 = vmatpush.msra.mxu0 0.0
  %2299 = vmatpush.msra.mxu0 0.0
  %2300 = vmatpush.msra.mxu0 0.0
  %2301 = vmatpush.msra.mxu0 0.0
  %2302 = vmatpush.msra.mxu0 0.0
  %2303 = vmatpush.msra.mxu0 0.0
  %2304 = vmatpush.msra.mxu0 0.0
  %2305 = vmatpush.msra.mxu0 %v34
  %2306 = vmatpush.msra.mxu0 %v31
  %2307 = vmatpush.msra.mxu0 %v28
  %2308 = vmatpush.msra.mxu0 %v25
  %2309 = vmatmul.f32.gmra.mxu0 %v2251
  %v2310 = vpop.f32.mrf.mxu0
  %v2311 = vadd.f32 0.0, %v2310
  %2312 = vdwg.mxu0
  %v2313 = vadd.f32 %v2208, %v2271
  %v2314 = vadd.f32 %v2228, %v2291
  %v2315 = vxor.u32 %v2313, 2147483648
  %v2316 = vxor.u32 %v2314, 2147483648
  %v2317 = vmul.f32 %v2315, 1.442695
  %v2318 = vpow.pop %v2317
  %v2319 = vmul.f32 %v2316, 1.442695
  %v2320 = vpow.pop %v2319
  %v2321 = vadd.f32 %v2318, 1.0
  %v2322 = vadd.f32 %v2320, 1.0
  %v2323 = vrcp.pop %v2321
  %v2324 = vmul.f32 %v2321, %v2323
  %v2325 = vsub.f32 1.0, %v2324
  %v2326 = vmul.f32 %v2323, %v2325
  %v2327 = vadd.f32 %v2323, %v2326
  %vm2328 = vweird.f32 %v2321
  %vm2329 = vweird.f32 %v2323
  %vm2330 = vmor %vm2328, %vm2329
  %v2331 = vsel %vm2330, %v2323, %v2327
  %v2332 = vand.u32 2147483647, %v2321
  %vm2333 = vcmp.eq.f32.partialorder %v2332, 8.507059e+37
  %v2334 = vand.u32 %v2321, 2147483648
  %v2335 = vor.u32 1.1754944e-38, %v2334
  %v2336 = vsel %vm2333, %v2335, %v2331
  %v2337 = vmul.f32 1.0, %v2336
  %v2338 = vrcp.pop %v2322
  %v2339 = vmul.f32 %v2322, %v2338
  %v2340 = vsub.f32 1.0, %v2339
  %v2341 = vmul.f32 %v2338, %v2340
  %v2342 = vadd.f32 %v2338, %v2341
  %vm2343 = vweird.f32 %v2322
  %vm2344 = vweird.f32 %v2338
  %vm2345 = vmor %vm2343, %vm2344
  %v2346 = vsel %vm2345, %v2338, %v2342
  %v2347 = vand.u32 2147483647, %v2322
  %vm2348 = vcmp.eq.f32.partialorder %v2347, 8.507059e+37
  %v2349 = vand.u32 %v2322, 2147483648
  %v2350 = vor.u32 1.1754944e-38, %v2349
  %v2351 = vsel %vm2348, %v2350, %v2346
  %v2352 = vmul.f32 1.0, %v2351
  %v2353 = vadd.f32 %v2311, %v57
  %v2354 = vmul.f32 %v2337, %v2353
  %v2355 = vadd.f32 %v2248, %v2354
  %v2356 = vtanh.pop %v2355
  %v2357 = vsub.f32 1.0, %v2352
  %v2358 = vmul.f32 %v2357, %v2356
  %v2359 = vmul.f32 %v2352, %v2072
  %v2360 = vadd.f32 %v2358, %v2359
  %v2361 = vmul.f32 %v2078, %v2360
  %v2362 = vadd.f32 %v2074, %v2361
  %v2363 = vld [vmem:[%s1 + $0x120] sm:$0xff]
  %v2364 = vld [vmem:[%s1 + $0x138] sm:$0xff]
  %v2365 = vld [vmem:[%s1 + $0x150] sm:$0xff]
  %v2366 = vld [vmem:[%s1 + $0x168] sm:$0xff]
  %s2367 = scalar_lea.vmem %s1, 456
  %v2368 = vld [vmem:[%s2367] ss:$8 sm:$0x7]
  %v2370 = vsel %vm62, %v2362, 0
  %2372 = vmatpush.msra.mxu0 0.0
  %2373 = vmatpush.msra.mxu0 0.0
  %2374 = vmatpush.msra.mxu0 0.0
  %2375 = vmatpush.msra.mxu0 0.0
  %2376 = vmatpush.msra.mxu0 0.0
  %2377 = vmatpush.msra.mxu0 0.0
  %2378 = vmatpush.msra.mxu0 0.0
  %2379 = vmatpush.msra.mxu0 0.0
  %2380 = vmatpush.msra.mxu0 0.0
  %2381 = vmatpush.msra.mxu0 0.0
  %2382 = vmatpush.msra.mxu0 0.0
  %2383 = vmatpush.msra.mxu0 0.0
  %2384 = vmatpush.msra.mxu0 %v2366
  %2385 = vmatpush.msra.mxu0 %v2365
  %2386 = vmatpush.msra.mxu0 %v2364
  %2387 = vmatpush.msra.mxu0 %v2363
  %2388 = vmatmul.f32.gmra.mxu0 %v2370
  %v2389 = vpop.f32.mrf.mxu0
  %v2390 = vadd.f32 0.0, %v2389
  %2391 = vdwg.mxu0
  %v2393 = vperm.slane %v2368, 0
  %v2395 = vadd.f32 %v2390, %v2393
  %v2396 = vxor.u32 %v2395, 2147483648
  %v2397 = vmul.f32 %v2396, 1.442695
  %v2398 = vpow.pop %v2397
  %v2399 = vadd.f32 %v2398, 1.0
  %v2400 = vrcp.pop %v2399
  %v2401 = vmul.f32 %v2399, %v2400
  %v2402 = vsub.f32 1.0, %v2401
  %v2403 = vmul.f32 %v2400, %v2402
  %v2404 = vadd.f32 %v2400, %v2403
  %vm2405 = vweird.f32 %v2399
  %vm2406 = vweird.f32 %v2400
  %vm2407 = vmor %vm2405, %vm2406
  %v2408 = vsel %vm2407, %v2400, %v2404
  %v2409 = vand.u32 2147483647, %v2399
  %vm2410 = vcmp.eq.f32.partialorder %v2409, 8.507059e+37
  %v2411 = vand.u32 %v2399, 2147483648
  %v2412 = vor.u32 1.1754944e-38, %v2411
  %v2413 = vsel %vm2410, %v2412, %v2408
  %v2414 = vmul.f32 1.0, %v2413
  %vm2415 = vcmask 64512
  %2416 = vst.msk [vmem:[%s2] sm:$0xff] %vm2415, %v2414
  // Predicated region
  $region10: #{encoder_forward.1} parent=0 // pred_check
    _
  $region11: #{encoder_forward.1} parent=0 // pred_check_branch
    %2418 = sbr.rel (0) target = $region13
  $region12: #{encoder_forward.1} parent=0 // pred_region
    _
  $region13: #{encoder_forward.1} parent=0 // pred_fallthru
    _
  // Predicated region
  $region14: #{encoder_forward.1} parent=0 // pred_check
    _
  $region15: #{encoder_forward.1} parent=0 // pred_check_branch
    %2420 = sbr.rel (0) target = $region17
  $region16: #{encoder_forward.1} parent=0 // pred_region
    _
  $region17: #{encoder_forward.1} parent=0 // pred_fallthru
    _

</llo_original>
